<compile_context>
chip_gen: v7x
topology: tpu7x:2x2x1
jax: 0.10.0
libtpu: 0.0.40
codegen_flags: <defaults>
</compile_context>

<pallas_src>
import jax
import jax.numpy as jnp
from jax import lax
from jax.experimental import pallas as pl
from jax.experimental.pallas import tpu as pltpu

# ----------------------------- Net architecture ----------------------------
IN_C, IN_H, IN_W = 3, 32, 32          # CIFAR-10 input (NCHW)
C1, C2 = 6, 16                        # conv output channels
KH = KW = 5                           # conv kernels (valid, stride 1)
H1 = IN_H - KH + 1                    # 28 : conv1 output height/width
P1 = H1 // 2                          # 14 : after 2x2 max-pool
H2 = P1 - KH + 1                      # 10 : conv2 output height/width
P2 = H2 // 2                          # 5  : after 2x2 max-pool
FC1, FC2, FC3 = 120, 84, 10
LANES = 128                           # padded lane width used throughout


# ------------------------------ fused kernel -------------------------------

def _lenet_kernel(x_ref, g1_ref, cb1_ref, g2_ref, cb2_ref,
                  w1_ref, b1_ref, w2_ref, b2_ref, w3_ref, b3_ref, o_ref):
    """Entire Net forward for a block of Bt images, fully inside VMEM.

    Conv-stage activations use a [image, width, height*channels] layout; the
    (batch, width) dims are merged into the MXU M dimension for every matmul.
    The banded weights (one 256-lane matrix per kernel column kj) map that
    layout directly to the pooled output of the stage in the same layout:
    lanes [0,128) hold even conv-output rows, lanes [128,256) odd rows, so the
    2x2 pool is one lane-slice max (height) plus one row-pair max (width).
    """
    f32 = jnp.float32
    cdt = g1_ref.dtype                       # MXU compute dtype (bf16)
    bt = x_ref.shape[0]                      # images per grid step

    def conv_relu_pool(xin, g_ref, cb_ref):
        # xin:    (bt, W_in, K)          activations (compute dtype)
        # g_ref:  (KW, K, 256)           merged even/odd banded conv+pool weights
        # cb_ref: (1, 128)               bias tiled over pooled rows (f32)
        kw, k, _ = g_ref.shape
        w_in = xin.shape[1]
        ow = w_in - kw + 1                   # conv output width
        acc = jnp.zeros((bt * ow, 2 * LANES), f32)
        for kj in range(kw):                 # 5 shifted-window matmuls, M=bt*ow
            lhs = xin[:, kj:kj + ow, :].reshape(bt * ow, k)
            acc += jnp.dot(lhs, g_ref[kj], preferred_element_type=f32)
        # 2x2 pool, height pairs: even rows live in lanes [0,128), odd in
        # [128,256) -> a single tile-aligned lane-slice max.
        y = jnp.maximum(acc[:, :LANES], acc[:, LANES:])      # (bt*ow, 128)
        # 2x2 pool, width pairs: adjacent M rows (pairs never straddle images
        # since ow is even).
        y = y.reshape(bt * (ow // 2), 2, LANES)
        y = jnp.maximum(y[:, 0, :], y[:, 1, :])              # (bt*ow//2, 128)
        y = y.reshape(bt, ow // 2, LANES)
        # bias-add and ReLU commute with max-pool -> apply once, after it.
        return jnp.maximum(y + cb_ref[...], 0.0)             # f32

    x1 = x_ref[...].astype(cdt)                              # (bt, 32, 96)
    y1 = conv_relu_pool(x1, g1_ref, cb1_ref)                 # (bt, 14, 128)
    y2 = conv_relu_pool(y1.astype(cdt), g2_ref, cb2_ref)     # (bt, 5, 128)

    # fc1: contract over the 5 pooled-width rows and the 128 (80 used) lanes
    # without any per-image flatten: 5 matmuls of (bt, 128) x (128, 120).
    y2c = y2.astype(cdt)
    h = jnp.zeros((bt, b1_ref.shape[1]), f32)
    for wi in range(w1_ref.shape[0]):
        h += jnp.dot(y2c[:, wi, :], w1_ref[wi], preferred_element_type=f32)
    h = jnp.maximum(h + b1_ref[...], 0.0)                                 # (bt, 120)
    h = jnp.maximum(jnp.dot(h.astype(cdt), w2_ref[...],
                            preferred_element_type=f32) + b2_ref[...], 0.0)  # (bt, 84)
    # fc3 weights/bias are zero-padded to 128 output lanes -> one unmasked,
    # lane-dense (bt, 128) store per grid step.
    out = jnp.dot(h.astype(cdt), w3_ref[...],
                  preferred_element_type=f32) + b3_ref[...]               # (bt, 128)
    o_ref[...] = out


# ------------------------- one-time weight preparation ----------------------

def _banded_conv_pool_weights(w, h_in):
    """Expand a (OC, IC, KH, KW) conv kernel into KW banded matrices mapping a
    [width, h_in*IC] activation slab directly to conv-output columns, split
    into even/odd output rows so the 2x2 pool's height reduction becomes a
    single max inside the kernel.

    G[p, kj, h*IC+ic, q*OC+oc] = w[oc, ic, h - (2*q + p), kj]
    (zero when the kernel-row index h - (2*q + p) is outside [0, KH)).
    """
    oc, ic, kh, kw = w.shape
    oh = h_in - kh + 1
    ohp = oh // 2
    h = jnp.arange(h_in)
    mask = (h[None, None, :, None] ==
            (2 * jnp.arange(ohp)[None, None, None, :]
             + jnp.arange(2)[:, None, None, None]
             + jnp.arange(kh)[None, :, None, None])).astype(w.dtype)
    g = jnp.einsum("pkhq,oikj->pjhiqo", mask, w)     # (2, KW, H, IC, OHP, OC)
    return g.reshape(2, kw, h_in * ic, ohp * oc)


def _merge_even_odd(g, k_pad):
    """Merge even/odd banded halves along N, each padded to a 128-lane boundary:
    (2, KW, K, N_half) -> (KW, k_pad, 256) with even weights in lanes [0,N_half)
    and odd weights in lanes [128, 128+N_half); zeros elsewhere."""
    _, kw, k, n = g.shape
    assert n <= LANES and k <= k_pad
    out = jnp.zeros((kw, k_pad, 2 * LANES), g.dtype)
    out = out.at[:, :k, :n].set(g[0])
    out = out.at[:, :k, LANES:LANES + n].set(g[1])
    return out


def prepare_params(params, compute_dtype=jnp.bfloat16):
    """One-time weight preprocessing (band-expand / merge / permute / pad / cast)."""
    cd = compute_dtype
    g1 = _merge_even_odd(_banded_conv_pool_weights(params["conv1_w"], IN_H),
                         IN_H * IN_C).astype(cd)                  # (5, 96, 256)
    g2 = _merge_even_odd(_banded_conv_pool_weights(params["conv2_w"], P1),
                         LANES).astype(cd)                        # (5, 128, 256)
    # conv biases tiled to the [pooled_h * OC] lane layout, zero-padded to 128.
    cb1 = jnp.zeros((1, LANES), jnp.float32).at[0, :P1 * C1].set(
        jnp.tile(params["conv1_b"], P1))
    cb2 = jnp.zeros((1, LANES), jnp.float32).at[0, :P2 * C2].set(
        jnp.tile(params["conv2_b"], P2))
    # fc1: permute the 400 input columns from torch's (c, h, w) flatten order to
    # the kernel's [w][h*16+c] layout and pad K to 128: (5, 128, 120).
    w1 = (params["fc1_w"].reshape(FC1, C2, P2, P2)
          .transpose(3, 2, 1, 0).reshape(P2, P2 * C2, FC1))
    w1 = jnp.zeros((P2, LANES, FC1), w1.dtype).at[:, :P2 * C2, :].set(w1).astype(cd)
    w2 = params["fc2_w"].T.astype(cd)                             # (120, 84)
    # fc3: pad the 10 output columns to 128 lanes for an unmasked, dense store.
    w3 = jnp.zeros((FC2, LANES), jnp.float32).at[:, :FC3].set(
        params["fc3_w"].T).astype(cd)                             # (84, 128)
    b1 = params["fc1_b"][None, :].astype(jnp.float32)
    b2 = params["fc2_b"][None, :].astype(jnp.float32)
    b3 = jnp.zeros((1, LANES), jnp.float32).at[0, :FC3].set(params["fc3_b"])
    return {"g1": g1, "cb1": cb1, "g2": g2, "cb2": cb2,
            "w1": w1, "b1": b1, "w2": w2, "b2": b2, "w3": w3, "b3": b3}


# ------------------------------- Net forward --------------------------------

def preprocess_inputs(x, compute_dtype=jnp.bfloat16):
    """NCHW -> [batch, width, height*channels] relayout + MXU-dtype cast.
    Done once per batch (or offline, if inputs are reused), so the forward pass
    itself is a single pallas_call with no extra HBM round-trips."""
    b = x.shape[0]
    assert x.shape[1:] == (IN_C, IN_H, IN_W)
    return (jnp.transpose(x, (0, 3, 2, 1))
            .reshape(b, IN_W, IN_H * IN_C).astype(compute_dtype))


def _const_spec(arr):
    """Full-array block, same block every grid step (stays VMEM-resident)."""
    nd = arr.ndim
    return pl.BlockSpec(arr.shape, lambda *_, _nd=nd: (0,) * _nd)


def net_forward(xt, prepped, *, block_b=128):
    """Forward pass of Net: one fused Pallas kernel; grid over batch blocks.

    `block_b` images are processed per grid step (batch folded into the MXU M
    dimension).  At block_b=128 the per-step VMEM footprint is ~10 MB, well
    under the default 32 MiB scoped limit on all generations (incl. v7x).
    """
    b = xt.shape[0]
    assert xt.shape[1:] == (IN_W, IN_H * IN_C)
    assert block_b % 8 == 0 or block_b >= b
    bt = min(block_b, b)
    nblk = -(-b // bt)
    b_pad = nblk * bt
    if b_pad != b:
        xt = jnp.pad(xt, ((0, b_pad - b), (0, 0), (0, 0)))

    order = ("g1", "cb1", "g2", "cb2", "w1", "b1", "w2", "b2", "w3", "b3")
    weights = [prepped[k] for k in order]

    out = pl.pallas_call(
        _lenet_kernel,
        out_shape=jax.ShapeDtypeStruct((b_pad, LANES), jnp.float32),
        grid=(nblk,),
        in_specs=[pl.BlockSpec((bt, IN_W, IN_H * IN_C), lambda i: (i, 0, 0))]
                 + [_const_spec(a) for a in weights],
        out_specs=pl.BlockSpec((bt, LANES), lambda i: (i, 0)),
        compiler_params=pltpu.CompilerParams(
            dimension_semantics=("parallel",)),   # batch blocks split across TCs
    )(xt, *weights)
    return out[:b, :FC3]


def net_forward_nchw(x, prepped, *, block_b=128):
    """Convenience wrapper: NCHW input -> logits (relayout + fused kernel)."""
    return net_forward(preprocess_inputs(x, prepped["g1"].dtype), prepped,
                       block_b=block_b)


# ------------------------------ reference & init -----------------------------

def net_forward_reference(x, params):
    """Pure-XLA float32 reference, numerically identical to the PyTorch Net."""
    dn = ("NCHW", "OIHW", "NCHW")
    y = lax.conv_general_dilated(x, params["conv1_w"], (1, 1), "VALID",
                                 dimension_numbers=dn)
    y = jax.nn.relu(y + params["conv1_b"][None, :, None, None])
    y = lax.reduce_window(y, -jnp.inf, lax.max, (1, 1, 2, 2), (1, 1, 2, 2), "VALID")
    y = lax.conv_general_dilated(y, params["conv2_w"], (1, 1), "VALID",
                                 dimension_numbers=dn)
    y = jax.nn.relu(y + params["conv2_b"][None, :, None, None])
    y = lax.reduce_window(y, -jnp.inf, lax.max, (1, 1, 2, 2), (1, 1, 2, 2), "VALID")
    y = y.reshape(y.shape[0], -1)                 # (B, 400), (c, h, w) order
    y = jax.nn.relu(y @ params["fc1_w"].T + params["fc1_b"])
    y = jax.nn.relu(y @ params["fc2_w"].T + params["fc2_b"])
    return y @ params["fc3_w"].T + params["fc3_b"]


def init_params(key):
    # Deterministic synthetic init (PyTorch-default-style U(-1/sqrt(fan_in), ..)).
    def uniform(k, shape, fan_in):
        bound = 1.0 / float(fan_in) ** 0.5
        return jax.random.uniform(k, shape, jnp.float32, -bound, bound)
    ks = jax.random.split(key, 10)
    return {
        "conv1_w": uniform(ks[0], (C1, IN_C, KH, KW), IN_C * KH * KW),
        "conv1_b": uniform(ks[1], (C1,), IN_C * KH * KW),
        "conv2_w": uniform(ks[2], (C2, C1, KH, KW), C1 * KH * KW),
        "conv2_b": uniform(ks[3], (C2,), C1 * KH * KW),
        "fc1_w": uniform(ks[4], (FC1, C2 * P2 * P2), C2 * P2 * P2),
        "fc1_b": uniform(ks[5], (FC1,), C2 * P2 * P2),
        "fc2_w": uniform(ks[6], (FC2, FC1), FC1),
        "fc2_b": uniform(ks[7], (FC2,), FC1),
        "fc3_w": uniform(ks[8], (FC3, FC2), FC2),
        "fc3_b": uniform(ks[9], (FC3,), FC2),
    }


if __name__ == "__main__":
    key = jax.random.PRNGKey(0)
    pkey, xkey = jax.random.split(key)
    params = init_params(pkey)
    prepped = prepare_params(params)              # one-time weight preprocessing
    # The flatten to 16*5*5 implies a 3x32x32 input (CIFAR-10 sized).
    x = jax.random.normal(xkey, (2, IN_C, IN_H, IN_W), jnp.float32)

    xt = preprocess_inputs(x)                     # one-time input relayout + cast
    fwd = jax.jit(net_forward)
    out = jax.block_until_ready(fwd(xt, prepped))
    assert out.shape == (2, FC3) and out.dtype == jnp.float32

    # Correctness check vs. the plain-XLA f32 reference.  bf16 MXU inputs are an
    # intentional inference-precision choice -> loose tolerance.
    ref = jax.block_until_ready(jax.jit(net_forward_reference)(x, params))
    assert bool(jnp.allclose(out, ref, rtol=5e-2, atol=5e-2)), (
        "max abs err %f" % float(jnp.max(jnp.abs(out - ref))))
    print("KERNEL_OK")
</pallas_src>

<mosaic_0001>
module attributes {stable_mosaic.version = 11 : i64} {
  func.func @_lenet_kernel(%arg0: i32, %arg1: memref<2x32x96xbf16, #tpu.memory_space<vmem>>, %arg2: memref<5x96x256xbf16, #tpu.memory_space<vmem>>, %arg3: memref<1x128xf32, #tpu.memory_space<vmem>>, %arg4: memref<5x128x256xbf16, #tpu.memory_space<vmem>>, %arg5: memref<1x128xf32, #tpu.memory_space<vmem>>, %arg6: memref<5x128x120xbf16, #tpu.memory_space<vmem>>, %arg7: memref<1x120xf32, #tpu.memory_space<vmem>>, %arg8: memref<120x84xbf16, #tpu.memory_space<vmem>>, %arg9: memref<1x84xf32, #tpu.memory_space<vmem>>, %arg10: memref<84x128xbf16, #tpu.memory_space<vmem>>, %arg11: memref<1x128xf32, #tpu.memory_space<vmem>>, %arg12: memref<2x128xf32, #tpu.memory_space<vmem>>) attributes {dimension_semantics = [#tpu.dimension_semantics<parallel>], iteration_bounds = array<i64: 1>, scalar_prefetch = 0 : i64, scratch_operands = 0 : i64, tpu.core_type = #tpu.core_type<tc>, window_params = [{transform_indices = @transform_0, window_bounds = array<i64: 2, 32, 96>}, {pipeline_mode = #tpu.pipeline_mode<synchronous>, transform_indices = @transform_1, window_bounds = array<i64: 5, 96, 256>}, {pipeline_mode = #tpu.pipeline_mode<synchronous>, transform_indices = @transform_2, window_bounds = array<i64: 1, 128>}, {pipeline_mode = #tpu.pipeline_mode<synchronous>, transform_indices = @transform_3, window_bounds = array<i64: 5, 128, 256>}, {pipeline_mode = #tpu.pipeline_mode<synchronous>, transform_indices = @transform_4, window_bounds = array<i64: 1, 128>}, {pipeline_mode = #tpu.pipeline_mode<synchronous>, transform_indices = @transform_5, window_bounds = array<i64: 5, 128, 120>}, {pipeline_mode = #tpu.pipeline_mode<synchronous>, transform_indices = @transform_6, window_bounds = array<i64: 1, 120>}, {pipeline_mode = #tpu.pipeline_mode<synchronous>, transform_indices = @transform_7, window_bounds = array<i64: 120, 84>}, {pipeline_mode = #tpu.pipeline_mode<synchronous>, transform_indices = @transform_8, window_bounds = array<i64: 1, 84>}, {pipeline_mode = #tpu.pipeline_mode<synchronous>, transform_indices = @transform_9, window_bounds = array<i64: 84, 128>}, {pipeline_mode = #tpu.pipeline_mode<synchronous>, transform_indices = @transform_10, window_bounds = array<i64: 1, 128>}, {transform_indices = @transform_11, window_bounds = array<i64: 2, 128>}]} {
    %c0 = arith.constant 0 : index
    %c0_0 = arith.constant 0 : index
    %c0_1 = arith.constant 0 : index
    %0 = vector.load %arg1[%c0, %c0_0, %c0_1] : memref<2x32x96xbf16, #tpu.memory_space<vmem>>, vector<2x32x96xbf16>
    %cst = arith.constant 0.000000e+00 : f32
    %1 = vector.broadcast %cst : f32 to vector<56x256xf32>
    %2 = vector.extract_strided_slice %0 {offsets = [0, 0, 0], sizes = [2, 28, 96], strides = [1, 1, 1]} : vector<2x32x96xbf16> to vector<2x28x96xbf16>
    %3 = vector.shape_cast %2 : vector<2x28x96xbf16> to vector<56x96xbf16>
    %c0_2 = arith.constant 0 : index
    %c0_3 = arith.constant 0 : index
    %c0_4 = arith.constant 0 : index
    %4 = vector.load %arg2[%c0_2, %c0_3, %c0_4] : memref<5x96x256xbf16, #tpu.memory_space<vmem>>, vector<1x96x256xbf16>
    %5 = vector.shape_cast %4 : vector<1x96x256xbf16> to vector<96x256xbf16>
    %cst_5 = arith.constant dense<0.000000e+00> : vector<56x256xf32>
    %6 = tpu.matmul %3, %5, %cst_5 {dimension_numbers = #tpu.dot_dimension_numbers<[1], [0], [0], [1], [0, 0, 1, 1], [], []>} : vector<56x96xbf16>, vector<96x256xbf16>, vector<56x256xf32> -> vector<56x256xf32>
    %7 = arith.addf %1, %6 : vector<56x256xf32>
    %8 = vector.extract_strided_slice %0 {offsets = [0, 1, 0], sizes = [2, 28, 96], strides = [1, 1, 1]} : vector<2x32x96xbf16> to vector<2x28x96xbf16>
    %9 = vector.shape_cast %8 : vector<2x28x96xbf16> to vector<56x96xbf16>
    %c1 = arith.constant 1 : index
    %c0_6 = arith.constant 0 : index
    %c0_7 = arith.constant 0 : index
    %10 = vector.load %arg2[%c1, %c0_6, %c0_7] : memref<5x96x256xbf16, #tpu.memory_space<vmem>>, vector<1x96x256xbf16>
    %11 = vector.shape_cast %10 : vector<1x96x256xbf16> to vector<96x256xbf16>
    %cst_8 = arith.constant dense<0.000000e+00> : vector<56x256xf32>
    %12 = tpu.matmul %9, %11, %cst_8 {dimension_numbers = #tpu.dot_dimension_numbers<[1], [0], [0], [1], [0, 0, 1, 1], [], []>} : vector<56x96xbf16>, vector<96x256xbf16>, vector<56x256xf32> -> vector<56x256xf32>
    %13 = arith.addf %7, %12 : vector<56x256xf32>
    %14 = vector.extract_strided_slice %0 {offsets = [0, 2, 0], sizes = [2, 28, 96], strides = [1, 1, 1]} : vector<2x32x96xbf16> to vector<2x28x96xbf16>
    %15 = vector.shape_cast %14 : vector<2x28x96xbf16> to vector<56x96xbf16>
    %c2 = arith.constant 2 : index
    %c0_9 = arith.constant 0 : index
    %c0_10 = arith.constant 0 : index
    %16 = vector.load %arg2[%c2, %c0_9, %c0_10] : memref<5x96x256xbf16, #tpu.memory_space<vmem>>, vector<1x96x256xbf16>
    %17 = vector.shape_cast %16 : vector<1x96x256xbf16> to vector<96x256xbf16>
    %cst_11 = arith.constant dense<0.000000e+00> : vector<56x256xf32>
    %18 = tpu.matmul %15, %17, %cst_11 {dimension_numbers = #tpu.dot_dimension_numbers<[1], [0], [0], [1], [0, 0, 1, 1], [], []>} : vector<56x96xbf16>, vector<96x256xbf16>, vector<56x256xf32> -> vector<56x256xf32>
    %19 = arith.addf %13, %18 : vector<56x256xf32>
    %20 = vector.extract_strided_slice %0 {offsets = [0, 3, 0], sizes = [2, 28, 96], strides = [1, 1, 1]} : vector<2x32x96xbf16> to vector<2x28x96xbf16>
    %21 = vector.shape_cast %20 : vector<2x28x96xbf16> to vector<56x96xbf16>
    %c3 = arith.constant 3 : index
    %c0_12 = arith.constant 0 : index
    %c0_13 = arith.constant 0 : index
    %22 = vector.load %arg2[%c3, %c0_12, %c0_13] : memref<5x96x256xbf16, #tpu.memory_space<vmem>>, vector<1x96x256xbf16>
    %23 = vector.shape_cast %22 : vector<1x96x256xbf16> to vector<96x256xbf16>
    %cst_14 = arith.constant dense<0.000000e+00> : vector<56x256xf32>
    %24 = tpu.matmul %21, %23, %cst_14 {dimension_numbers = #tpu.dot_dimension_numbers<[1], [0], [0], [1], [0, 0, 1, 1], [], []>} : vector<56x96xbf16>, vector<96x256xbf16>, vector<56x256xf32> -> vector<56x256xf32>
    %25 = arith.addf %19, %24 : vector<56x256xf32>
    %26 = vector.extract_strided_slice %0 {offsets = [0, 4, 0], sizes = [2, 28, 96], strides = [1, 1, 1]} : vector<2x32x96xbf16> to vector<2x28x96xbf16>
    %27 = vector.shape_cast %26 : vector<2x28x96xbf16> to vector<56x96xbf16>
    %c4 = arith.constant 4 : index
    %c0_15 = arith.constant 0 : index
    %c0_16 = arith.constant 0 : index
    %28 = vector.load %arg2[%c4, %c0_15, %c0_16] : memref<5x96x256xbf16, #tpu.memory_space<vmem>>, vector<1x96x256xbf16>
    %29 = vector.shape_cast %28 : vector<1x96x256xbf16> to vector<96x256xbf16>
    %cst_17 = arith.constant dense<0.000000e+00> : vector<56x256xf32>
    %30 = tpu.matmul %27, %29, %cst_17 {dimension_numbers = #tpu.dot_dimension_numbers<[1], [0], [0], [1], [0, 0, 1, 1], [], []>} : vector<56x96xbf16>, vector<96x256xbf16>, vector<56x256xf32> -> vector<56x256xf32>
    %31 = arith.addf %25, %30 : vector<56x256xf32>
    %32 = vector.extract_strided_slice %31 {offsets = [0, 0], sizes = [56, 128], strides = [1, 1]} : vector<56x256xf32> to vector<56x128xf32>
    %33 = vector.extract_strided_slice %31 {offsets = [0, 128], sizes = [56, 128], strides = [1, 1]} : vector<56x256xf32> to vector<56x128xf32>
    %34 = arith.maximumf %32, %33 : vector<56x128xf32>
    %35 = vector.shape_cast %34 : vector<56x128xf32> to vector<28x2x128xf32>
    %36 = vector.extract_strided_slice %35 {offsets = [0, 0, 0], sizes = [28, 1, 128], strides = [1, 1, 1]} : vector<28x2x128xf32> to vector<28x1x128xf32>
    %37 = vector.shape_cast %36 : vector<28x1x128xf32> to vector<28x128xf32>
    %38 = vector.extract_strided_slice %35 {offsets = [0, 1, 0], sizes = [28, 1, 128], strides = [1, 1, 1]} : vector<28x2x128xf32> to vector<28x1x128xf32>
    %39 = vector.shape_cast %38 : vector<28x1x128xf32> to vector<28x128xf32>
    %40 = arith.maximumf %37, %39 : vector<28x128xf32>
    %41 = vector.shape_cast %40 : vector<28x128xf32> to vector<2x14x128xf32>
    %c0_18 = arith.constant 0 : index
    %c0_19 = arith.constant 0 : index
    %42 = vector.load %arg3[%c0_18, %c0_19] : memref<1x128xf32, #tpu.memory_space<vmem>>, vector<1x128xf32>
    %43 = vector.shape_cast %42 : vector<1x128xf32> to vector<1x1x128xf32>
    %44 = vector.broadcast %43 : vector<1x1x128xf32> to vector<2x14x128xf32>
    %45 = arith.addf %41, %44 : vector<2x14x128xf32>
    %cst_20 = arith.constant 0.000000e+00 : f32
    %46 = vector.broadcast %cst_20 : f32 to vector<2x14x128xf32>
    %47 = arith.maximumf %45, %46 : vector<2x14x128xf32>
    %48 = arith.truncf %47 : vector<2x14x128xf32> to vector<2x14x128xbf16>
    %cst_21 = arith.constant 0.000000e+00 : f32
    %49 = vector.broadcast %cst_21 : f32 to vector<20x256xf32>
    %50 = vector.extract_strided_slice %48 {offsets = [0, 0, 0], sizes = [2, 10, 128], strides = [1, 1, 1]} : vector<2x14x128xbf16> to vector<2x10x128xbf16>
    %51 = vector.shape_cast %50 : vector<2x10x128xbf16> to vector<20x128xbf16>
    %c0_22 = arith.constant 0 : index
    %c0_23 = arith.constant 0 : index
    %c0_24 = arith.constant 0 : index
    %52 = vector.load %arg4[%c0_22, %c0_23, %c0_24] : memref<5x128x256xbf16, #tpu.memory_space<vmem>>, vector<1x128x256xbf16>
    %53 = vector.shape_cast %52 : vector<1x128x256xbf16> to vector<128x256xbf16>
    %cst_25 = arith.constant dense<0.000000e+00> : vector<20x256xf32>
    %54 = tpu.matmul %51, %53, %cst_25 {dimension_numbers = #tpu.dot_dimension_numbers<[1], [0], [0], [1], [0, 0, 1, 1], [], []>} : vector<20x128xbf16>, vector<128x256xbf16>, vector<20x256xf32> -> vector<20x256xf32>
    %55 = arith.addf %49, %54 : vector<20x256xf32>
    %56 = vector.extract_strided_slice %48 {offsets = [0, 1, 0], sizes = [2, 10, 128], strides = [1, 1, 1]} : vector<2x14x128xbf16> to vector<2x10x128xbf16>
    %57 = vector.shape_cast %56 : vector<2x10x128xbf16> to vector<20x128xbf16>
    %c1_26 = arith.constant 1 : index
    %c0_27 = arith.constant 0 : index
    %c0_28 = arith.constant 0 : index
    %58 = vector.load %arg4[%c1_26, %c0_27, %c0_28] : memref<5x128x256xbf16, #tpu.memory_space<vmem>>, vector<1x128x256xbf16>
    %59 = vector.shape_cast %58 : vector<1x128x256xbf16> to vector<128x256xbf16>
    %cst_29 = arith.constant dense<0.000000e+00> : vector<20x256xf32>
    %60 = tpu.matmul %57, %59, %cst_29 {dimension_numbers = #tpu.dot_dimension_numbers<[1], [0], [0], [1], [0, 0, 1, 1], [], []>} : vector<20x128xbf16>, vector<128x256xbf16>, vector<20x256xf32> -> vector<20x256xf32>
    %61 = arith.addf %55, %60 : vector<20x256xf32>
    %62 = vector.extract_strided_slice %48 {offsets = [0, 2, 0], sizes = [2, 10, 128], strides = [1, 1, 1]} : vector<2x14x128xbf16> to vector<2x10x128xbf16>
    %63 = vector.shape_cast %62 : vector<2x10x128xbf16> to vector<20x128xbf16>
    %c2_30 = arith.constant 2 : index
    %c0_31 = arith.constant 0 : index
    %c0_32 = arith.constant 0 : index
    %64 = vector.load %arg4[%c2_30, %c0_31, %c0_32] : memref<5x128x256xbf16, #tpu.memory_space<vmem>>, vector<1x128x256xbf16>
    %65 = vector.shape_cast %64 : vector<1x128x256xbf16> to vector<128x256xbf16>
    %cst_33 = arith.constant dense<0.000000e+00> : vector<20x256xf32>
    %66 = tpu.matmul %63, %65, %cst_33 {dimension_numbers = #tpu.dot_dimension_numbers<[1], [0], [0], [1], [0, 0, 1, 1], [], []>} : vector<20x128xbf16>, vector<128x256xbf16>, vector<20x256xf32> -> vector<20x256xf32>
    %67 = arith.addf %61, %66 : vector<20x256xf32>
    %68 = vector.extract_strided_slice %48 {offsets = [0, 3, 0], sizes = [2, 10, 128], strides = [1, 1, 1]} : vector<2x14x128xbf16> to vector<2x10x128xbf16>
    %69 = vector.shape_cast %68 : vector<2x10x128xbf16> to vector<20x128xbf16>
    %c3_34 = arith.constant 3 : index
    %c0_35 = arith.constant 0 : index
    %c0_36 = arith.constant 0 : index
    %70 = vector.load %arg4[%c3_34, %c0_35, %c0_36] : memref<5x128x256xbf16, #tpu.memory_space<vmem>>, vector<1x128x256xbf16>
    %71 = vector.shape_cast %70 : vector<1x128x256xbf16> to vector<128x256xbf16>
    %cst_37 = arith.constant dense<0.000000e+00> : vector<20x256xf32>
    %72 = tpu.matmul %69, %71, %cst_37 {dimension_numbers = #tpu.dot_dimension_numbers<[1], [0], [0], [1], [0, 0, 1, 1], [], []>} : vector<20x128xbf16>, vector<128x256xbf16>, vector<20x256xf32> -> vector<20x256xf32>
    %73 = arith.addf %67, %72 : vector<20x256xf32>
    %74 = vector.extract_strided_slice %48 {offsets = [0, 4, 0], sizes = [2, 10, 128], strides = [1, 1, 1]} : vector<2x14x128xbf16> to vector<2x10x128xbf16>
    %75 = vector.shape_cast %74 : vector<2x10x128xbf16> to vector<20x128xbf16>
    %c4_38 = arith.constant 4 : index
    %c0_39 = arith.constant 0 : index
    %c0_40 = arith.constant 0 : index
    %76 = vector.load %arg4[%c4_38, %c0_39, %c0_40] : memref<5x128x256xbf16, #tpu.memory_space<vmem>>, vector<1x128x256xbf16>
    %77 = vector.shape_cast %76 : vector<1x128x256xbf16> to vector<128x256xbf16>
    %cst_41 = arith.constant dense<0.000000e+00> : vector<20x256xf32>
    %78 = tpu.matmul %75, %77, %cst_41 {dimension_numbers = #tpu.dot_dimension_numbers<[1], [0], [0], [1], [0, 0, 1, 1], [], []>} : vector<20x128xbf16>, vector<128x256xbf16>, vector<20x256xf32> -> vector<20x256xf32>
    %79 = arith.addf %73, %78 : vector<20x256xf32>
    %80 = vector.extract_strided_slice %79 {offsets = [0, 0], sizes = [20, 128], strides = [1, 1]} : vector<20x256xf32> to vector<20x128xf32>
    %81 = vector.extract_strided_slice %79 {offsets = [0, 128], sizes = [20, 128], strides = [1, 1]} : vector<20x256xf32> to vector<20x128xf32>
    %82 = arith.maximumf %80, %81 : vector<20x128xf32>
    %83 = vector.shape_cast %82 : vector<20x128xf32> to vector<10x2x128xf32>
    %84 = vector.extract_strided_slice %83 {offsets = [0, 0, 0], sizes = [10, 1, 128], strides = [1, 1, 1]} : vector<10x2x128xf32> to vector<10x1x128xf32>
    %85 = vector.shape_cast %84 : vector<10x1x128xf32> to vector<10x128xf32>
    %86 = vector.extract_strided_slice %83 {offsets = [0, 1, 0], sizes = [10, 1, 128], strides = [1, 1, 1]} : vector<10x2x128xf32> to vector<10x1x128xf32>
    %87 = vector.shape_cast %86 : vector<10x1x128xf32> to vector<10x128xf32>
    %88 = arith.maximumf %85, %87 : vector<10x128xf32>
    %89 = vector.shape_cast %88 : vector<10x128xf32> to vector<2x5x128xf32>
    %c0_42 = arith.constant 0 : index
    %c0_43 = arith.constant 0 : index
    %90 = vector.load %arg5[%c0_42, %c0_43] : memref<1x128xf32, #tpu.memory_space<vmem>>, vector<1x128xf32>
    %91 = vector.shape_cast %90 : vector<1x128xf32> to vector<1x1x128xf32>
    %92 = vector.broadcast %91 : vector<1x1x128xf32> to vector<2x5x128xf32>
    %93 = arith.addf %89, %92 : vector<2x5x128xf32>
    %cst_44 = arith.constant 0.000000e+00 : f32
    %94 = vector.broadcast %cst_44 : f32 to vector<2x5x128xf32>
    %95 = arith.maximumf %93, %94 : vector<2x5x128xf32>
    %96 = arith.truncf %95 : vector<2x5x128xf32> to vector<2x5x128xbf16>
    %cst_45 = arith.constant 0.000000e+00 : f32
    %97 = vector.broadcast %cst_45 : f32 to vector<2x120xf32>
    %98 = vector.extract_strided_slice %96 {offsets = [0, 0, 0], sizes = [2, 1, 128], strides = [1, 1, 1]} : vector<2x5x128xbf16> to vector<2x1x128xbf16>
    %99 = vector.shape_cast %98 : vector<2x1x128xbf16> to vector<2x128xbf16>
    %c0_46 = arith.constant 0 : index
    %c0_47 = arith.constant 0 : index
    %c0_48 = arith.constant 0 : index
    %100 = vector.load %arg6[%c0_46, %c0_47, %c0_48] : memref<5x128x120xbf16, #tpu.memory_space<vmem>>, vector<1x128x120xbf16>
    %101 = vector.shape_cast %100 : vector<1x128x120xbf16> to vector<128x120xbf16>
    %cst_49 = arith.constant dense<0.000000e+00> : vector<2x120xf32>
    %102 = tpu.matmul %99, %101, %cst_49 {dimension_numbers = #tpu.dot_dimension_numbers<[1], [0], [0], [1], [0, 0, 1, 1], [], []>} : vector<2x128xbf16>, vector<128x120xbf16>, vector<2x120xf32> -> vector<2x120xf32>
    %103 = arith.addf %97, %102 : vector<2x120xf32>
    %104 = vector.extract_strided_slice %96 {offsets = [0, 1, 0], sizes = [2, 1, 128], strides = [1, 1, 1]} : vector<2x5x128xbf16> to vector<2x1x128xbf16>
    %105 = vector.shape_cast %104 : vector<2x1x128xbf16> to vector<2x128xbf16>
    %c1_50 = arith.constant 1 : index
    %c0_51 = arith.constant 0 : index
    %c0_52 = arith.constant 0 : index
    %106 = vector.load %arg6[%c1_50, %c0_51, %c0_52] : memref<5x128x120xbf16, #tpu.memory_space<vmem>>, vector<1x128x120xbf16>
    %107 = vector.shape_cast %106 : vector<1x128x120xbf16> to vector<128x120xbf16>
    %cst_53 = arith.constant dense<0.000000e+00> : vector<2x120xf32>
    %108 = tpu.matmul %105, %107, %cst_53 {dimension_numbers = #tpu.dot_dimension_numbers<[1], [0], [0], [1], [0, 0, 1, 1], [], []>} : vector<2x128xbf16>, vector<128x120xbf16>, vector<2x120xf32> -> vector<2x120xf32>
    %109 = arith.addf %103, %108 : vector<2x120xf32>
    %110 = vector.extract_strided_slice %96 {offsets = [0, 2, 0], sizes = [2, 1, 128], strides = [1, 1, 1]} : vector<2x5x128xbf16> to vector<2x1x128xbf16>
    %111 = vector.shape_cast %110 : vector<2x1x128xbf16> to vector<2x128xbf16>
    %c2_54 = arith.constant 2 : index
    %c0_55 = arith.constant 0 : index
    %c0_56 = arith.constant 0 : index
    %112 = vector.load %arg6[%c2_54, %c0_55, %c0_56] : memref<5x128x120xbf16, #tpu.memory_space<vmem>>, vector<1x128x120xbf16>
    %113 = vector.shape_cast %112 : vector<1x128x120xbf16> to vector<128x120xbf16>
    %cst_57 = arith.constant dense<0.000000e+00> : vector<2x120xf32>
    %114 = tpu.matmul %111, %113, %cst_57 {dimension_numbers = #tpu.dot_dimension_numbers<[1], [0], [0], [1], [0, 0, 1, 1], [], []>} : vector<2x128xbf16>, vector<128x120xbf16>, vector<2x120xf32> -> vector<2x120xf32>
    %115 = arith.addf %109, %114 : vector<2x120xf32>
    %116 = vector.extract_strided_slice %96 {offsets = [0, 3, 0], sizes = [2, 1, 128], strides = [1, 1, 1]} : vector<2x5x128xbf16> to vector<2x1x128xbf16>
    %117 = vector.shape_cast %116 : vector<2x1x128xbf16> to vector<2x128xbf16>
    %c3_58 = arith.constant 3 : index
    %c0_59 = arith.constant 0 : index
    %c0_60 = arith.constant 0 : index
    %118 = vector.load %arg6[%c3_58, %c0_59, %c0_60] : memref<5x128x120xbf16, #tpu.memory_space<vmem>>, vector<1x128x120xbf16>
    %119 = vector.shape_cast %118 : vector<1x128x120xbf16> to vector<128x120xbf16>
    %cst_61 = arith.constant dense<0.000000e+00> : vector<2x120xf32>
    %120 = tpu.matmul %117, %119, %cst_61 {dimension_numbers = #tpu.dot_dimension_numbers<[1], [0], [0], [1], [0, 0, 1, 1], [], []>} : vector<2x128xbf16>, vector<128x120xbf16>, vector<2x120xf32> -> vector<2x120xf32>
    %121 = arith.addf %115, %120 : vector<2x120xf32>
    %122 = vector.extract_strided_slice %96 {offsets = [0, 4, 0], sizes = [2, 1, 128], strides = [1, 1, 1]} : vector<2x5x128xbf16> to vector<2x1x128xbf16>
    %123 = vector.shape_cast %122 : vector<2x1x128xbf16> to vector<2x128xbf16>
    %c4_62 = arith.constant 4 : index
    %c0_63 = arith.constant 0 : index
    %c0_64 = arith.constant 0 : index
    %124 = vector.load %arg6[%c4_62, %c0_63, %c0_64] : memref<5x128x120xbf16, #tpu.memory_space<vmem>>, vector<1x128x120xbf16>
    %125 = vector.shape_cast %124 : vector<1x128x120xbf16> to vector<128x120xbf16>
    %cst_65 = arith.constant dense<0.000000e+00> : vector<2x120xf32>
    %126 = tpu.matmul %123, %125, %cst_65 {dimension_numbers = #tpu.dot_dimension_numbers<[1], [0], [0], [1], [0, 0, 1, 1], [], []>} : vector<2x128xbf16>, vector<128x120xbf16>, vector<2x120xf32> -> vector<2x120xf32>
    %127 = arith.addf %121, %126 : vector<2x120xf32>
    %c0_66 = arith.constant 0 : index
    %c0_67 = arith.constant 0 : index
    %128 = vector.load %arg7[%c0_66, %c0_67] : memref<1x120xf32, #tpu.memory_space<vmem>>, vector<1x120xf32>
    %129 = vector.broadcast %128 : vector<1x120xf32> to vector<2x120xf32>
    %130 = arith.addf %127, %129 : vector<2x120xf32>
    %cst_68 = arith.constant 0.000000e+00 : f32
    %131 = vector.broadcast %cst_68 : f32 to vector<2x120xf32>
    %132 = arith.maximumf %130, %131 : vector<2x120xf32>
    %133 = arith.truncf %132 : vector<2x120xf32> to vector<2x120xbf16>
    %c0_69 = arith.constant 0 : index
    %c0_70 = arith.constant 0 : index
    %134 = vector.load %arg8[%c0_69, %c0_70] : memref<120x84xbf16, #tpu.memory_space<vmem>>, vector<120x84xbf16>
    %cst_71 = arith.constant dense<0.000000e+00> : vector<2x84xf32>
    %135 = tpu.matmul %133, %134, %cst_71 {dimension_numbers = #tpu.dot_dimension_numbers<[1], [0], [0], [1], [0, 0, 1, 1], [], []>} : vector<2x120xbf16>, vector<120x84xbf16>, vector<2x84xf32> -> vector<2x84xf32>
    %c0_72 = arith.constant 0 : index
    %c0_73 = arith.constant 0 : index
    %136 = vector.load %arg9[%c0_72, %c0_73] : memref<1x84xf32, #tpu.memory_space<vmem>>, vector<1x84xf32>
    %137 = vector.broadcast %136 : vector<1x84xf32> to vector<2x84xf32>
    %138 = arith.addf %135, %137 : vector<2x84xf32>
    %cst_74 = arith.constant 0.000000e+00 : f32
    %139 = vector.broadcast %cst_74 : f32 to vector<2x84xf32>
    %140 = arith.maximumf %138, %139 : vector<2x84xf32>
    %141 = arith.truncf %140 : vector<2x84xf32> to vector<2x84xbf16>
    %c0_75 = arith.constant 0 : index
    %c0_76 = arith.constant 0 : index
    %142 = vector.load %arg10[%c0_75, %c0_76] : memref<84x128xbf16, #tpu.memory_space<vmem>>, vector<84x128xbf16>
    %cst_77 = arith.constant dense<0.000000e+00> : vector<2x128xf32>
    %143 = tpu.matmul %141, %142, %cst_77 {dimension_numbers = #tpu.dot_dimension_numbers<[1], [0], [0], [1], [0, 0, 1, 1], [], []>} : vector<2x84xbf16>, vector<84x128xbf16>, vector<2x128xf32> -> vector<2x128xf32>
    %c0_78 = arith.constant 0 : index
    %c0_79 = arith.constant 0 : index
    %144 = vector.load %arg11[%c0_78, %c0_79] : memref<1x128xf32, #tpu.memory_space<vmem>>, vector<1x128xf32>
    %145 = vector.broadcast %144 : vector<1x128xf32> to vector<2x128xf32>
    %146 = arith.addf %143, %145 : vector<2x128xf32>
    %c0_80 = arith.constant 0 : index
    %c0_81 = arith.constant 0 : index
    %147 = vector.load %arg12[%c0_80, %c0_81] : memref<2x128xf32, #tpu.memory_space<vmem>>, vector<2x128xf32>
    tpu.vector_store %arg12[%c0_80, %c0_81], %146 {strides = array<i32>} : memref<2x128xf32, #tpu.memory_space<vmem>>, vector<2x128xf32>,
    return
  }
  func.func @transform_0(%arg0: i32) -> (i32, i32, i32) {
    %c0_i32 = arith.constant 0 : i32
    %c0_i32_0 = arith.constant 0 : i32
    %c0_i32_1 = arith.constant 0 : i32
    return %arg0, %c0_i32, %c0_i32_0 : i32, i32, i32
  }
  func.func @transform_1(%arg0: i32) -> (i32, i32, i32) {
    %c0_i32 = arith.constant 0 : i32
    %c0_i32_0 = arith.constant 0 : i32
    %c0_i32_1 = arith.constant 0 : i32
    %c0_i32_2 = arith.constant 0 : i32
    return %c0_i32, %c0_i32_0, %c0_i32_1 : i32, i32, i32
  }
  func.func @transform_2(%arg0: i32) -> (i32, i32) {
    %c0_i32 = arith.constant 0 : i32
    %c0_i32_0 = arith.constant 0 : i32
    %c0_i32_1 = arith.constant 0 : i32
    return %c0_i32, %c0_i32_0 : i32, i32
  }
  func.func @transform_3(%arg0: i32) -> (i32, i32, i32) {
    %c0_i32 = arith.constant 0 : i32
    %c0_i32_0 = arith.constant 0 : i32
    %c0_i32_1 = arith.constant 0 : i32
    %c0_i32_2 = arith.constant 0 : i32
    return %c0_i32, %c0_i32_0, %c0_i32_1 : i32, i32, i32
  }
  func.func @transform_4(%arg0: i32) -> (i32, i32) {
    %c0_i32 = arith.constant 0 : i32
    %c0_i32_0 = arith.constant 0 : i32
    %c0_i32_1 = arith.constant 0 : i32
    return %c0_i32, %c0_i32_0 : i32, i32
  }
  func.func @transform_5(%arg0: i32) -> (i32, i32, i32) {
    %c0_i32 = arith.constant 0 : i32
    %c0_i32_0 = arith.constant 0 : i32
    %c0_i32_1 = arith.constant 0 : i32
    %c0_i32_2 = arith.constant 0 : i32
    return %c0_i32, %c0_i32_0, %c0_i32_1 : i32, i32, i32
  }
  func.func @transform_6(%arg0: i32) -> (i32, i32) {
    %c0_i32 = arith.constant 0 : i32
    %c0_i32_0 = arith.constant 0 : i32
    %c0_i32_1 = arith.constant 0 : i32
    return %c0_i32, %c0_i32_0 : i32, i32
  }
  func.func @transform_7(%arg0: i32) -> (i32, i32) {
    %c0_i32 = arith.constant 0 : i32
    %c0_i32_0 = arith.constant 0 : i32
    %c0_i32_1 = arith.constant 0 : i32
    return %c0_i32, %c0_i32_0 : i32, i32
  }
  func.func @transform_8(%arg0: i32) -> (i32, i32) {
    %c0_i32 = arith.constant 0 : i32
    %c0_i32_0 = arith.constant 0 : i32
    %c0_i32_1 = arith.constant 0 : i32
    return %c0_i32, %c0_i32_0 : i32, i32
  }
  func.func @transform_9(%arg0: i32) -> (i32, i32) {
    %c0_i32 = arith.constant 0 : i32
    %c0_i32_0 = arith.constant 0 : i32
    %c0_i32_1 = arith.constant 0 : i32
    return %c0_i32, %c0_i32_0 : i32, i32
  }
  func.func @transform_10(%arg0: i32) -> (i32, i32) {
    %c0_i32 = arith.constant 0 : i32
    %c0_i32_0 = arith.constant 0 : i32
    %c0_i32_1 = arith.constant 0 : i32
    return %c0_i32, %c0_i32_0 : i32, i32
  }
  func.func @transform_11(%arg0: i32) -> (i32, i32) {
    %c0_i32 = arith.constant 0 : i32
    %c0_i32_0 = arith.constant 0 : i32
    return %arg0, %c0_i32 : i32, i32
  }
}

</mosaic_0001>

<llo_original>
// kernel: net_forward.1
$region0: #{net_forward.1}
  #allocation0 [shape = 'u32[]', space=smem, size = 0x4, offset = 0x4, fixed_abs, tag = 'smem constant byte address 0x4 - core index']
  #allocation1 [shape = 'u32[144,128]{1,0:T(1,128)}', space=vmem, size = 0x12000, scoped, tag = 'internal scratch']
  %s0 = inlined_call_operand.vmem [shape: bf16[2,32,96], index: 0, kind: input, shape index: {}]
  %s1 = inlined_call_operand.hbm [shape: bf16[5,96,256], index: 1, kind: input, shape index: {}]
  %s2 = inlined_call_operand.vmem [shape: f32[1,128], index: 2, kind: input, shape index: {}]
  %s3 = inlined_call_operand.vmem [shape: bf16[5,128,256], index: 3, kind: input, shape index: {}]
  %s4 = inlined_call_operand.vmem [shape: f32[1,128], index: 4, kind: input, shape index: {}]
  %s5 = inlined_call_operand.vmem [shape: bf16[5,128,120], index: 5, kind: input, shape index: {}]
  %s6 = inlined_call_operand.vmem [shape: f32[1,120], index: 6, kind: input, shape index: {}]
  %s7 = inlined_call_operand.vmem [shape: bf16[120,84], index: 7, kind: input, shape index: {}]
  %s8 = inlined_call_operand.vmem [shape: f32[1,84], index: 8, kind: input, shape index: {}]
  %s9 = inlined_call_operand.vmem [shape: bf16[84,128], index: 9, kind: input, shape index: {}]
  %s10 = inlined_call_operand.vmem [shape: f32[1,128], index: 10, kind: input, shape index: {}]
  %s11 = inlined_call_operand.hbm [shape: f32[2,128], index: 11, kind: output, shape index: {}]
  %s12 = sld [smem:[#allocation0]]
  $region58: #{net_forward.1} parent=0
    _
  %s14 = ssub.s32 1, %s12
  %s15 = scalar_select 0, %s14, %s12
  $region1: #{net_forward.1} parent=0
    #allocation2 [shape = 'u8[245760]{0}', space=vmem, size = 0x3c000, scoped, tag = 'input window, operand 1, single buffered']
    #allocation3 [shape = 's32[1]{0}', space=sflag, size = 0x4, scoped, tag = 'scoped memory for net_forward.1']
    #allocation4 [shape = 's32[1]{0}', space=sflag, size = 0x4, scoped, tag = 'scoped memory for net_forward.1']
    #allocation5 [shape = 'u8[1024]{0}', space=vmem, size = 0x400, scoped, tag = 'output window, operand 0, single buffered']
    %16 = vsyncpa [#allocation3], 0
    %17 = vsyncpa [#allocation4], 0
    // Predicated region
    $region2: #{net_forward.1} parent=1 // pred_check
      _
    $region3: #{net_forward.1} parent=1 // pred_check_branch
      %19 = sbr.rel (0) target = $region5
    $region4: #{net_forward.1} parent=1 // pred_region
      _
    $region5: #{net_forward.1} parent=1 // pred_fallthru
      _
    // Predicated region
    $region6: #{net_forward.1} parent=1 // pred_check
      _
    $region7: #{net_forward.1} parent=1 // pred_check_branch
      %21 = sbr.rel (0) target = $region9
    $region8: #{net_forward.1} parent=1 // pred_region
      %s23 = ssub.s32 7680, 7680
      %24 = vsyncadd [#allocation3], %s23
      %s25 = sshll.u32 [#allocation2], 4
      %s26 = int_to_ptr.vmem [resolvable:$true] %s25
      %31 = dma.hbm_to_vmem [thread:$0]  %s1, 7680, %s26, [#allocation3], 128, 128, 8
    $region9: #{net_forward.1} parent=1 // pred_fallthru
      _
    // Predicated region
    $region10: #{net_forward.1} parent=1 // pred_check
      _
    $region11: #{net_forward.1} parent=1 // pred_check_branch
      %33 = sbr.rel (0) target = $region13
    $region12: #{net_forward.1} parent=1 // pred_region
      _
    $region13: #{net_forward.1} parent=1 // pred_fallthru
      _
    // Predicated region
    $region14: #{net_forward.1} parent=1 // pred_check
      _
    $region15: #{net_forward.1} parent=1 // pred_check_branch
      %35 = sbr.rel (0) target = $region17
    $region16: #{net_forward.1} parent=1 // pred_region
      _
    $region17: #{net_forward.1} parent=1 // pred_fallthru
      _
    // Predicated region
    $region18: #{net_forward.1} parent=1 // pred_check
      _
    $region19: #{net_forward.1} parent=1 // pred_check_branch
      %37 = sbr.rel (0) target = $region21
    $region20: #{net_forward.1} parent=1 // pred_region
      _
    $region21: #{net_forward.1} parent=1 // pred_fallthru
      _
    // Predicated region
    $region22: #{net_forward.1} parent=1 // pred_check
      _
    $region23: #{net_forward.1} parent=1 // pred_check_branch
      %39 = sbr.rel (0) target = $region25
    $region24: #{net_forward.1} parent=1 // pred_region
      _
    $region25: #{net_forward.1} parent=1 // pred_fallthru
      _
    // Predicated region
    $region26: #{net_forward.1} parent=1 // pred_check
      _
    $region27: #{net_forward.1} parent=1 // pred_check_branch
      %41 = sbr.rel (0) target = $region29
    $region28: #{net_forward.1} parent=1 // pred_region
      _
    $region29: #{net_forward.1} parent=1 // pred_fallthru
      _
    // Predicated region
    $region30: #{net_forward.1} parent=1 // pred_check
      _
    $region31: #{net_forward.1} parent=1 // pred_check_branch
      %43 = sbr.rel (0) target = $region33
    $region32: #{net_forward.1} parent=1 // pred_region
      _
    $region33: #{net_forward.1} parent=1 // pred_fallthru
      _
    // Predicated region
    $region34: #{net_forward.1} parent=1 // pred_check
      _
    $region35: #{net_forward.1} parent=1 // pred_check_branch
      %45 = sbr.rel (0) target = $region37
    $region36: #{net_forward.1} parent=1 // pred_region
      _
    $region37: #{net_forward.1} parent=1 // pred_fallthru
      _
    // Predicated region
    $region38: #{net_forward.1} parent=1 // pred_check
      _
    $region39: #{net_forward.1} parent=1 // pred_check_branch
      %47 = sbr.rel (0) target = $region41
    $region40: #{net_forward.1} parent=1 // pred_region
      _
    $region41: #{net_forward.1} parent=1 // pred_fallthru
      _
    // Predicated region
    $region42: #{net_forward.1} parent=1 // pred_check
      _
    $region43: #{net_forward.1} parent=1 // pred_check_branch
      %49 = sbr.rel (0) target = $region45
    $region44: #{net_forward.1} parent=1 // pred_region
      _
    $region45: #{net_forward.1} parent=1 // pred_fallthru
      _
    // Predicated region
    $region46: #{net_forward.1} parent=1 // pred_check
      _
    $region47: #{net_forward.1} parent=1 // pred_check_branch
      %51 = sbr.rel (0) target = $region49
    $region48: #{net_forward.1} parent=1 // pred_region
      %52 = dma.done [#allocation3], 7680
    $region49: #{net_forward.1} parent=1 // pred_fallthru
      _
    %v54 = vld [vmem:[%s0] sm:$0xf]
    %v55 = vld [vmem:[%s0 + $0x4] sm:$0xf]
    %v56 = vld [vmem:[%s0 + $0x8] sm:$0xf]
    %v57 = vld [vmem:[%s0 + $0xc] sm:$0xf]
    %v58 = vld [vmem:[%s0 + $0x10] sm:$0xf]
    %v59 = vld [vmem:[%s0 + $0x14] sm:$0xf]
    %v60 = vld [vmem:[%s0 + $0x18] sm:$0xf]
    %v61 = vld [vmem:[%s0 + $0x1c] sm:$0xf]
    %v71 = vunpack.c.l.s4 1983009808
    %v72 = vunpack.c.0.s8 %v71
    %v73 = vlaneseq
    %v74 = vshrl.u32 %v73, 7
    %v75 = vsub.s32 %v72, %v74
    %v76 = vrot.slane %v54, %v75
    %v77 = vcombine.high %v76, %v76
    %v79 = vunpack.c.l.s4 1983009808
    %v80 = vunpack.c.0.s8 %v79
    %v81 = vlaneseq
    %v82 = vshrl.u32 %v81, 7
    %v83 = vsub.s32 %v80, %v82
    %v84 = vrot.slane %v55, %v83
    %v85 = vcombine.high %v84, %v84
    %v87 = vunpack.c.l.s4 1983009808
    %v88 = vunpack.c.0.s8 %v87
    %v89 = vlaneseq
    %v90 = vshrl.u32 %v89, 7
    %v91 = vsub.s32 %v88, %v90
    %v92 = vrot.slane %v56, %v91
    %v93 = vcombine.high %v92, %v92
    %v95 = vunpack.c.l.s4 1983009808
    %v96 = vunpack.c.0.s8 %v95
    %v97 = vlaneseq
    %v98 = vshrl.u32 %v97, 7
    %v99 = vsub.s32 %v96, %v98
    %v100 = vrot.slane %v57, %v99
    %v102 = vunpack.c.l.s4 1983009808
    %v103 = vunpack.c.0.s8 %v102
    %v104 = vlaneseq
    %v105 = vshrl.u32 %v104, 7
    %v106 = vsub.s32 %v103, %v105
    %v107 = vrot.slane %v58, %v106
    %v108 = vcombine.high %v107, %v107
    %v110 = vunpack.c.l.s4 1983009808
    %v111 = vunpack.c.0.s8 %v110
    %v112 = vlaneseq
    %v113 = vshrl.u32 %v112, 7
    %v114 = vsub.s32 %v111, %v113
    %v115 = vrot.slane %v59, %v114
    %v116 = vcombine.high %v115, %v115
    %v118 = vunpack.c.l.s4 1983009808
    %v119 = vunpack.c.0.s8 %v118
    %v120 = vlaneseq
    %v121 = vshrl.u32 %v120, 7
    %v122 = vsub.s32 %v119, %v121
    %v123 = vrot.slane %v60, %v122
    %v124 = vcombine.high %v123, %v123
    %v126 = vunpack.c.l.s4 1983009808
    %v127 = vunpack.c.0.s8 %v126
    %v128 = vlaneseq
    %v129 = vshrl.u32 %v128, 7
    %v130 = vsub.s32 %v127, %v129
    %v131 = vrot.slane %v61, %v130
    %v132 = vld [vmem:[#allocation2] sm:$0xff]
    %v133 = vld [vmem:[#allocation2 + $0x8] sm:$0xff]
    %v134 = vld [vmem:[#allocation2 + $0x10] sm:$0xff]
    %v135 = vld [vmem:[#allocation2 + $0x18] sm:$0xff]
    %v136 = vld [vmem:[#allocation2 + $0x20] sm:$0xff]
    %v137 = vld [vmem:[#allocation2 + $0x28] sm:$0xff]
    %v138 = vld [vmem:[#allocation2 + $0x30] sm:$0xff]
    %v139 = vld [vmem:[#allocation2 + $0x38] sm:$0xff]
    %v140 = vld [vmem:[#allocation2 + $0x40] sm:$0xff]
    %v141 = vld [vmem:[#allocation2 + $0x48] sm:$0xff]
    %v142 = vld [vmem:[#allocation2 + $0x50] sm:$0xff]
    %v143 = vld [vmem:[#allocation2 + $0x58] sm:$0xff]
    %v144 = vcombine.high %v100, %v100
    %v145 = vcombine.high %v131, %v131
    %vm146 = vsmask.f32 1280
    %vm147 = vsmask.f32 3336
    %vm148 = vmor %vm146, %vm147
    %vm149 = vsmask.f32 5392
    %vm150 = vmor %vm148, %vm149
    %vm151 = vsmask.f32 7448
    %vm152 = vmor %vm150, %vm151
    %v154 = vshrl.u32 %v76, 16
    %v156 = vrot.slane %v154, 6
    %v157 = vshll.u32 %v76, 16
    %v159 = vrot.slane %v157, 7
    %v160 = vor.u32 %v156, %v159
    %v161 = vrot.slane %v160, 2
    %v163 = vshll.u32 %v77, 16
    %v165 = vrot.slane %v163, 7
    %v166 = vsel %vm152, %v161, %v165
    %v167 = vshrl.u32 %v77, 16
    %v169 = vrot.slane %v167, 6
    %v170 = vor.u32 %v169, %v165
    %v171 = vrot.slane %v170, 2
    %v173 = vshll.u32 %v84, 16
    %v175 = vrot.slane %v173, 7
    %v176 = vsel %vm152, %v171, %v175
    %v177 = vshrl.u32 %v84, 16
    %v179 = vrot.slane %v177, 6
    %v180 = vor.u32 %v179, %v175
    %v181 = vrot.slane %v180, 2
    %v183 = vshll.u32 %v85, 16
    %v185 = vrot.slane %v183, 7
    %v186 = vsel %vm152, %v181, %v185
    %v187 = vshrl.u32 %v85, 16
    %v189 = vrot.slane %v187, 6
    %v190 = vor.u32 %v189, %v185
    %v191 = vrot.slane %v190, 2
    %v193 = vshll.u32 %v92, 16
    %v195 = vrot.slane %v193, 7
    %v196 = vsel %vm152, %v191, %v195
    %v197 = vshrl.u32 %v92, 16
    %v199 = vrot.slane %v197, 6
    %v200 = vor.u32 %v199, %v195
    %v201 = vrot.slane %v200, 2
    %v203 = vshll.u32 %v93, 16
    %v205 = vrot.slane %v203, 7
    %v206 = vsel %vm152, %v201, %v205
    %v207 = vshrl.u32 %v93, 16
    %v209 = vrot.slane %v207, 6
    %v210 = vor.u32 %v209, %v205
    %v211 = vrot.slane %v210, 2
    %v213 = vshll.u32 %v100, 16
    %v215 = vrot.slane %v213, 7
    %v216 = vsel %vm152, %v211, %v215
    %v217 = vshrl.u32 %v100, 16
    %v219 = vrot.slane %v217, 6
    %v220 = vor.u32 %v219, %v215
    %v221 = vrot.slane %v220, 2
    %v223 = vshll.u32 %v144, 16
    %v225 = vrot.slane %v223, 7
    %v226 = vsel %vm152, %v221, %v225
    %v228 = vshrl.u32 %v107, 16
    %v230 = vrot.slane %v228, 6
    %v231 = vshll.u32 %v107, 16
    %v233 = vrot.slane %v231, 7
    %v234 = vor.u32 %v230, %v233
    %v235 = vrot.slane %v234, 2
    %v237 = vshll.u32 %v108, 16
    %v239 = vrot.slane %v237, 7
    %v240 = vsel %vm152, %v235, %v239
    %v241 = vshrl.u32 %v108, 16
    %v243 = vrot.slane %v241, 6
    %v244 = vor.u32 %v243, %v239
    %v245 = vrot.slane %v244, 2
    %v247 = vshll.u32 %v115, 16
    %v249 = vrot.slane %v247, 7
    %v250 = vsel %vm152, %v245, %v249
    %v251 = vshrl.u32 %v115, 16
    %v253 = vrot.slane %v251, 6
    %v254 = vor.u32 %v253, %v249
    %v255 = vrot.slane %v254, 2
    %v257 = vshll.u32 %v116, 16
    %v259 = vrot.slane %v257, 7
    %v260 = vsel %vm152, %v255, %v259
    %v261 = vshrl.u32 %v116, 16
    %v263 = vrot.slane %v261, 6
    %v264 = vor.u32 %v263, %v259
    %v265 = vrot.slane %v264, 2
    %v267 = vshll.u32 %v123, 16
    %v269 = vrot.slane %v267, 7
    %v270 = vsel %vm152, %v265, %v269
    %v271 = vshrl.u32 %v123, 16
    %v273 = vrot.slane %v271, 6
    %v274 = vor.u32 %v273, %v269
    %v275 = vrot.slane %v274, 2
    %v277 = vshll.u32 %v124, 16
    %v279 = vrot.slane %v277, 7
    %v280 = vsel %vm152, %v275, %v279
    %v281 = vshrl.u32 %v124, 16
    %v283 = vrot.slane %v281, 6
    %v284 = vor.u32 %v283, %v279
    %v285 = vrot.slane %v284, 2
    %v287 = vshll.u32 %v131, 16
    %v289 = vrot.slane %v287, 7
    %v290 = vsel %vm152, %v285, %v289
    %v291 = vshrl.u32 %v131, 16
    %v293 = vrot.slane %v291, 6
    %v294 = vor.u32 %v293, %v289
    %v295 = vrot.slane %v294, 2
    %v297 = vshll.u32 %v145, 16
    %v299 = vrot.slane %v297, 7
    %v300 = vsel %vm152, %v295, %v299
    %s301 = scalar_lea.vmem [#allocation2], 96
    %v302 = vld [vmem:[%s301] sm:$0xff]
    %v303 = vld [vmem:[%s301 + $0x8] sm:$0xff]
    %v304 = vld [vmem:[%s301 + $0x10] sm:$0xff]
    %v305 = vld [vmem:[%s301 + $0x18] sm:$0xff]
    %v306 = vld [vmem:[%s301 + $0x20] sm:$0xff]
    %v307 = vld [vmem:[%s301 + $0x28] sm:$0xff]
    %v308 = vld [vmem:[%s301 + $0x30] sm:$0xff]
    %v309 = vld [vmem:[%s301 + $0x38] sm:$0xff]
    %v310 = vld [vmem:[%s301 + $0x40] sm:$0xff]
    %v311 = vld [vmem:[%s301 + $0x48] sm:$0xff]
    %v312 = vld [vmem:[%s301 + $0x50] sm:$0xff]
    %v313 = vld [vmem:[%s301 + $0x58] sm:$0xff]
    %v314 = vcombine.low %v166, %v176
    %v315 = vcombine.low %v186, %v196
    %v317 = vunpack.c.l.s4 1983009808
    %v318 = vunpack.c.0.s8 %v317
    %v319 = vlaneseq
    %v320 = vshrl.u32 %v319, 7
    %v321 = vsub.s32 %v318, %v320
    %v322 = vrot.slane %v314, %v321
    %v324 = vunpack.c.l.s4 1983009808
    %v325 = vunpack.c.0.s8 %v324
    %v326 = vlaneseq
    %v327 = vshrl.u32 %v326, 7
    %v328 = vsub.s32 %v325, %v327
    %v329 = vrot.slane %v315, %v328
    %v330 = vcombine.low %v322, %v329
    %v331 = vcombine.low %v206, %v216
    %v332 = vcombine.low %v226, %v240
    %v334 = vunpack.c.l.s4 1983009808
    %v335 = vunpack.c.0.s8 %v334
    %v336 = vlaneseq
    %v337 = vshrl.u32 %v336, 7
    %v338 = vsub.s32 %v335, %v337
    %v339 = vrot.slane %v331, %v338
    %v341 = vunpack.c.l.s4 1983009808
    %v342 = vunpack.c.0.s8 %v341
    %v343 = vlaneseq
    %v344 = vshrl.u32 %v343, 7
    %v345 = vsub.s32 %v342, %v344
    %v346 = vrot.slane %v332, %v345
    %v347 = vcombine.low %v339, %v346
    %v348 = vcombine.low %v250, %v260
    %v349 = vcombine.low %v270, %v280
    %v351 = vunpack.c.l.s4 1983009808
    %v352 = vunpack.c.0.s8 %v351
    %v353 = vlaneseq
    %v354 = vshrl.u32 %v353, 7
    %v355 = vsub.s32 %v352, %v354
    %v356 = vrot.slane %v348, %v355
    %v358 = vunpack.c.l.s4 1983009808
    %v359 = vunpack.c.0.s8 %v358
    %v360 = vlaneseq
    %v361 = vshrl.u32 %v360, 7
    %v362 = vsub.s32 %v359, %v361
    %v363 = vrot.slane %v349, %v362
    %v364 = vcombine.low %v356, %v363
    %v365 = vcombine.low %v290, %v300
    %v367 = vunpack.c.l.s4 1983009808
    %v368 = vunpack.c.0.s8 %v367
    %v369 = vlaneseq
    %v370 = vshrl.u32 %v369, 7
    %v371 = vsub.s32 %v368, %v370
    %v372 = vrot.slane %v365, %v371
    %v385 = vunpack.c.l.b16 %v302
    %v386 = vunpack.c.h.b16 %v302
    %v387 = vunpack.c.l.b16 %v303
    %v388 = vunpack.c.h.b16 %v303
    %v389 = vunpack.c.l.b16 %v304
    %v390 = vunpack.c.h.b16 %v304
    %v391 = vunpack.c.l.b16 %v305
    %v392 = vunpack.c.h.b16 %v305
    %v393 = vunpack.c.l.b16 %v306
    %v394 = vunpack.c.h.b16 %v306
    %v395 = vunpack.c.l.b16 %v307
    %v396 = vunpack.c.h.b16 %v307
    %v397 = vunpack.c.l.b16 %v308
    %v398 = vunpack.c.h.b16 %v308
    %v399 = vunpack.c.l.b16 %v309
    %v400 = vunpack.c.h.b16 %v309
    %v401 = vunpack.c.l.b16 %v310
    %v402 = vunpack.c.h.b16 %v310
    %v403 = vunpack.c.l.b16 %v311
    %v404 = vunpack.c.h.b16 %v311
    %v405 = vunpack.c.l.b16 %v312
    %v406 = vunpack.c.h.b16 %v312
    %v407 = vunpack.c.l.b16 %v313
    %v408 = vunpack.c.h.b16 %v313
    %v409 = vpack.c.b16 %v387, %v385
    %v410 = vpack.c.b16 %v388, %v386
    %v411 = vpack.c.b16 %v391, %v389
    %v412 = vpack.c.b16 %v392, %v390
    %v413 = vpack.c.b16 %v395, %v393
    %v414 = vpack.c.b16 %v396, %v394
    %v415 = vpack.c.b16 %v399, %v397
    %v416 = vpack.c.b16 %v400, %v398
    %v417 = vpack.c.b16 %v403, %v401
    %v418 = vpack.c.b16 %v404, %v402
    %v419 = vpack.c.b16 %v407, %v405
    %v420 = vpack.c.b16 %v408, %v406
    %vm433 = vcmask 785408
    %v435 = vsel %vm433, %v330, 0
    %v438 = vsel %vm433, %v347, 0
    %v441 = vsel %vm433, %v364, 0
    %v444 = vsel %vm433, %v372, 0
    %446 = vmatprep.subr.bf16.mxu0 %v410
    %447 = vmatpush1.bf16.msra.mxu0 %v409
    %448 = vmatprep.subr.bf16.mxu0 %v412
    %449 = vmatpush1.bf16.msra.mxu0 %v411
    %450 = vmatprep.subr.bf16.mxu0 %v414
    %451 = vmatpush1.bf16.msra.mxu0 %v413
    %452 = vmatprep.subr.bf16.mxu0 %v416
    %453 = vmatpush1.bf16.msra.mxu0 %v415
    %454 = vmatprep.subr.bf16.mxu0 %v418
    %455 = vmatpush1.bf16.msra.mxu0 %v417
    %456 = vmatprep.subr.bf16.mxu0 %v420
    %457 = vmatpush1.bf16.msra.mxu0 %v419
    %458 = vmatprep.subr.bf16.mxu0 0
    %459 = vmatpush1.bf16.msra.mxu0 0
    %460 = vmatprep.subr.bf16.mxu0 0
    %461 = vmatpush1.bf16.msra.mxu0 0
    %462 = vmatprep.subr.bf16.mxu0 0
    %463 = vmatpush1.bf16.msra.mxu0 0
    %464 = vmatprep.subr.bf16.mxu0 0
    %465 = vmatpush1.bf16.msra.mxu0 0
    %466 = vmatprep.subr.bf16.mxu0 0
    %467 = vmatpush1.bf16.msra.mxu0 0
    %468 = vmatprep.subr.bf16.mxu0 0
    %469 = vmatpush1.bf16.msra.mxu0 0
    %470 = vmatprep.subr.bf16.mxu0 0
    %471 = vmatpush1.bf16.msra.mxu0 0
    %472 = vmatprep.subr.bf16.mxu0 0
    %473 = vmatpush1.bf16.msra.mxu0 0
    %474 = vmatprep.subr.bf16.mxu0 0
    %475 = vmatpush1.bf16.msra.mxu0 0
    %476 = vmatprep.subr.bf16.mxu0 0
    %477 = vmatpush1.bf16.msra.mxu0 0
    %478 = vmatprep.mubr.bf16.mxu0 0
    %479 = vmatmul.mubr.bf16.gmra.mrb[0].mxu0 %v435
    %v480 = vpop.f32.mrb[0].mxu0
    %v481 = vadd.f32 0.0, %v480
    %v482 = vpop.f32.mrb[0].mxu0
    %v483 = vadd.f32 0.0, %v482
    %v484 = vpop.f32.mrb[0].mxu0
    %v485 = vadd.f32 0.0, %v484
    %v486 = vpop.f32.mrb[0].mxu0
    %v487 = vadd.f32 0.0, %v486
    %488 = vmatprep.mubr.bf16.mxu0 0
    %489 = vmatmul.mubr.bf16.gmra.mrb[0].mxu0 %v438
    %v490 = vpop.f32.mrb[0].mxu0
    %v491 = vadd.f32 0.0, %v490
    %v492 = vpop.f32.mrb[0].mxu0
    %v493 = vadd.f32 0.0, %v492
    %v494 = vpop.f32.mrb[0].mxu0
    %v495 = vadd.f32 0.0, %v494
    %v496 = vpop.f32.mrb[0].mxu0
    %v497 = vadd.f32 0.0, %v496
    %498 = vmatprep.mubr.bf16.mxu0 0
    %499 = vmatmul.mubr.bf16.gmra.mrb[0].mxu0 %v441
    %v500 = vpop.f32.mrb[0].mxu0
    %v501 = vadd.f32 0.0, %v500
    %v502 = vpop.f32.mrb[0].mxu0
    %v503 = vadd.f32 0.0, %v502
    %v504 = vpop.f32.mrb[0].mxu0
    %v505 = vadd.f32 0.0, %v504
    %v506 = vpop.f32.mrb[0].mxu0
    %v507 = vadd.f32 0.0, %v506
    %508 = vmatprep.mubr.bf16.mxu0 0
    %509 = vmatmul.mubr.bf16.gmra.mrb[0].mxu0 %v444
    %v510 = vpop.f32.mrb[0].mxu0
    %v511 = vadd.f32 0.0, %v510
    %v512 = vpop.f32.mrb[0].mxu0
    %v513 = vadd.f32 0.0, %v512
    %v514 = vpop.f32.mrb[0].mxu0
    %v515 = vpop.f32.mrb[0].mxu0
    %516 = vdwg.mxu0
    %v517 = vcombine.low %v76, %v77
    %v518 = vcombine.low %v84, %v85
    %v520 = vunpack.c.l.s4 1983009808
    %v521 = vunpack.c.0.s8 %v520
    %v522 = vlaneseq
    %v523 = vshrl.u32 %v522, 7
    %v524 = vsub.s32 %v521, %v523
    %v525 = vrot.slane %v517, %v524
    %v527 = vunpack.c.l.s4 1983009808
    %v528 = vunpack.c.0.s8 %v527
    %v529 = vlaneseq
    %v530 = vshrl.u32 %v529, 7
    %v531 = vsub.s32 %v528, %v530
    %v532 = vrot.slane %v518, %v531
    %v533 = vcombine.low %v525, %v532
    %v534 = vcombine.low %v92, %v93
    %v535 = vcombine.low %v100, %v107
    %v537 = vunpack.c.l.s4 1983009808
    %v538 = vunpack.c.0.s8 %v537
    %v539 = vlaneseq
    %v540 = vshrl.u32 %v539, 7
    %v541 = vsub.s32 %v538, %v540
    %v542 = vrot.slane %v534, %v541
    %v544 = vunpack.c.l.s4 1983009808
    %v545 = vunpack.c.0.s8 %v544
    %v546 = vlaneseq
    %v547 = vshrl.u32 %v546, 7
    %v548 = vsub.s32 %v545, %v547
    %v549 = vrot.slane %v535, %v548
    %v550 = vcombine.low %v542, %v549
    %v551 = vcombine.low %v108, %v115
    %v552 = vcombine.low %v116, %v123
    %v554 = vunpack.c.l.s4 1983009808
    %v555 = vunpack.c.0.s8 %v554
    %v556 = vlaneseq
    %v557 = vshrl.u32 %v556, 7
    %v558 = vsub.s32 %v555, %v557
    %v559 = vrot.slane %v551, %v558
    %v561 = vunpack.c.l.s4 1983009808
    %v562 = vunpack.c.0.s8 %v561
    %v563 = vlaneseq
    %v564 = vshrl.u32 %v563, 7
    %v565 = vsub.s32 %v562, %v564
    %v566 = vrot.slane %v552, %v565
    %v567 = vcombine.low %v559, %v566
    %v568 = vcombine.low %v124, %v131
    %v570 = vunpack.c.l.s4 1983009808
    %v571 = vunpack.c.0.s8 %v570
    %v572 = vlaneseq
    %v573 = vshrl.u32 %v572, 7
    %v574 = vsub.s32 %v571, %v573
    %v575 = vrot.slane %v568, %v574
    %v588 = vunpack.c.l.b16 %v132
    %v589 = vunpack.c.h.b16 %v132
    %v590 = vunpack.c.l.b16 %v133
    %v591 = vunpack.c.h.b16 %v133
    %v592 = vunpack.c.l.b16 %v134
    %v593 = vunpack.c.h.b16 %v134
    %v594 = vunpack.c.l.b16 %v135
    %v595 = vunpack.c.h.b16 %v135
    %v596 = vunpack.c.l.b16 %v136
    %v597 = vunpack.c.h.b16 %v136
    %v598 = vunpack.c.l.b16 %v137
    %v599 = vunpack.c.h.b16 %v137
    %v600 = vunpack.c.l.b16 %v138
    %v601 = vunpack.c.h.b16 %v138
    %v602 = vunpack.c.l.b16 %v139
    %v603 = vunpack.c.h.b16 %v139
    %v604 = vunpack.c.l.b16 %v140
    %v605 = vunpack.c.h.b16 %v140
    %v606 = vunpack.c.l.b16 %v141
    %v607 = vunpack.c.h.b16 %v141
    %v608 = vunpack.c.l.b16 %v142
    %v609 = vunpack.c.h.b16 %v142
    %v610 = vunpack.c.l.b16 %v143
    %v611 = vunpack.c.h.b16 %v143
    %v612 = vpack.c.b16 %v590, %v588
    %v613 = vpack.c.b16 %v591, %v589
    %v614 = vpack.c.b16 %v594, %v592
    %v615 = vpack.c.b16 %v595, %v593
    %v616 = vpack.c.b16 %v598, %v596
    %v617 = vpack.c.b16 %v599, %v597
    %v618 = vpack.c.b16 %v602, %v600
    %v619 = vpack.c.b16 %v603, %v601
    %v620 = vpack.c.b16 %v606, %v604
    %v621 = vpack.c.b16 %v607, %v605
    %v622 = vpack.c.b16 %v610, %v608
    %v623 = vpack.c.b16 %v611, %v609
    %v637 = vsel %vm433, %v533, 0
    %v640 = vsel %vm433, %v550, 0
    %v643 = vsel %vm433, %v567, 0
    %v646 = vsel %vm433, %v575, 0
    %648 = vmatprep.subr.bf16.mxu0 %v613
    %649 = vmatpush1.bf16.msra.mxu0 %v612
    %650 = vmatprep.subr.bf16.mxu0 %v615
    %651 = vmatpush1.bf16.msra.mxu0 %v614
    %652 = vmatprep.subr.bf16.mxu0 %v617
    %653 = vmatpush1.bf16.msra.mxu0 %v616
    %654 = vmatprep.subr.bf16.mxu0 %v619
    %655 = vmatpush1.bf16.msra.mxu0 %v618
    %656 = vmatprep.subr.bf16.mxu0 %v621
    %657 = vmatpush1.bf16.msra.mxu0 %v620
    %658 = vmatprep.subr.bf16.mxu0 %v623
    %659 = vmatpush1.bf16.msra.mxu0 %v622
    %660 = vmatprep.subr.bf16.mxu0 0
    %661 = vmatpush1.bf16.msra.mxu0 0
    %662 = vmatprep.subr.bf16.mxu0 0
    %663 = vmatpush1.bf16.msra.mxu0 0
    %664 = vmatprep.subr.bf16.mxu0 0
    %665 = vmatpush1.bf16.msra.mxu0 0
    %666 = vmatprep.subr.bf16.mxu0 0
    %667 = vmatpush1.bf16.msra.mxu0 0
    %668 = vmatprep.subr.bf16.mxu0 0
    %669 = vmatpush1.bf16.msra.mxu0 0
    %670 = vmatprep.subr.bf16.mxu0 0
    %671 = vmatpush1.bf16.msra.mxu0 0
    %672 = vmatprep.subr.bf16.mxu0 0
    %673 = vmatpush1.bf16.msra.mxu0 0
    %674 = vmatprep.subr.bf16.mxu0 0
    %675 = vmatpush1.bf16.msra.mxu0 0
    %676 = vmatprep.subr.bf16.mxu0 0
    %677 = vmatpush1.bf16.msra.mxu0 0
    %678 = vmatprep.subr.bf16.mxu0 0
    %679 = vmatpush1.bf16.msra.mxu0 0
    %680 = vmatprep.mubr.bf16.mxu0 0
    %681 = vmatmul.mubr.bf16.gmra.mrb[0].mxu0 %v637
    %v682 = vpop.f32.mrb[0].mxu0
    %v683 = vadd.f32 %v481, %v682
    %v684 = vpop.f32.mrb[0].mxu0
    %v685 = vadd.f32 %v483, %v684
    %v686 = vpop.f32.mrb[0].mxu0
    %v687 = vadd.f32 %v485, %v686
    %v688 = vpop.f32.mrb[0].mxu0
    %v689 = vadd.f32 %v487, %v688
    %690 = vmatprep.mubr.bf16.mxu0 0
    %691 = vmatmul.mubr.bf16.gmra.mrb[0].mxu0 %v640
    %v692 = vpop.f32.mrb[0].mxu0
    %v693 = vadd.f32 %v491, %v692
    %v694 = vpop.f32.mrb[0].mxu0
    %v695 = vadd.f32 %v493, %v694
    %v696 = vpop.f32.mrb[0].mxu0
    %v697 = vadd.f32 %v495, %v696
    %v698 = vpop.f32.mrb[0].mxu0
    %v699 = vadd.f32 %v497, %v698
    %700 = vmatprep.mubr.bf16.mxu0 0
    %701 = vmatmul.mubr.bf16.gmra.mrb[0].mxu0 %v643
    %v702 = vpop.f32.mrb[0].mxu0
    %v703 = vadd.f32 %v501, %v702
    %v704 = vpop.f32.mrb[0].mxu0
    %v705 = vadd.f32 %v503, %v704
    %v706 = vpop.f32.mrb[0].mxu0
    %v707 = vadd.f32 %v505, %v706
    %v708 = vpop.f32.mrb[0].mxu0
    %v709 = vadd.f32 %v507, %v708
    %710 = vmatprep.mubr.bf16.mxu0 0
    %711 = vmatmul.mubr.bf16.gmra.mrb[0].mxu0 %v646
    %v712 = vpop.f32.mrb[0].mxu0
    %v713 = vadd.f32 %v511, %v712
    %v714 = vpop.f32.mrb[0].mxu0
    %v715 = vadd.f32 %v513, %v714
    %v716 = vpop.f32.mrb[0].mxu0
    %v717 = vpop.f32.mrb[0].mxu0
    %718 = vdwg.mxu0
    %vm719 = vcmask 1040384
    %vm720 = vcmask 1042434
    %vm721 = vmor %vm719, %vm720
    %vm722 = vcmask 1044484
    %vm723 = vmor %vm721, %vm722
    %vm724 = vcmask 1046534
    %vm725 = vmor %vm723, %vm724
    %v726 = vrot.slane %v76, 7
    %v727 = vrot.slane %v726, 2
    %v728 = vrot.slane %v77, 7
    %v729 = vsel %vm725, %v727, %v728
    %v730 = vrot.slane %v728, 2
    %v731 = vrot.slane %v84, 7
    %v732 = vsel %vm725, %v730, %v731
    %v733 = vrot.slane %v731, 2
    %v734 = vrot.slane %v85, 7
    %v735 = vsel %vm725, %v733, %v734
    %v736 = vrot.slane %v734, 2
    %v737 = vrot.slane %v92, 7
    %v738 = vsel %vm725, %v736, %v737
    %v739 = vrot.slane %v737, 2
    %v740 = vrot.slane %v93, 7
    %v741 = vsel %vm725, %v739, %v740
    %v742 = vrot.slane %v740, 2
    %v743 = vrot.slane %v100, 7
    %v744 = vsel %vm725, %v742, %v743
    %v745 = vrot.slane %v743, 2
    %v746 = vrot.slane %v144, 7
    %v747 = vsel %vm725, %v745, %v746
    %v748 = vrot.slane %v107, 7
    %v749 = vrot.slane %v748, 2
    %v750 = vrot.slane %v108, 7
    %v751 = vsel %vm725, %v749, %v750
    %v752 = vrot.slane %v750, 2
    %v753 = vrot.slane %v115, 7
    %v754 = vsel %vm725, %v752, %v753
    %v755 = vrot.slane %v753, 2
    %v756 = vrot.slane %v116, 7
    %v757 = vsel %vm725, %v755, %v756
    %v758 = vrot.slane %v756, 2
    %v759 = vrot.slane %v123, 7
    %v760 = vsel %vm725, %v758, %v759
    %v761 = vrot.slane %v759, 2
    %v762 = vrot.slane %v124, 7
    %v763 = vsel %vm725, %v761, %v762
    %v764 = vrot.slane %v762, 2
    %v765 = vrot.slane %v131, 7
    %v766 = vsel %vm725, %v764, %v765
    %v767 = vrot.slane %v765, 2
    %v768 = vrot.slane %v145, 7
    %v769 = vsel %vm725, %v767, %v768
    %s770 = scalar_lea.vmem [#allocation2], 192
    %v771 = vld [vmem:[%s770] sm:$0xff]
    %v772 = vld [vmem:[%s770 + $0x8] sm:$0xff]
    %v773 = vld [vmem:[%s770 + $0x10] sm:$0xff]
    %v774 = vld [vmem:[%s770 + $0x18] sm:$0xff]
    %v775 = vld [vmem:[%s770 + $0x20] sm:$0xff]
    %v776 = vld [vmem:[%s770 + $0x28] sm:$0xff]
    %v777 = vld [vmem:[%s770 + $0x30] sm:$0xff]
    %v778 = vld [vmem:[%s770 + $0x38] sm:$0xff]
    %v779 = vld [vmem:[%s770 + $0x40] sm:$0xff]
    %v780 = vld [vmem:[%s770 + $0x48] sm:$0xff]
    %v781 = vld [vmem:[%s770 + $0x50] sm:$0xff]
    %v782 = vld [vmem:[%s770 + $0x58] sm:$0xff]
    %v783 = vcombine.low %v729, %v732
    %v784 = vcombine.low %v735, %v738
    %v786 = vunpack.c.l.s4 1983009808
    %v787 = vunpack.c.0.s8 %v786
    %v788 = vlaneseq
    %v789 = vshrl.u32 %v788, 7
    %v790 = vsub.s32 %v787, %v789
    %v791 = vrot.slane %v783, %v790
    %v793 = vunpack.c.l.s4 1983009808
    %v794 = vunpack.c.0.s8 %v793
    %v795 = vlaneseq
    %v796 = vshrl.u32 %v795, 7
    %v797 = vsub.s32 %v794, %v796
    %v798 = vrot.slane %v784, %v797
    %v799 = vcombine.low %v791, %v798
    %v800 = vcombine.low %v741, %v744
    %v801 = vcombine.low %v747, %v751
    %v803 = vunpack.c.l.s4 1983009808
    %v804 = vunpack.c.0.s8 %v803
    %v805 = vlaneseq
    %v806 = vshrl.u32 %v805, 7
    %v807 = vsub.s32 %v804, %v806
    %v808 = vrot.slane %v800, %v807
    %v810 = vunpack.c.l.s4 1983009808
    %v811 = vunpack.c.0.s8 %v810
    %v812 = vlaneseq
    %v813 = vshrl.u32 %v812, 7
    %v814 = vsub.s32 %v811, %v813
    %v815 = vrot.slane %v801, %v814
    %v816 = vcombine.low %v808, %v815
    %v817 = vcombine.low %v754, %v757
    %v818 = vcombine.low %v760, %v763
    %v820 = vunpack.c.l.s4 1983009808
    %v821 = vunpack.c.0.s8 %v820
    %v822 = vlaneseq
    %v823 = vshrl.u32 %v822, 7
    %v824 = vsub.s32 %v821, %v823
    %v825 = vrot.slane %v817, %v824
    %v827 = vunpack.c.l.s4 1983009808
    %v828 = vunpack.c.0.s8 %v827
    %v829 = vlaneseq
    %v830 = vshrl.u32 %v829, 7
    %v831 = vsub.s32 %v828, %v830
    %v832 = vrot.slane %v818, %v831
    %v833 = vcombine.low %v825, %v832
    %v834 = vcombine.low %v766, %v769
    %v836 = vunpack.c.l.s4 1983009808
    %v837 = vunpack.c.0.s8 %v836
    %v838 = vlaneseq
    %v839 = vshrl.u32 %v838, 7
    %v840 = vsub.s32 %v837, %v839
    %v841 = vrot.slane %v834, %v840
    %v854 = vunpack.c.l.b16 %v771
    %v855 = vunpack.c.h.b16 %v771
    %v856 = vunpack.c.l.b16 %v772
    %v857 = vunpack.c.h.b16 %v772
    %v858 = vunpack.c.l.b16 %v773
    %v859 = vunpack.c.h.b16 %v773
    %v860 = vunpack.c.l.b16 %v774
    %v861 = vunpack.c.h.b16 %v774
    %v862 = vunpack.c.l.b16 %v775
    %v863 = vunpack.c.h.b16 %v775
    %v864 = vunpack.c.l.b16 %v776
    %v865 = vunpack.c.h.b16 %v776
    %v866 = vunpack.c.l.b16 %v777
    %v867 = vunpack.c.h.b16 %v777
    %v868 = vunpack.c.l.b16 %v778
    %v869 = vunpack.c.h.b16 %v778
    %v870 = vunpack.c.l.b16 %v779
    %v871 = vunpack.c.h.b16 %v779
    %v872 = vunpack.c.l.b16 %v780
    %v873 = vunpack.c.h.b16 %v780
    %v874 = vunpack.c.l.b16 %v781
    %v875 = vunpack.c.h.b16 %v781
    %v876 = vunpack.c.l.b16 %v782
    %v877 = vunpack.c.h.b16 %v782
    %v878 = vpack.c.b16 %v856, %v854
    %v879 = vpack.c.b16 %v857, %v855
    %v880 = vpack.c.b16 %v860, %v858
    %v881 = vpack.c.b16 %v861, %v859
    %v882 = vpack.c.b16 %v864, %v862
    %v883 = vpack.c.b16 %v865, %v863
    %v884 = vpack.c.b16 %v868, %v866
    %v885 = vpack.c.b16 %v869, %v867
    %v886 = vpack.c.b16 %v872, %v870
    %v887 = vpack.c.b16 %v873, %v871
    %v888 = vpack.c.b16 %v876, %v874
    %v889 = vpack.c.b16 %v877, %v875
    %v903 = vsel %vm433, %v799, 0
    %v906 = vsel %vm433, %v816, 0
    %v909 = vsel %vm433, %v833, 0
    %v912 = vsel %vm433, %v841, 0
    %914 = vmatprep.subr.bf16.mxu0 %v879
    %915 = vmatpush1.bf16.msra.mxu0 %v878
    %916 = vmatprep.subr.bf16.mxu0 %v881
    %917 = vmatpush1.bf16.msra.mxu0 %v880
    %918 = vmatprep.subr.bf16.mxu0 %v883
    %919 = vmatpush1.bf16.msra.mxu0 %v882
    %920 = vmatprep.subr.bf16.mxu0 %v885
    %921 = vmatpush1.bf16.msra.mxu0 %v884
    %922 = vmatprep.subr.bf16.mxu0 %v887
    %923 = vmatpush1.bf16.msra.mxu0 %v886
    %924 = vmatprep.subr.bf16.mxu0 %v889
    %925 = vmatpush1.bf16.msra.mxu0 %v888
    %926 = vmatprep.subr.bf16.mxu0 0
    %927 = vmatpush1.bf16.msra.mxu0 0
    %928 = vmatprep.subr.bf16.mxu0 0
    %929 = vmatpush1.bf16.msra.mxu0 0
    %930 = vmatprep.subr.bf16.mxu0 0
    %931 = vmatpush1.bf16.msra.mxu0 0
    %932 = vmatprep.subr.bf16.mxu0 0
    %933 = vmatpush1.bf16.msra.mxu0 0
    %934 = vmatprep.subr.bf16.mxu0 0
    %935 = vmatpush1.bf16.msra.mxu0 0
    %936 = vmatprep.subr.bf16.mxu0 0
    %937 = vmatpush1.bf16.msra.mxu0 0
    %938 = vmatprep.subr.bf16.mxu0 0
    %939 = vmatpush1.bf16.msra.mxu0 0
    %940 = vmatprep.subr.bf16.mxu0 0
    %941 = vmatpush1.bf16.msra.mxu0 0
    %942 = vmatprep.subr.bf16.mxu0 0
    %943 = vmatpush1.bf16.msra.mxu0 0
    %944 = vmatprep.subr.bf16.mxu0 0
    %945 = vmatpush1.bf16.msra.mxu0 0
    %946 = vmatprep.mubr.bf16.mxu0 0
    %947 = vmatmul.mubr.bf16.gmra.mrb[0].mxu0 %v903
    %v948 = vpop.f32.mrb[0].mxu0
    %v949 = vadd.f32 0.0, %v948
    %v950 = vpop.f32.mrb[0].mxu0
    %v951 = vadd.f32 0.0, %v950
    %v952 = vpop.f32.mrb[0].mxu0
    %v953 = vadd.f32 0.0, %v952
    %v954 = vpop.f32.mrb[0].mxu0
    %v955 = vadd.f32 0.0, %v954
    %956 = vmatprep.mubr.bf16.mxu0 0
    %957 = vmatmul.mubr.bf16.gmra.mrb[0].mxu0 %v906
    %v958 = vpop.f32.mrb[0].mxu0
    %v959 = vadd.f32 0.0, %v958
    %v960 = vpop.f32.mrb[0].mxu0
    %v961 = vadd.f32 0.0, %v960
    %v962 = vpop.f32.mrb[0].mxu0
    %v963 = vadd.f32 0.0, %v962
    %v964 = vpop.f32.mrb[0].mxu0
    %v965 = vadd.f32 0.0, %v964
    %966 = vmatprep.mubr.bf16.mxu0 0
    %967 = vmatmul.mubr.bf16.gmra.mrb[0].mxu0 %v909
    %v968 = vpop.f32.mrb[0].mxu0
    %v969 = vadd.f32 0.0, %v968
    %v970 = vpop.f32.mrb[0].mxu0
    %v971 = vadd.f32 0.0, %v970
    %v972 = vpop.f32.mrb[0].mxu0
    %v973 = vadd.f32 0.0, %v972
    %v974 = vpop.f32.mrb[0].mxu0
    %v975 = vadd.f32 0.0, %v974
    %976 = vmatprep.mubr.bf16.mxu0 0
    %977 = vmatmul.mubr.bf16.gmra.mrb[0].mxu0 %v912
    %v978 = vpop.f32.mrb[0].mxu0
    %v979 = vadd.f32 0.0, %v978
    %v980 = vpop.f32.mrb[0].mxu0
    %v981 = vadd.f32 0.0, %v980
    %v982 = vpop.f32.mrb[0].mxu0
    %v983 = vpop.f32.mrb[0].mxu0
    %984 = vdwg.mxu0
    %v985 = vadd.f32 %v683, %v949
    %v986 = vadd.f32 %v685, %v951
    %v987 = vadd.f32 %v687, %v953
    %v988 = vadd.f32 %v689, %v955
    %v989 = vadd.f32 %v693, %v959
    %v990 = vadd.f32 %v695, %v961
    %v991 = vadd.f32 %v697, %v963
    %v992 = vadd.f32 %v699, %v965
    %v993 = vadd.f32 %v703, %v969
    %v994 = vadd.f32 %v705, %v971
    %v995 = vadd.f32 %v707, %v973
    %v996 = vadd.f32 %v709, %v975
    %v997 = vadd.f32 %v713, %v979
    %v998 = vadd.f32 %v715, %v981
    %vm999 = vsmask.f32 256
    %vm1000 = vsmask.f32 2312
    %vm1001 = vmor %vm999, %vm1000
    %vm1002 = vsmask.f32 4368
    %vm1003 = vmor %vm1001, %vm1002
    %vm1004 = vsmask.f32 6424
    %vm1005 = vmor %vm1003, %vm1004
    %v1006 = vrot.slane %v154, 7
    %v1007 = vrot.slane %v1006, 2
    %v1008 = vrot.slane %v167, 7
    %v1009 = vor.u32 %v1008, %v163
    %v1010 = vsel %vm1005, %v1007, %v1009
    %v1011 = vrot.slane %v1008, 2
    %v1012 = vrot.slane %v177, 7
    %v1013 = vor.u32 %v1012, %v173
    %v1014 = vsel %vm1005, %v1011, %v1013
    %v1015 = vrot.slane %v1012, 2
    %v1016 = vrot.slane %v187, 7
    %v1017 = vor.u32 %v1016, %v183
    %v1018 = vsel %vm1005, %v1015, %v1017
    %v1019 = vrot.slane %v1016, 2
    %v1020 = vrot.slane %v197, 7
    %v1021 = vor.u32 %v1020, %v193
    %v1022 = vsel %vm1005, %v1019, %v1021
    %v1023 = vrot.slane %v1020, 2
    %v1024 = vrot.slane %v207, 7
    %v1025 = vor.u32 %v1024, %v203
    %v1026 = vsel %vm1005, %v1023, %v1025
    %v1027 = vrot.slane %v1024, 2
    %v1028 = vrot.slane %v217, 7
    %v1029 = vor.u32 %v1028, %v213
    %v1030 = vsel %vm1005, %v1027, %v1029
    %v1031 = vrot.slane %v1028, 2
    %v1032 = vshrl.u32 %v144, 16
    %v1034 = vrot.slane %v1032, 7
    %v1035 = vor.u32 %v1034, %v223
    %v1036 = vsel %vm1005, %v1031, %v1035
    %v1037 = vrot.slane %v228, 7
    %v1038 = vrot.slane %v1037, 2
    %v1039 = vrot.slane %v241, 7
    %v1040 = vor.u32 %v1039, %v237
    %v1041 = vsel %vm1005, %v1038, %v1040
    %v1042 = vrot.slane %v1039, 2
    %v1043 = vrot.slane %v251, 7
    %v1044 = vor.u32 %v1043, %v247
    %v1045 = vsel %vm1005, %v1042, %v1044
    %v1046 = vrot.slane %v1043, 2
    %v1047 = vrot.slane %v261, 7
    %v1048 = vor.u32 %v1047, %v257
    %v1049 = vsel %vm1005, %v1046, %v1048
    %v1050 = vrot.slane %v1047, 2
    %v1051 = vrot.slane %v271, 7
    %v1052 = vor.u32 %v1051, %v267
    %v1053 = vsel %vm1005, %v1050, %v1052
    %v1054 = vrot.slane %v1051, 2
    %v1055 = vrot.slane %v281, 7
    %v1056 = vor.u32 %v1055, %v277
    %v1057 = vsel %vm1005, %v1054, %v1056
    %v1058 = vrot.slane %v1055, 2
    %v1059 = vrot.slane %v291, 7
    %v1060 = vor.u32 %v1059, %v287
    %v1061 = vsel %vm1005, %v1058, %v1060
    %v1062 = vrot.slane %v1059, 2
    %v1063 = vshrl.u32 %v145, 16
    %v1065 = vrot.slane %v1063, 7
    %v1066 = vor.u32 %v1065, %v297
    %v1067 = vsel %vm1005, %v1062, %v1066
    %s1068 = scalar_lea.vmem [#allocation2], 288
    %v1069 = vld [vmem:[%s1068] sm:$0xff]
    %v1070 = vld [vmem:[%s1068 + $0x8] sm:$0xff]
    %v1071 = vld [vmem:[%s1068 + $0x10] sm:$0xff]
    %v1072 = vld [vmem:[%s1068 + $0x18] sm:$0xff]
    %v1073 = vld [vmem:[%s1068 + $0x20] sm:$0xff]
    %v1074 = vld [vmem:[%s1068 + $0x28] sm:$0xff]
    %v1075 = vld [vmem:[%s1068 + $0x30] sm:$0xff]
    %v1076 = vld [vmem:[%s1068 + $0x38] sm:$0xff]
    %v1077 = vld [vmem:[%s1068 + $0x40] sm:$0xff]
    %v1078 = vld [vmem:[%s1068 + $0x48] sm:$0xff]
    %v1079 = vld [vmem:[%s1068 + $0x50] sm:$0xff]
    %v1080 = vld [vmem:[%s1068 + $0x58] sm:$0xff]
    %v1081 = vcombine.low %v1010, %v1014
    %v1082 = vcombine.low %v1018, %v1022
    %v1084 = vunpack.c.l.s4 1983009808
    %v1085 = vunpack.c.0.s8 %v1084
    %v1086 = vlaneseq
    %v1087 = vshrl.u32 %v1086, 7
    %v1088 = vsub.s32 %v1085, %v1087
    %v1089 = vrot.slane %v1081, %v1088
    %v1091 = vunpack.c.l.s4 1983009808
    %v1092 = vunpack.c.0.s8 %v1091
    %v1093 = vlaneseq
    %v1094 = vshrl.u32 %v1093, 7
    %v1095 = vsub.s32 %v1092, %v1094
    %v1096 = vrot.slane %v1082, %v1095
    %v1097 = vcombine.low %v1089, %v1096
    %v1098 = vcombine.low %v1026, %v1030
    %v1099 = vcombine.low %v1036, %v1041
    %v1101 = vunpack.c.l.s4 1983009808
    %v1102 = vunpack.c.0.s8 %v1101
    %v1103 = vlaneseq
    %v1104 = vshrl.u32 %v1103, 7
    %v1105 = vsub.s32 %v1102, %v1104
    %v1106 = vrot.slane %v1098, %v1105
    %v1108 = vunpack.c.l.s4 1983009808
    %v1109 = vunpack.c.0.s8 %v1108
    %v1110 = vlaneseq
    %v1111 = vshrl.u32 %v1110, 7
    %v1112 = vsub.s32 %v1109, %v1111
    %v1113 = vrot.slane %v1099, %v1112
    %v1114 = vcombine.low %v1106, %v1113
    %v1115 = vcombine.low %v1045, %v1049
    %v1116 = vcombine.low %v1053, %v1057
    %v1118 = vunpack.c.l.s4 1983009808
    %v1119 = vunpack.c.0.s8 %v1118
    %v1120 = vlaneseq
    %v1121 = vshrl.u32 %v1120, 7
    %v1122 = vsub.s32 %v1119, %v1121
    %v1123 = vrot.slane %v1115, %v1122
    %v1125 = vunpack.c.l.s4 1983009808
    %v1126 = vunpack.c.0.s8 %v1125
    %v1127 = vlaneseq
    %v1128 = vshrl.u32 %v1127, 7
    %v1129 = vsub.s32 %v1126, %v1128
    %v1130 = vrot.slane %v1116, %v1129
    %v1131 = vcombine.low %v1123, %v1130
    %v1132 = vcombine.low %v1061, %v1067
    %v1134 = vunpack.c.l.s4 1983009808
    %v1135 = vunpack.c.0.s8 %v1134
    %v1136 = vlaneseq
    %v1137 = vshrl.u32 %v1136, 7
    %v1138 = vsub.s32 %v1135, %v1137
    %v1139 = vrot.slane %v1132, %v1138
    %v1152 = vunpack.c.l.b16 %v1069
    %v1153 = vunpack.c.h.b16 %v1069
    %v1154 = vunpack.c.l.b16 %v1070
    %v1155 = vunpack.c.h.b16 %v1070
    %v1156 = vunpack.c.l.b16 %v1071
    %v1157 = vunpack.c.h.b16 %v1071
    %v1158 = vunpack.c.l.b16 %v1072
    %v1159 = vunpack.c.h.b16 %v1072
    %v1160 = vunpack.c.l.b16 %v1073
    %v1161 = vunpack.c.h.b16 %v1073
    %v1162 = vunpack.c.l.b16 %v1074
    %v1163 = vunpack.c.h.b16 %v1074
    %v1164 = vunpack.c.l.b16 %v1075
    %v1165 = vunpack.c.h.b16 %v1075
    %v1166 = vunpack.c.l.b16 %v1076
    %v1167 = vunpack.c.h.b16 %v1076
    %v1168 = vunpack.c.l.b16 %v1077
    %v1169 = vunpack.c.h.b16 %v1077
    %v1170 = vunpack.c.l.b16 %v1078
    %v1171 = vunpack.c.h.b16 %v1078
    %v1172 = vunpack.c.l.b16 %v1079
    %v1173 = vunpack.c.h.b16 %v1079
    %v1174 = vunpack.c.l.b16 %v1080
    %v1175 = vunpack.c.h.b16 %v1080
    %v1176 = vpack.c.b16 %v1154, %v1152
    %v1177 = vpack.c.b16 %v1155, %v1153
    %v1178 = vpack.c.b16 %v1158, %v1156
    %v1179 = vpack.c.b16 %v1159, %v1157
    %v1180 = vpack.c.b16 %v1162, %v1160
    %v1181 = vpack.c.b16 %v1163, %v1161
    %v1182 = vpack.c.b16 %v1166, %v1164
    %v1183 = vpack.c.b16 %v1167, %v1165
    %v1184 = vpack.c.b16 %v1170, %v1168
    %v1185 = vpack.c.b16 %v1171, %v1169
    %v1186 = vpack.c.b16 %v1174, %v1172
    %v1187 = vpack.c.b16 %v1175, %v1173
    %v1201 = vsel %vm433, %v1097, 0
    %v1204 = vsel %vm433, %v1114, 0
    %v1207 = vsel %vm433, %v1131, 0
    %v1210 = vsel %vm433, %v1139, 0
    %1212 = vmatprep.subr.bf16.mxu0 %v1177
    %1213 = vmatpush1.bf16.msra.mxu0 %v1176
    %1214 = vmatprep.subr.bf16.mxu0 %v1179
    %1215 = vmatpush1.bf16.msra.mxu0 %v1178
    %1216 = vmatprep.subr.bf16.mxu0 %v1181
    %1217 = vmatpush1.bf16.msra.mxu0 %v1180
    %1218 = vmatprep.subr.bf16.mxu0 %v1183
    %1219 = vmatpush1.bf16.msra.mxu0 %v1182
    %1220 = vmatprep.subr.bf16.mxu0 %v1185
    %1221 = vmatpush1.bf16.msra.mxu0 %v1184
    %1222 = vmatprep.subr.bf16.mxu0 %v1187
    %1223 = vmatpush1.bf16.msra.mxu0 %v1186
    %1224 = vmatprep.subr.bf16.mxu0 0
    %1225 = vmatpush1.bf16.msra.mxu0 0
    %1226 = vmatprep.subr.bf16.mxu0 0
    %1227 = vmatpush1.bf16.msra.mxu0 0
    %1228 = vmatprep.subr.bf16.mxu0 0
    %1229 = vmatpush1.bf16.msra.mxu0 0
    %1230 = vmatprep.subr.bf16.mxu0 0
    %1231 = vmatpush1.bf16.msra.mxu0 0
    %1232 = vmatprep.subr.bf16.mxu0 0
    %1233 = vmatpush1.bf16.msra.mxu0 0
    %1234 = vmatprep.subr.bf16.mxu0 0
    %1235 = vmatpush1.bf16.msra.mxu0 0
    %1236 = vmatprep.subr.bf16.mxu0 0
    %1237 = vmatpush1.bf16.msra.mxu0 0
    %1238 = vmatprep.subr.bf16.mxu0 0
    %1239 = vmatpush1.bf16.msra.mxu0 0
    %1240 = vmatprep.subr.bf16.mxu0 0
    %1241 = vmatpush1.bf16.msra.mxu0 0
    %1242 = vmatprep.subr.bf16.mxu0 0
    %1243 = vmatpush1.bf16.msra.mxu0 0
    %1244 = vmatprep.mubr.bf16.mxu0 0
    %1245 = vmatmul.mubr.bf16.gmra.mrb[0].mxu0 %v1201
    %v1246 = vpop.f32.mrb[0].mxu0
    %v1247 = vadd.f32 0.0, %v1246
    %v1248 = vpop.f32.mrb[0].mxu0
    %v1249 = vadd.f32 0.0, %v1248
    %v1250 = vpop.f32.mrb[0].mxu0
    %v1251 = vadd.f32 0.0, %v1250
    %v1252 = vpop.f32.mrb[0].mxu0
    %v1253 = vadd.f32 0.0, %v1252
    %1254 = vmatprep.mubr.bf16.mxu0 0
    %1255 = vmatmul.mubr.bf16.gmra.mrb[0].mxu0 %v1204
    %v1256 = vpop.f32.mrb[0].mxu0
    %v1257 = vadd.f32 0.0, %v1256
    %v1258 = vpop.f32.mrb[0].mxu0
    %v1259 = vadd.f32 0.0, %v1258
    %v1260 = vpop.f32.mrb[0].mxu0
    %v1261 = vadd.f32 0.0, %v1260
    %v1262 = vpop.f32.mrb[0].mxu0
    %v1263 = vadd.f32 0.0, %v1262
    %1264 = vmatprep.mubr.bf16.mxu0 0
    %1265 = vmatmul.mubr.bf16.gmra.mrb[0].mxu0 %v1207
    %v1266 = vpop.f32.mrb[0].mxu0
    %v1267 = vadd.f32 0.0, %v1266
    %v1268 = vpop.f32.mrb[0].mxu0
    %v1269 = vadd.f32 0.0, %v1268
    %v1270 = vpop.f32.mrb[0].mxu0
    %v1271 = vadd.f32 0.0, %v1270
    %v1272 = vpop.f32.mrb[0].mxu0
    %v1273 = vadd.f32 0.0, %v1272
    %1274 = vmatprep.mubr.bf16.mxu0 0
    %1275 = vmatmul.mubr.bf16.gmra.mrb[0].mxu0 %v1210
    %v1276 = vpop.f32.mrb[0].mxu0
    %v1277 = vadd.f32 0.0, %v1276
    %v1278 = vpop.f32.mrb[0].mxu0
    %v1279 = vadd.f32 0.0, %v1278
    %v1280 = vpop.f32.mrb[0].mxu0
    %v1281 = vpop.f32.mrb[0].mxu0
    %1282 = vdwg.mxu0
    %v1283 = vadd.f32 %v985, %v1247
    %v1284 = vadd.f32 %v986, %v1249
    %v1285 = vadd.f32 %v987, %v1251
    %v1286 = vadd.f32 %v988, %v1253
    %v1287 = vadd.f32 %v989, %v1257
    %v1288 = vadd.f32 %v990, %v1259
    %v1289 = vadd.f32 %v991, %v1261
    %v1290 = vadd.f32 %v992, %v1263
    %v1291 = vadd.f32 %v993, %v1267
    %v1292 = vadd.f32 %v994, %v1269
    %v1293 = vadd.f32 %v995, %v1271
    %v1294 = vadd.f32 %v996, %v1273
    %v1295 = vadd.f32 %v997, %v1277
    %v1296 = vadd.f32 %v998, %v1279
    %s1297 = scalar_lea.vmem [#allocation2], 384
    %v1298 = vld [vmem:[%s1297] sm:$0xff]
    %v1299 = vld [vmem:[%s1297 + $0x8] sm:$0xff]
    %v1300 = vld [vmem:[%s1297 + $0x10] sm:$0xff]
    %v1301 = vld [vmem:[%s1297 + $0x18] sm:$0xff]
    %v1302 = vld [vmem:[%s1297 + $0x20] sm:$0xff]
    %v1303 = vld [vmem:[%s1297 + $0x28] sm:$0xff]
    %v1304 = vld [vmem:[%s1297 + $0x30] sm:$0xff]
    %v1305 = vld [vmem:[%s1297 + $0x38] sm:$0xff]
    %v1306 = vld [vmem:[%s1297 + $0x40] sm:$0xff]
    %v1307 = vld [vmem:[%s1297 + $0x48] sm:$0xff]
    %v1308 = vld [vmem:[%s1297 + $0x50] sm:$0xff]
    %v1309 = vld [vmem:[%s1297 + $0x58] sm:$0xff]
    %v1310 = vcombine.low %v77, %v84
    %v1311 = vcombine.low %v85, %v92
    %v1313 = vunpack.c.l.s4 1983009808
    %v1314 = vunpack.c.0.s8 %v1313
    %v1315 = vlaneseq
    %v1316 = vshrl.u32 %v1315, 7
    %v1317 = vsub.s32 %v1314, %v1316
    %v1318 = vrot.slane %v1310, %v1317
    %v1320 = vunpack.c.l.s4 1983009808
    %v1321 = vunpack.c.0.s8 %v1320
    %v1322 = vlaneseq
    %v1323 = vshrl.u32 %v1322, 7
    %v1324 = vsub.s32 %v1321, %v1323
    %v1325 = vrot.slane %v1311, %v1324
    %v1326 = vcombine.low %v1318, %v1325
    %v1327 = vcombine.low %v93, %v100
    %v1328 = vcombine.low %v144, %v108
    %v1330 = vunpack.c.l.s4 1983009808
    %v1331 = vunpack.c.0.s8 %v1330
    %v1332 = vlaneseq
    %v1333 = vshrl.u32 %v1332, 7
    %v1334 = vsub.s32 %v1331, %v1333
    %v1335 = vrot.slane %v1327, %v1334
    %v1337 = vunpack.c.l.s4 1983009808
    %v1338 = vunpack.c.0.s8 %v1337
    %v1339 = vlaneseq
    %v1340 = vshrl.u32 %v1339, 7
    %v1341 = vsub.s32 %v1338, %v1340
    %v1342 = vrot.slane %v1328, %v1341
    %v1343 = vcombine.low %v1335, %v1342
    %v1344 = vcombine.low %v115, %v116
    %v1345 = vcombine.low %v123, %v124
    %v1347 = vunpack.c.l.s4 1983009808
    %v1348 = vunpack.c.0.s8 %v1347
    %v1349 = vlaneseq
    %v1350 = vshrl.u32 %v1349, 7
    %v1351 = vsub.s32 %v1348, %v1350
    %v1352 = vrot.slane %v1344, %v1351
    %v1354 = vunpack.c.l.s4 1983009808
    %v1355 = vunpack.c.0.s8 %v1354
    %v1356 = vlaneseq
    %v1357 = vshrl.u32 %v1356, 7
    %v1358 = vsub.s32 %v1355, %v1357
    %v1359 = vrot.slane %v1345, %v1358
    %v1360 = vcombine.low %v1352, %v1359
    %v1361 = vcombine.low %v131, %v145
    %v1363 = vunpack.c.l.s4 1983009808
    %v1364 = vunpack.c.0.s8 %v1363
    %v1365 = vlaneseq
    %v1366 = vshrl.u32 %v1365, 7
    %v1367 = vsub.s32 %v1364, %v1366
    %v1368 = vrot.slane %v1361, %v1367
    %v1381 = vunpack.c.l.b16 %v1298
    %v1382 = vunpack.c.h.b16 %v1298
    %v1383 = vunpack.c.l.b16 %v1299
    %v1384 = vunpack.c.h.b16 %v1299
    %v1385 = vunpack.c.l.b16 %v1300
    %v1386 = vunpack.c.h.b16 %v1300
    %v1387 = vunpack.c.l.b16 %v1301
    %v1388 = vunpack.c.h.b16 %v1301
    %v1389 = vunpack.c.l.b16 %v1302
    %v1390 = vunpack.c.h.b16 %v1302
    %v1391 = vunpack.c.l.b16 %v1303
    %v1392 = vunpack.c.h.b16 %v1303
    %v1393 = vunpack.c.l.b16 %v1304
    %v1394 = vunpack.c.h.b16 %v1304
    %v1395 = vunpack.c.l.b16 %v1305
    %v1396 = vunpack.c.h.b16 %v1305
    %v1397 = vunpack.c.l.b16 %v1306
    %v1398 = vunpack.c.h.b16 %v1306
    %v1399 = vunpack.c.l.b16 %v1307
    %v1400 = vunpack.c.h.b16 %v1307
    %v1401 = vunpack.c.l.b16 %v1308
    %v1402 = vunpack.c.h.b16 %v1308
    %v1403 = vunpack.c.l.b16 %v1309
    %v1404 = vunpack.c.h.b16 %v1309
    %v1405 = vpack.c.b16 %v1383, %v1381
    %v1406 = vpack.c.b16 %v1384, %v1382
    %v1407 = vpack.c.b16 %v1387, %v1385
    %v1408 = vpack.c.b16 %v1388, %v1386
    %v1409 = vpack.c.b16 %v1391, %v1389
    %v1410 = vpack.c.b16 %v1392, %v1390
    %v1411 = vpack.c.b16 %v1395, %v1393
    %v1412 = vpack.c.b16 %v1396, %v1394
    %v1413 = vpack.c.b16 %v1399, %v1397
    %v1414 = vpack.c.b16 %v1400, %v1398
    %v1415 = vpack.c.b16 %v1403, %v1401
    %v1416 = vpack.c.b16 %v1404, %v1402
    %v1430 = vsel %vm433, %v1326, 0
    %v1433 = vsel %vm433, %v1343, 0
    %v1436 = vsel %vm433, %v1360, 0
    %v1439 = vsel %vm433, %v1368, 0
    %1441 = vmatprep.subr.bf16.mxu0 %v1406
    %1442 = vmatpush1.bf16.msra.mxu0 %v1405
    %1443 = vmatprep.subr.bf16.mxu0 %v1408
    %1444 = vmatpush1.bf16.msra.mxu0 %v1407
    %1445 = vmatprep.subr.bf16.mxu0 %v1410
    %1446 = vmatpush1.bf16.msra.mxu0 %v1409
    %1447 = vmatprep.subr.bf16.mxu0 %v1412
    %1448 = vmatpush1.bf16.msra.mxu0 %v1411
    %1449 = vmatprep.subr.bf16.mxu0 %v1414
    %1450 = vmatpush1.bf16.msra.mxu0 %v1413
    %1451 = vmatprep.subr.bf16.mxu0 %v1416
    %1452 = vmatpush1.bf16.msra.mxu0 %v1415
    %1453 = vmatprep.subr.bf16.mxu0 0
    %1454 = vmatpush1.bf16.msra.mxu0 0
    %1455 = vmatprep.subr.bf16.mxu0 0
    %1456 = vmatpush1.bf16.msra.mxu0 0
    %1457 = vmatprep.subr.bf16.mxu0 0
    %1458 = vmatpush1.bf16.msra.mxu0 0
    %1459 = vmatprep.subr.bf16.mxu0 0
    %1460 = vmatpush1.bf16.msra.mxu0 0
    %1461 = vmatprep.subr.bf16.mxu0 0
    %1462 = vmatpush1.bf16.msra.mxu0 0
    %1463 = vmatprep.subr.bf16.mxu0 0
    %1464 = vmatpush1.bf16.msra.mxu0 0
    %1465 = vmatprep.subr.bf16.mxu0 0
    %1466 = vmatpush1.bf16.msra.mxu0 0
    %1467 = vmatprep.subr.bf16.mxu0 0
    %1468 = vmatpush1.bf16.msra.mxu0 0
    %1469 = vmatprep.subr.bf16.mxu0 0
    %1470 = vmatpush1.bf16.msra.mxu0 0
    %1471 = vmatprep.subr.bf16.mxu0 0
    %1472 = vmatpush1.bf16.msra.mxu0 0
    %1473 = vmatprep.mubr.bf16.mxu0 0
    %1474 = vmatmul.mubr.bf16.gmra.mrb[0].mxu0 %v1430
    %v1475 = vpop.f32.mrb[0].mxu0
    %v1476 = vadd.f32 0.0, %v1475
    %v1477 = vpop.f32.mrb[0].mxu0
    %v1478 = vadd.f32 0.0, %v1477
    %v1479 = vpop.f32.mrb[0].mxu0
    %v1480 = vadd.f32 0.0, %v1479
    %v1481 = vpop.f32.mrb[0].mxu0
    %v1482 = vadd.f32 0.0, %v1481
    %1483 = vmatprep.mubr.bf16.mxu0 0
    %1484 = vmatmul.mubr.bf16.gmra.mrb[0].mxu0 %v1433
    %v1485 = vpop.f32.mrb[0].mxu0
    %v1486 = vadd.f32 0.0, %v1485
    %v1487 = vpop.f32.mrb[0].mxu0
    %v1488 = vadd.f32 0.0, %v1487
    %v1489 = vpop.f32.mrb[0].mxu0
    %v1490 = vadd.f32 0.0, %v1489
    %v1491 = vpop.f32.mrb[0].mxu0
    %v1492 = vadd.f32 0.0, %v1491
    %1493 = vmatprep.mubr.bf16.mxu0 0
    %1494 = vmatmul.mubr.bf16.gmra.mrb[0].mxu0 %v1436
    %v1495 = vpop.f32.mrb[0].mxu0
    %v1496 = vadd.f32 0.0, %v1495
    %v1497 = vpop.f32.mrb[0].mxu0
    %v1498 = vadd.f32 0.0, %v1497
    %v1499 = vpop.f32.mrb[0].mxu0
    %v1500 = vadd.f32 0.0, %v1499
    %v1501 = vpop.f32.mrb[0].mxu0
    %v1502 = vadd.f32 0.0, %v1501
    %1503 = vmatprep.mubr.bf16.mxu0 0
    %1504 = vmatmul.mubr.bf16.gmra.mrb[0].mxu0 %v1439
    %v1505 = vpop.f32.mrb[0].mxu0
    %v1506 = vadd.f32 0.0, %v1505
    %v1507 = vpop.f32.mrb[0].mxu0
    %v1508 = vadd.f32 0.0, %v1507
    %v1509 = vpop.f32.mrb[0].mxu0
    %v1510 = vpop.f32.mrb[0].mxu0
    %1511 = vdwg.mxu0
    %v1512 = vadd.f32 %v1283, %v1476
    %v1513 = vadd.f32 %v1284, %v1478
    %v1514 = vadd.f32 %v1285, %v1480
    %v1515 = vadd.f32 %v1286, %v1482
    %v1516 = vadd.f32 %v1287, %v1486
    %v1517 = vadd.f32 %v1288, %v1488
    %v1518 = vadd.f32 %v1289, %v1490
    %v1519 = vadd.f32 %v1290, %v1492
    %v1520 = vadd.f32 %v1291, %v1496
    %v1521 = vadd.f32 %v1292, %v1498
    %v1522 = vadd.f32 %v1293, %v1500
    %v1523 = vadd.f32 %v1294, %v1502
    %v1524 = vadd.f32 %v1295, %v1506
    %v1525 = vadd.f32 %v1296, %v1508
    %v1526 = vmax.f32 %v1512, %v1513
    %v1527 = vmax.f32 %v1514, %v1515
    %v1528 = vmax.f32 %v1516, %v1517
    %v1529 = vmax.f32 %v1518, %v1519
    %v1530 = vmax.f32 %v1520, %v1521
    %v1531 = vmax.f32 %v1522, %v1523
    %v1532 = vmax.f32 %v1524, %v1525
    %v1540 = vcombine.high %v1526, %v1526
    %v1542 = vunpack.c.l.s4 1983009808
    %v1543 = vunpack.c.0.s8 %v1542
    %v1544 = vlaneseq
    %v1545 = vshrl.u32 %v1544, 7
    %v1546 = vsub.s32 %v1543, %v1545
    %v1547 = vrot.slane %v1526, %v1546
    %v1549 = vunpack.c.l.s4 1983009808
    %v1550 = vunpack.c.0.s8 %v1549
    %v1551 = vlaneseq
    %v1552 = vshrl.u32 %v1551, 7
    %v1553 = vsub.s32 %v1550, %v1552
    %v1554 = vrot.slane %v1540, %v1553
    %v1555 = vcombine.high %v1547, %v1547
    %v1556 = vcombine.high %v1554, %v1554
    %v1557 = vcombine.high %v1527, %v1527
    %v1559 = vunpack.c.l.s4 1983009808
    %v1560 = vunpack.c.0.s8 %v1559
    %v1561 = vlaneseq
    %v1562 = vshrl.u32 %v1561, 7
    %v1563 = vsub.s32 %v1560, %v1562
    %v1564 = vrot.slane %v1527, %v1563
    %v1566 = vunpack.c.l.s4 1983009808
    %v1567 = vunpack.c.0.s8 %v1566
    %v1568 = vlaneseq
    %v1569 = vshrl.u32 %v1568, 7
    %v1570 = vsub.s32 %v1567, %v1569
    %v1571 = vrot.slane %v1557, %v1570
    %v1572 = vcombine.high %v1564, %v1564
    %v1573 = vcombine.high %v1571, %v1571
    %v1574 = vcombine.high %v1528, %v1528
    %v1576 = vunpack.c.l.s4 1983009808
    %v1577 = vunpack.c.0.s8 %v1576
    %v1578 = vlaneseq
    %v1579 = vshrl.u32 %v1578, 7
    %v1580 = vsub.s32 %v1577, %v1579
    %v1581 = vrot.slane %v1528, %v1580
    %v1583 = vunpack.c.l.s4 1983009808
    %v1584 = vunpack.c.0.s8 %v1583
    %v1585 = vlaneseq
    %v1586 = vshrl.u32 %v1585, 7
    %v1587 = vsub.s32 %v1584, %v1586
    %v1588 = vrot.slane %v1574, %v1587
    %v1589 = vcombine.high %v1581, %v1581
    %v1590 = vcombine.high %v1588, %v1588
    %v1591 = vcombine.high %v1529, %v1529
    %v1593 = vunpack.c.l.s4 1983009808
    %v1594 = vunpack.c.0.s8 %v1593
    %v1595 = vlaneseq
    %v1596 = vshrl.u32 %v1595, 7
    %v1597 = vsub.s32 %v1594, %v1596
    %v1598 = vrot.slane %v1529, %v1597
    %v1600 = vunpack.c.l.s4 1983009808
    %v1601 = vunpack.c.0.s8 %v1600
    %v1602 = vlaneseq
    %v1603 = vshrl.u32 %v1602, 7
    %v1604 = vsub.s32 %v1601, %v1603
    %v1605 = vrot.slane %v1591, %v1604
    %v1606 = vcombine.high %v1598, %v1598
    %v1607 = vcombine.high %v1605, %v1605
    %v1608 = vcombine.high %v1530, %v1530
    %v1610 = vunpack.c.l.s4 1983009808
    %v1611 = vunpack.c.0.s8 %v1610
    %v1612 = vlaneseq
    %v1613 = vshrl.u32 %v1612, 7
    %v1614 = vsub.s32 %v1611, %v1613
    %v1615 = vrot.slane %v1530, %v1614
    %v1617 = vunpack.c.l.s4 1983009808
    %v1618 = vunpack.c.0.s8 %v1617
    %v1619 = vlaneseq
    %v1620 = vshrl.u32 %v1619, 7
    %v1621 = vsub.s32 %v1618, %v1620
    %v1622 = vrot.slane %v1608, %v1621
    %v1623 = vcombine.high %v1615, %v1615
    %v1624 = vcombine.high %v1622, %v1622
    %v1625 = vcombine.high %v1531, %v1531
    %v1627 = vunpack.c.l.s4 1983009808
    %v1628 = vunpack.c.0.s8 %v1627
    %v1629 = vlaneseq
    %v1630 = vshrl.u32 %v1629, 7
    %v1631 = vsub.s32 %v1628, %v1630
    %v1632 = vrot.slane %v1531, %v1631
    %v1634 = vunpack.c.l.s4 1983009808
    %v1635 = vunpack.c.0.s8 %v1634
    %v1636 = vlaneseq
    %v1637 = vshrl.u32 %v1636, 7
    %v1638 = vsub.s32 %v1635, %v1637
    %v1639 = vrot.slane %v1625, %v1638
    %v1640 = vcombine.high %v1632, %v1632
    %v1641 = vcombine.high %v1639, %v1639
    %v1642 = vcombine.high %v1532, %v1532
    %v1644 = vunpack.c.l.s4 1983009808
    %v1645 = vunpack.c.0.s8 %v1644
    %v1646 = vlaneseq
    %v1647 = vshrl.u32 %v1646, 7
    %v1648 = vsub.s32 %v1645, %v1647
    %v1649 = vrot.slane %v1532, %v1648
    %v1651 = vunpack.c.l.s4 1983009808
    %v1652 = vunpack.c.0.s8 %v1651
    %v1653 = vlaneseq
    %v1654 = vshrl.u32 %v1653, 7
    %v1655 = vsub.s32 %v1652, %v1654
    %v1656 = vrot.slane %v1642, %v1655
    %v1657 = vcombine.high %v1649, %v1649
    %v1658 = vcombine.high %v1656, %v1656
    %v1687 = vrot.slane %v1547, 7
    %v1688 = vrot.slane %v1687, 2
    %v1689 = vrot.slane %v1555, 7
    %v1690 = vrot.slane %v1689, 2
    %v1691 = vrot.slane %v1554, 7
    %v1692 = vrot.slane %v1691, 2
    %v1693 = vrot.slane %v1556, 7
    %v1694 = vrot.slane %v1693, 2
    %v1695 = vrot.slane %v1564, 7
    %v1696 = vrot.slane %v1695, 2
    %v1697 = vrot.slane %v1572, 7
    %v1698 = vrot.slane %v1697, 2
    %v1699 = vrot.slane %v1571, 7
    %v1700 = vrot.slane %v1699, 2
    %v1701 = vrot.slane %v1573, 7
    %v1702 = vrot.slane %v1701, 2
    %v1703 = vrot.slane %v1581, 7
    %v1704 = vrot.slane %v1703, 2
    %v1705 = vrot.slane %v1589, 7
    %v1706 = vrot.slane %v1705, 2
    %v1707 = vrot.slane %v1588, 7
    %v1708 = vrot.slane %v1707, 2
    %v1709 = vrot.slane %v1590, 7
    %v1710 = vrot.slane %v1709, 2
    %v1711 = vrot.slane %v1598, 7
    %v1712 = vrot.slane %v1711, 2
    %v1713 = vrot.slane %v1606, 7
    %v1714 = vrot.slane %v1713, 2
    %v1715 = vrot.slane %v1605, 7
    %v1716 = vrot.slane %v1715, 2
    %v1717 = vrot.slane %v1607, 7
    %v1718 = vrot.slane %v1717, 2
    %v1719 = vrot.slane %v1615, 7
    %v1720 = vrot.slane %v1719, 2
    %v1721 = vrot.slane %v1623, 7
    %v1722 = vrot.slane %v1721, 2
    %v1723 = vrot.slane %v1622, 7
    %v1724 = vrot.slane %v1723, 2
    %v1725 = vrot.slane %v1624, 7
    %v1726 = vrot.slane %v1725, 2
    %v1727 = vrot.slane %v1632, 7
    %v1728 = vrot.slane %v1727, 2
    %v1729 = vrot.slane %v1640, 7
    %v1730 = vrot.slane %v1729, 2
    %v1731 = vrot.slane %v1639, 7
    %v1732 = vrot.slane %v1731, 2
    %v1733 = vrot.slane %v1641, 7
    %v1734 = vrot.slane %v1733, 2
    %v1735 = vrot.slane %v1649, 7
    %v1736 = vrot.slane %v1735, 2
    %v1737 = vrot.slane %v1657, 7
    %v1738 = vrot.slane %v1737, 2
    %v1739 = vrot.slane %v1656, 7
    %v1740 = vrot.slane %v1739, 2
    %v1741 = vrot.slane %v1658, 7
    %v1742 = vrot.slane %v1741, 2
    %v1771 = vmax.f32 %v1547, %v1688
    %v1772 = vmax.f32 %v1555, %v1690
    %v1773 = vmax.f32 %v1554, %v1692
    %v1774 = vmax.f32 %v1556, %v1694
    %v1775 = vmax.f32 %v1564, %v1696
    %v1776 = vmax.f32 %v1572, %v1698
    %v1777 = vmax.f32 %v1571, %v1700
    %v1778 = vmax.f32 %v1573, %v1702
    %v1779 = vmax.f32 %v1581, %v1704
    %v1780 = vmax.f32 %v1589, %v1706
    %v1781 = vmax.f32 %v1588, %v1708
    %v1782 = vmax.f32 %v1590, %v1710
    %v1783 = vmax.f32 %v1598, %v1712
    %v1784 = vmax.f32 %v1606, %v1714
    %v1785 = vmax.f32 %v1605, %v1716
    %v1786 = vmax.f32 %v1607, %v1718
    %v1787 = vmax.f32 %v1615, %v1720
    %v1788 = vmax.f32 %v1623, %v1722
    %v1789 = vmax.f32 %v1622, %v1724
    %v1790 = vmax.f32 %v1624, %v1726
    %v1791 = vmax.f32 %v1632, %v1728
    %v1792 = vmax.f32 %v1640, %v1730
    %v1793 = vmax.f32 %v1639, %v1732
    %v1794 = vmax.f32 %v1641, %v1734
    %v1795 = vmax.f32 %v1649, %v1736
    %v1796 = vmax.f32 %v1657, %v1738
    %v1797 = vmax.f32 %v1656, %v1740
    %v1798 = vmax.f32 %v1658, %v1742
    %v1799 = vld [vmem:[%s2] sm:$0x1]
    %v1801 = vlaneseq
    %v1802 = vshrl.u32 %v1801, 7
    %v1803 = vsub.s32 0, %v1802
    %v1804 = vrot.slane %v1799, %v1803
    %v1805 = vcombine.high %v1804, %v1804
    %v1807 = vunpack.c.l.s4 1983009808
    %v1808 = vunpack.c.0.s8 %v1807
    %v1809 = vlaneseq
    %v1810 = vshrl.u32 %v1809, 7
    %v1811 = vsub.s32 %v1808, %v1810
    %v1812 = vrot.slane %v1804, %v1811
    %v1814 = vunpack.c.l.s4 1983009808
    %v1815 = vunpack.c.0.s8 %v1814
    %v1816 = vlaneseq
    %v1817 = vshrl.u32 %v1816, 7
    %v1818 = vsub.s32 %v1815, %v1817
    %v1819 = vrot.slane %v1805, %v1818
    %v1820 = vcombine.high %v1812, %v1812
    %v1821 = vcombine.high %v1819, %v1819
    %v1822 = vrot.slane %v1812, 1
    %v1823 = vrot.slane %v1820, 1
    %v1824 = vrot.slane %v1819, 1
    %v1825 = vrot.slane %v1821, 1
    %v1834 = vadd.f32 %v1771, %v1812
    %v1835 = vadd.f32 %v1772, %v1822
    %v1836 = vadd.f32 %v1773, %v1820
    %v1837 = vadd.f32 %v1774, %v1823
    %v1838 = vadd.f32 %v1775, %v1819
    %v1839 = vadd.f32 %v1776, %v1824
    %v1840 = vadd.f32 %v1777, %v1821
    %v1841 = vadd.f32 %v1778, %v1825
    %v1842 = vadd.f32 %v1779, %v1812
    %v1843 = vadd.f32 %v1780, %v1822
    %v1844 = vadd.f32 %v1781, %v1820
    %v1845 = vadd.f32 %v1782, %v1823
    %v1846 = vadd.f32 %v1783, %v1819
    %v1847 = vadd.f32 %v1784, %v1824
    %v1848 = vadd.f32 %v1785, %v1812
    %v1849 = vadd.f32 %v1786, %v1822
    %v1850 = vadd.f32 %v1787, %v1820
    %v1851 = vadd.f32 %v1788, %v1823
    %v1852 = vadd.f32 %v1789, %v1819
    %v1853 = vadd.f32 %v1790, %v1824
    %v1854 = vadd.f32 %v1791, %v1821
    %v1855 = vadd.f32 %v1792, %v1825
    %v1856 = vadd.f32 %v1793, %v1812
    %v1857 = vadd.f32 %v1794, %v1822
    %v1858 = vadd.f32 %v1795, %v1820
    %v1859 = vadd.f32 %v1796, %v1823
    %v1860 = vadd.f32 %v1797, %v1819
    %v1861 = vadd.f32 %v1798, %v1824
    %v1862 = vmax.f32 %v1834, 0.0
    %v1863 = vmax.f32 %v1835, 0.0
    %v1864 = vmax.f32 %v1836, 0.0
    %v1865 = vmax.f32 %v1837, 0.0
    %v1866 = vmax.f32 %v1838, 0.0
    %v1867 = vmax.f32 %v1839, 0.0
    %v1868 = vmax.f32 %v1840, 0.0
    %v1869 = vmax.f32 %v1841, 0.0
    %v1870 = vmax.f32 %v1842, 0.0
    %v1871 = vmax.f32 %v1843, 0.0
    %v1872 = vmax.f32 %v1844, 0.0
    %v1873 = vmax.f32 %v1845, 0.0
    %v1874 = vmax.f32 %v1846, 0.0
    %v1875 = vmax.f32 %v1847, 0.0
    %v1876 = vmax.f32 %v1848, 0.0
    %v1877 = vmax.f32 %v1849, 0.0
    %v1878 = vmax.f32 %v1850, 0.0
    %v1879 = vmax.f32 %v1851, 0.0
    %v1880 = vmax.f32 %v1852, 0.0
    %v1881 = vmax.f32 %v1853, 0.0
    %v1882 = vmax.f32 %v1854, 0.0
    %v1883 = vmax.f32 %v1855, 0.0
    %v1884 = vmax.f32 %v1856, 0.0
    %v1885 = vmax.f32 %v1857, 0.0
    %v1886 = vmax.f32 %v1858, 0.0
    %v1887 = vmax.f32 %v1859, 0.0
    %v1888 = vmax.f32 %v1860, 0.0
    %v1889 = vmax.f32 %v1861, 0.0
    %v1890 = vpack.c.bf16 %v1862, %v1862
    %v1891 = vpack.c.bf16 %v1863, %v1863
    %v1892 = vpack.c.bf16 %v1864, %v1864
    %v1893 = vpack.c.bf16 %v1865, %v1865
    %v1894 = vpack.c.bf16 %v1866, %v1866
    %v1895 = vpack.c.bf16 %v1867, %v1867
    %v1896 = vpack.c.bf16 %v1868, %v1868
    %v1897 = vpack.c.bf16 %v1869, %v1869
    %v1898 = vpack.c.bf16 %v1870, %v1870
    %v1899 = vpack.c.bf16 %v1871, %v1871
    %v1900 = vpack.c.bf16 %v1872, %v1872
    %v1901 = vpack.c.bf16 %v1873, %v1873
    %v1902 = vpack.c.bf16 %v1874, %v1874
    %v1903 = vpack.c.bf16 %v1875, %v1875
    %v1904 = vpack.c.bf16 %v1876, %v1876
    %v1905 = vpack.c.bf16 %v1877, %v1877
    %v1906 = vpack.c.bf16 %v1878, %v1878
    %v1907 = vpack.c.bf16 %v1879, %v1879
    %v1908 = vpack.c.bf16 %v1880, %v1880
    %v1909 = vpack.c.bf16 %v1881, %v1881
    %v1910 = vpack.c.bf16 %v1882, %v1882
    %v1911 = vpack.c.bf16 %v1883, %v1883
    %v1912 = vpack.c.bf16 %v1884, %v1884
    %v1913 = vpack.c.bf16 %v1885, %v1885
    %v1914 = vpack.c.bf16 %v1886, %v1886
    %v1915 = vpack.c.bf16 %v1887, %v1887
    %v1916 = vpack.c.bf16 %v1888, %v1888
    %v1917 = vpack.c.bf16 %v1889, %v1889
    %v1918 = vld [vmem:[%s3] sm:$0xff]
    %v1919 = vld [vmem:[%s3 + $0x8] sm:$0xff]
    %v1920 = vld [vmem:[%s3 + $0x10] sm:$0xff]
    %v1921 = vld [vmem:[%s3 + $0x18] sm:$0xff]
    %v1922 = vld [vmem:[%s3 + $0x20] sm:$0xff]
    %v1923 = vld [vmem:[%s3 + $0x28] sm:$0xff]
    %v1924 = vld [vmem:[%s3 + $0x30] sm:$0xff]
    %v1925 = vld [vmem:[%s3 + $0x38] sm:$0xff]
    %v1926 = vld [vmem:[%s3 + $0x40] sm:$0xff]
    %v1927 = vld [vmem:[%s3 + $0x48] sm:$0xff]
    %v1928 = vld [vmem:[%s3 + $0x50] sm:$0xff]
    %v1929 = vld [vmem:[%s3 + $0x58] sm:$0xff]
    %v1930 = vld [vmem:[%s3 + $0x60] sm:$0xff]
    %v1931 = vld [vmem:[%s3 + $0x68] sm:$0xff]
    %v1932 = vld [vmem:[%s3 + $0x70] sm:$0xff]
    %v1933 = vld [vmem:[%s3 + $0x78] sm:$0xff]
    %s1934 = scalar_lea.vmem %s3, 128
    %v1935 = vld [vmem:[%s1934] sm:$0xff]
    %v1936 = vld [vmem:[%s1934 + $0x8] sm:$0xff]
    %v1937 = vld [vmem:[%s1934 + $0x10] sm:$0xff]
    %v1938 = vld [vmem:[%s1934 + $0x18] sm:$0xff]
    %v1939 = vld [vmem:[%s1934 + $0x20] sm:$0xff]
    %v1940 = vld [vmem:[%s1934 + $0x28] sm:$0xff]
    %v1941 = vld [vmem:[%s1934 + $0x30] sm:$0xff]
    %v1942 = vld [vmem:[%s1934 + $0x38] sm:$0xff]
    %v1943 = vld [vmem:[%s1934 + $0x40] sm:$0xff]
    %v1944 = vld [vmem:[%s1934 + $0x48] sm:$0xff]
    %v1945 = vld [vmem:[%s1934 + $0x50] sm:$0xff]
    %v1946 = vld [vmem:[%s1934 + $0x58] sm:$0xff]
    %v1947 = vld [vmem:[%s1934 + $0x60] sm:$0xff]
    %v1948 = vld [vmem:[%s1934 + $0x68] sm:$0xff]
    %v1949 = vld [vmem:[%s1934 + $0x70] sm:$0xff]
    %v1950 = vld [vmem:[%s1934 + $0x78] sm:$0xff]
    %v1971 = vunpack.c.l.b16 %v1891
    %v1972 = vunpack.c.l.b16 %v1892
    %v1973 = vunpack.c.l.b16 %v1893
    %v1974 = vunpack.c.l.b16 %v1894
    %v1975 = vunpack.c.l.b16 %v1895
    %v1976 = vunpack.c.l.b16 %v1896
    %v1977 = vunpack.c.l.b16 %v1897
    %v1978 = vunpack.c.l.b16 %v1898
    %v1979 = vunpack.c.l.b16 %v1899
    %v1980 = vunpack.c.l.b16 %v1900
    %v1981 = vunpack.c.l.b16 %v1905
    %v1982 = vunpack.c.l.b16 %v1906
    %v1983 = vunpack.c.l.b16 %v1907
    %v1984 = vunpack.c.l.b16 %v1908
    %v1985 = vunpack.c.l.b16 %v1909
    %v1986 = vunpack.c.l.b16 %v1910
    %v1987 = vunpack.c.l.b16 %v1911
    %v1988 = vunpack.c.l.b16 %v1912
    %v1989 = vunpack.c.l.b16 %v1913
    %v1990 = vunpack.c.l.b16 %v1914
    %v1991 = vrot.slane %v1972, 7
    %vm1992 = vcmask 1041409
    %v1993 = vsel %vm1992, %v1991, %v1971
    %v1994 = vrot.slane %v1973, 6
    %vm1995 = vcmask 1042434
    %v1996 = vsel %vm1995, %v1994, %v1993
    %v1997 = vrot.slane %v1974, 5
    %vm1998 = vcmask 1043459
    %v1999 = vsel %vm1998, %v1997, %v1996
    %v2000 = vrot.slane %v1975, 4
    %vm2001 = vcmask 1044484
    %v2002 = vsel %vm2001, %v2000, %v1999
    %v2003 = vrot.slane %v1976, 3
    %vm2004 = vcmask 1045509
    %v2005 = vsel %vm2004, %v2003, %v2002
    %v2006 = vrot.slane %v1977, 2
    %vm2007 = vcmask 1046534
    %v2008 = vsel %vm2007, %v2006, %v2005
    %v2009 = vrot.slane %v1978, 1
    %vm2010 = vcmask 1047559
    %v2011 = vsel %vm2010, %v2009, %v2008
    %v2012 = vrot.slane %v1980, 7
    %v2013 = vsel %vm1992, %v2012, %v1979
    %v2014 = vrot.slane %v1981, 6
    %v2015 = vsel %vm1995, %v2014, %v2013
    %v2016 = vrot.slane %v1982, 5
    %v2017 = vsel %vm1998, %v2016, %v2015
    %v2018 = vrot.slane %v1983, 4
    %v2019 = vsel %vm2001, %v2018, %v2017
    %v2020 = vrot.slane %v1984, 3
    %v2021 = vsel %vm2004, %v2020, %v2019
    %v2022 = vrot.slane %v1985, 2
    %v2023 = vsel %vm2007, %v2022, %v2021
    %v2024 = vrot.slane %v1986, 1
    %v2025 = vsel %vm2010, %v2024, %v2023
    %v2026 = vrot.slane %v1988, 7
    %v2027 = vsel %vm1992, %v2026, %v1987
    %v2028 = vrot.slane %v1989, 6
    %v2029 = vsel %vm1995, %v2028, %v2027
    %v2030 = vrot.slane %v1990, 5
    %v2031 = vsel %vm1998, %v2030, %v2029
    %v2032 = vpack.c.b16 %v2025, %v2011
    %v2033 = vpack.c.b16 %v2031, %v2031
    %v2052 = vunpack.c.l.b16 %v1935
    %v2053 = vunpack.c.h.b16 %v1935
    %v2054 = vunpack.c.l.b16 %v1936
    %v2055 = vunpack.c.h.b16 %v1936
    %v2056 = vunpack.c.l.b16 %v1937
    %v2057 = vunpack.c.h.b16 %v1937
    %v2058 = vunpack.c.l.b16 %v1938
    %v2059 = vunpack.c.h.b16 %v1938
    %v2060 = vunpack.c.l.b16 %v1939
    %v2061 = vunpack.c.h.b16 %v1939
    %v2062 = vunpack.c.l.b16 %v1940
    %v2063 = vunpack.c.h.b16 %v1940
    %v2064 = vunpack.c.l.b16 %v1941
    %v2065 = vunpack.c.h.b16 %v1941
    %v2066 = vunpack.c.l.b16 %v1942
    %v2067 = vunpack.c.h.b16 %v1942
    %v2068 = vunpack.c.l.b16 %v1943
    %v2069 = vunpack.c.h.b16 %v1943
    %v2070 = vunpack.c.l.b16 %v1944
    %v2071 = vunpack.c.h.b16 %v1944
    %v2072 = vunpack.c.l.b16 %v1945
    %v2073 = vunpack.c.h.b16 %v1945
    %v2074 = vunpack.c.l.b16 %v1946
    %v2075 = vunpack.c.h.b16 %v1946
    %v2076 = vunpack.c.l.b16 %v1947
    %v2077 = vunpack.c.h.b16 %v1947
    %v2078 = vunpack.c.l.b16 %v1948
    %v2079 = vunpack.c.h.b16 %v1948
    %v2080 = vunpack.c.l.b16 %v1949
    %v2081 = vunpack.c.h.b16 %v1949
    %v2082 = vunpack.c.l.b16 %v1950
    %v2083 = vunpack.c.h.b16 %v1950
    %v2084 = vpack.c.b16 %v2054, %v2052
    %v2085 = vpack.c.b16 %v2055, %v2053
    %v2086 = vpack.c.b16 %v2058, %v2056
    %v2087 = vpack.c.b16 %v2059, %v2057
    %v2088 = vpack.c.b16 %v2062, %v2060
    %v2089 = vpack.c.b16 %v2063, %v2061
    %v2090 = vpack.c.b16 %v2066, %v2064
    %v2091 = vpack.c.b16 %v2067, %v2065
    %v2092 = vpack.c.b16 %v2070, %v2068
    %v2093 = vpack.c.b16 %v2071, %v2069
    %v2094 = vpack.c.b16 %v2074, %v2072
    %v2095 = vpack.c.b16 %v2075, %v2073
    %v2096 = vpack.c.b16 %v2078, %v2076
    %v2097 = vpack.c.b16 %v2079, %v2077
    %v2098 = vpack.c.b16 %v2082, %v2080
    %v2099 = vpack.c.b16 %v2083, %v2081
    %2116 = vmatprep.subr.bf16.mxu0 %v2085
    %2117 = vmatpush1.bf16.msra.mxu0 %v2084
    %2118 = vmatprep.subr.bf16.mxu0 %v2087
    %2119 = vmatpush1.bf16.msra.mxu0 %v2086
    %2120 = vmatprep.subr.bf16.mxu0 %v2089
    %2121 = vmatpush1.bf16.msra.mxu0 %v2088
    %2122 = vmatprep.subr.bf16.mxu0 %v2091
    %2123 = vmatpush1.bf16.msra.mxu0 %v2090
    %2124 = vmatprep.subr.bf16.mxu0 %v2093
    %2125 = vmatpush1.bf16.msra.mxu0 %v2092
    %2126 = vmatprep.subr.bf16.mxu0 %v2095
    %2127 = vmatpush1.bf16.msra.mxu0 %v2094
    %2128 = vmatprep.subr.bf16.mxu0 %v2097
    %2129 = vmatpush1.bf16.msra.mxu0 %v2096
    %2130 = vmatprep.subr.bf16.mxu0 %v2099
    %2131 = vmatpush1.bf16.msra.mxu0 %v2098
    %2132 = vmatprep.subr.bf16.mxu0 0
    %2133 = vmatpush1.bf16.msra.mxu0 0
    %2134 = vmatprep.subr.bf16.mxu0 0
    %2135 = vmatpush1.bf16.msra.mxu0 0
    %2136 = vmatprep.subr.bf16.mxu0 0
    %2137 = vmatpush1.bf16.msra.mxu0 0
    %2138 = vmatprep.subr.bf16.mxu0 0
    %2139 = vmatpush1.bf16.msra.mxu0 0
    %2140 = vmatprep.subr.bf16.mxu0 0
    %2141 = vmatpush1.bf16.msra.mxu0 0
    %2142 = vmatprep.subr.bf16.mxu0 0
    %2143 = vmatpush1.bf16.msra.mxu0 0
    %2144 = vmatprep.subr.bf16.mxu0 0
    %2145 = vmatpush1.bf16.msra.mxu0 0
    %2146 = vmatprep.subr.bf16.mxu0 0
    %2147 = vmatpush1.bf16.msra.mxu0 0
    %2148 = vmatprep.mubr.bf16.mxu0 0
    %2149 = vmatmul.mubr.bf16.gmra.mrb[0].mxu0 %v2032
    %v2150 = vpop.f32.mrb[0].mxu0
    %v2151 = vadd.f32 0.0, %v2150
    %v2152 = vpop.f32.mrb[0].mxu0
    %v2153 = vadd.f32 0.0, %v2152
    %v2154 = vpop.f32.mrb[0].mxu0
    %v2155 = vadd.f32 0.0, %v2154
    %v2156 = vpop.f32.mrb[0].mxu0
    %v2157 = vadd.f32 0.0, %v2156
    %2158 = vmatprep.mubr.bf16.mxu0 0
    %2159 = vmatmul.mubr.bf16.gmra.mrb[0].mxu0 %v2033
    %v2160 = vpop.f32.mrb[0].mxu0
    %v2161 = vadd.f32 0.0, %v2160
    %v2162 = vpop.f32.mrb[0].mxu0
    %v2163 = vadd.f32 0.0, %v2162
    %v2164 = vpop.f32.mrb[0].mxu0
    %v2165 = vpop.f32.mrb[0].mxu0
    %2166 = vdwg.mxu0
    %v2169 = vunpack.c.l.b16 %v1890
    %v2170 = vunpack.c.l.b16 %v1904
    %v2171 = vrot.slane %v1971, 7
    %v2172 = vsel %vm1992, %v2171, %v2169
    %v2173 = vrot.slane %v1972, 6
    %v2174 = vsel %vm1995, %v2173, %v2172
    %v2175 = vrot.slane %v1973, 5
    %v2176 = vsel %vm1998, %v2175, %v2174
    %v2177 = vrot.slane %v1974, 4
    %v2178 = vsel %vm2001, %v2177, %v2176
    %v2179 = vrot.slane %v1975, 3
    %v2180 = vsel %vm2004, %v2179, %v2178
    %v2181 = vrot.slane %v1976, 2
    %v2182 = vsel %vm2007, %v2181, %v2180
    %v2183 = vrot.slane %v1977, 1
    %v2184 = vsel %vm2010, %v2183, %v2182
    %v2185 = vrot.slane %v1979, 7
    %v2186 = vsel %vm1992, %v2185, %v1978
    %v2187 = vrot.slane %v2170, 6
    %v2188 = vsel %vm1995, %v2187, %v2186
    %v2189 = vrot.slane %v1981, 5
    %v2190 = vsel %vm1998, %v2189, %v2188
    %v2191 = vrot.slane %v1982, 4
    %v2192 = vsel %vm2001, %v2191, %v2190
    %v2193 = vrot.slane %v1983, 3
    %v2194 = vsel %vm2004, %v2193, %v2192
    %v2195 = vrot.slane %v1984, 2
    %v2196 = vsel %vm2007, %v2195, %v2194
    %v2197 = vrot.slane %v1985, 1
    %v2198 = vsel %vm2010, %v2197, %v2196
    %v2199 = vrot.slane %v1987, 7
    %v2200 = vsel %vm1992, %v2199, %v1986
    %v2201 = vrot.slane %v1988, 6
    %v2202 = vsel %vm1995, %v2201, %v2200
    %v2203 = vrot.slane %v1989, 5
    %v2204 = vsel %vm1998, %v2203, %v2202
    %v2205 = vpack.c.b16 %v2198, %v2184
    %v2206 = vpack.c.b16 %v2204, %v2204
    %v2225 = vunpack.c.l.b16 %v1918
    %v2226 = vunpack.c.h.b16 %v1918
    %v2227 = vunpack.c.l.b16 %v1919
    %v2228 = vunpack.c.h.b16 %v1919
    %v2229 = vunpack.c.l.b16 %v1920
    %v2230 = vunpack.c.h.b16 %v1920
    %v2231 = vunpack.c.l.b16 %v1921
    %v2232 = vunpack.c.h.b16 %v1921
    %v2233 = vunpack.c.l.b16 %v1922
    %v2234 = vunpack.c.h.b16 %v1922
    %v2235 = vunpack.c.l.b16 %v1923
    %v2236 = vunpack.c.h.b16 %v1923
    %v2237 = vunpack.c.l.b16 %v1924
    %v2238 = vunpack.c.h.b16 %v1924
    %v2239 = vunpack.c.l.b16 %v1925
    %v2240 = vunpack.c.h.b16 %v1925
    %v2241 = vunpack.c.l.b16 %v1926
    %v2242 = vunpack.c.h.b16 %v1926
    %v2243 = vunpack.c.l.b16 %v1927
    %v2244 = vunpack.c.h.b16 %v1927
    %v2245 = vunpack.c.l.b16 %v1928
    %v2246 = vunpack.c.h.b16 %v1928
    %v2247 = vunpack.c.l.b16 %v1929
    %v2248 = vunpack.c.h.b16 %v1929
    %v2249 = vunpack.c.l.b16 %v1930
    %v2250 = vunpack.c.h.b16 %v1930
    %v2251 = vunpack.c.l.b16 %v1931
    %v2252 = vunpack.c.h.b16 %v1931
    %v2253 = vunpack.c.l.b16 %v1932
    %v2254 = vunpack.c.h.b16 %v1932
    %v2255 = vunpack.c.l.b16 %v1933
    %v2256 = vunpack.c.h.b16 %v1933
    %v2257 = vpack.c.b16 %v2227, %v2225
    %v2258 = vpack.c.b16 %v2228, %v2226
    %v2259 = vpack.c.b16 %v2231, %v2229
    %v2260 = vpack.c.b16 %v2232, %v2230
    %v2261 = vpack.c.b16 %v2235, %v2233
    %v2262 = vpack.c.b16 %v2236, %v2234
    %v2263 = vpack.c.b16 %v2239, %v2237
    %v2264 = vpack.c.b16 %v2240, %v2238
    %v2265 = vpack.c.b16 %v2243, %v2241
    %v2266 = vpack.c.b16 %v2244, %v2242
    %v2267 = vpack.c.b16 %v2247, %v2245
    %v2268 = vpack.c.b16 %v2248, %v2246
    %v2269 = vpack.c.b16 %v2251, %v2249
    %v2270 = vpack.c.b16 %v2252, %v2250
    %v2271 = vpack.c.b16 %v2255, %v2253
    %v2272 = vpack.c.b16 %v2256, %v2254
    %2289 = vmatprep.subr.bf16.mxu0 %v2258
    %2290 = vmatpush1.bf16.msra.mxu0 %v2257
    %2291 = vmatprep.subr.bf16.mxu0 %v2260
    %2292 = vmatpush1.bf16.msra.mxu0 %v2259
    %2293 = vmatprep.subr.bf16.mxu0 %v2262
    %2294 = vmatpush1.bf16.msra.mxu0 %v2261
    %2295 = vmatprep.subr.bf16.mxu0 %v2264
    %2296 = vmatpush1.bf16.msra.mxu0 %v2263
    %2297 = vmatprep.subr.bf16.mxu0 %v2266
    %2298 = vmatpush1.bf16.msra.mxu0 %v2265
    %2299 = vmatprep.subr.bf16.mxu0 %v2268
    %2300 = vmatpush1.bf16.msra.mxu0 %v2267
    %2301 = vmatprep.subr.bf16.mxu0 %v2270
    %2302 = vmatpush1.bf16.msra.mxu0 %v2269
    %2303 = vmatprep.subr.bf16.mxu0 %v2272
    %2304 = vmatpush1.bf16.msra.mxu0 %v2271
    %2305 = vmatprep.subr.bf16.mxu0 0
    %2306 = vmatpush1.bf16.msra.mxu0 0
    %2307 = vmatprep.subr.bf16.mxu0 0
    %2308 = vmatpush1.bf16.msra.mxu0 0
    %2309 = vmatprep.subr.bf16.mxu0 0
    %2310 = vmatpush1.bf16.msra.mxu0 0
    %2311 = vmatprep.subr.bf16.mxu0 0
    %2312 = vmatpush1.bf16.msra.mxu0 0
    %2313 = vmatprep.subr.bf16.mxu0 0
    %2314 = vmatpush1.bf16.msra.mxu0 0
    %2315 = vmatprep.subr.bf16.mxu0 0
    %2316 = vmatpush1.bf16.msra.mxu0 0
    %2317 = vmatprep.subr.bf16.mxu0 0
    %2318 = vmatpush1.bf16.msra.mxu0 0
    %2319 = vmatprep.subr.bf16.mxu0 0
    %2320 = vmatpush1.bf16.msra.mxu0 0
    %2321 = vmatprep.mubr.bf16.mxu0 0
    %2322 = vmatmul.mubr.bf16.gmra.mrb[0].mxu0 %v2205
    %v2323 = vpop.f32.mrb[0].mxu0
    %v2324 = vadd.f32 %v2151, %v2323
    %v2325 = vpop.f32.mrb[0].mxu0
    %v2326 = vadd.f32 %v2153, %v2325
    %v2327 = vpop.f32.mrb[0].mxu0
    %v2328 = vadd.f32 %v2155, %v2327
    %v2329 = vpop.f32.mrb[0].mxu0
    %v2330 = vadd.f32 %v2157, %v2329
    %2331 = vmatprep.mubr.bf16.mxu0 0
    %2332 = vmatmul.mubr.bf16.gmra.mrb[0].mxu0 %v2206
    %v2333 = vpop.f32.mrb[0].mxu0
    %v2334 = vadd.f32 %v2161, %v2333
    %v2335 = vpop.f32.mrb[0].mxu0
    %v2336 = vadd.f32 %v2163, %v2335
    %v2337 = vpop.f32.mrb[0].mxu0
    %v2338 = vpop.f32.mrb[0].mxu0
    %2339 = vdwg.mxu0
    %s2340 = scalar_lea.vmem %s3, 256
    %v2341 = vld [vmem:[%s2340] sm:$0xff]
    %v2342 = vld [vmem:[%s2340 + $0x8] sm:$0xff]
    %v2343 = vld [vmem:[%s2340 + $0x10] sm:$0xff]
    %v2344 = vld [vmem:[%s2340 + $0x18] sm:$0xff]
    %v2345 = vld [vmem:[%s2340 + $0x20] sm:$0xff]
    %v2346 = vld [vmem:[%s2340 + $0x28] sm:$0xff]
    %v2347 = vld [vmem:[%s2340 + $0x30] sm:$0xff]
    %v2348 = vld [vmem:[%s2340 + $0x38] sm:$0xff]
    %v2349 = vld [vmem:[%s2340 + $0x40] sm:$0xff]
    %v2350 = vld [vmem:[%s2340 + $0x48] sm:$0xff]
    %v2351 = vld [vmem:[%s2340 + $0x50] sm:$0xff]
    %v2352 = vld [vmem:[%s2340 + $0x58] sm:$0xff]
    %v2353 = vld [vmem:[%s2340 + $0x60] sm:$0xff]
    %v2354 = vld [vmem:[%s2340 + $0x68] sm:$0xff]
    %v2355 = vld [vmem:[%s2340 + $0x70] sm:$0xff]
    %v2356 = vld [vmem:[%s2340 + $0x78] sm:$0xff]
    %v2359 = vunpack.c.l.b16 %v1901
    %v2360 = vunpack.c.l.b16 %v1915
    %v2361 = vrot.slane %v1973, 7
    %v2362 = vsel %vm1992, %v2361, %v1972
    %v2363 = vrot.slane %v1974, 6
    %v2364 = vsel %vm1995, %v2363, %v2362
    %v2365 = vrot.slane %v1975, 5
    %v2366 = vsel %vm1998, %v2365, %v2364
    %v2367 = vrot.slane %v1976, 4
    %v2368 = vsel %vm2001, %v2367, %v2366
    %v2369 = vrot.slane %v1977, 3
    %v2370 = vsel %vm2004, %v2369, %v2368
    %v2371 = vrot.slane %v1978, 2
    %v2372 = vsel %vm2007, %v2371, %v2370
    %v2373 = vrot.slane %v1979, 1
    %v2374 = vsel %vm2010, %v2373, %v2372
    %v2375 = vrot.slane %v2359, 7
    %v2376 = vsel %vm1992, %v2375, %v1980
    %v2377 = vrot.slane %v1982, 6
    %v2378 = vsel %vm1995, %v2377, %v2376
    %v2379 = vrot.slane %v1983, 5
    %v2380 = vsel %vm1998, %v2379, %v2378
    %v2381 = vrot.slane %v1984, 4
    %v2382 = vsel %vm2001, %v2381, %v2380
    %v2383 = vrot.slane %v1985, 3
    %v2384 = vsel %vm2004, %v2383, %v2382
    %v2385 = vrot.slane %v1986, 2
    %v2386 = vsel %vm2007, %v2385, %v2384
    %v2387 = vrot.slane %v1987, 1
    %v2388 = vsel %vm2010, %v2387, %v2386
    %v2389 = vrot.slane %v1989, 7
    %v2390 = vsel %vm1992, %v2389, %v1988
    %v2391 = vrot.slane %v1990, 6
    %v2392 = vsel %vm1995, %v2391, %v2390
    %v2393 = vrot.slane %v2360, 5
    %v2394 = vsel %vm1998, %v2393, %v2392
    %v2395 = vpack.c.b16 %v2388, %v2374
    %v2396 = vpack.c.b16 %v2394, %v2394
    %v2415 = vunpack.c.l.b16 %v2341
    %v2416 = vunpack.c.h.b16 %v2341
    %v2417 = vunpack.c.l.b16 %v2342
    %v2418 = vunpack.c.h.b16 %v2342
    %v2419 = vunpack.c.l.b16 %v2343
    %v2420 = vunpack.c.h.b16 %v2343
    %v2421 = vunpack.c.l.b16 %v2344
    %v2422 = vunpack.c.h.b16 %v2344
    %v2423 = vunpack.c.l.b16 %v2345
    %v2424 = vunpack.c.h.b16 %v2345
    %v2425 = vunpack.c.l.b16 %v2346
    %v2426 = vunpack.c.h.b16 %v2346
    %v2427 = vunpack.c.l.b16 %v2347
    %v2428 = vunpack.c.h.b16 %v2347
    %v2429 = vunpack.c.l.b16 %v2348
    %v2430 = vunpack.c.h.b16 %v2348
    %v2431 = vunpack.c.l.b16 %v2349
    %v2432 = vunpack.c.h.b16 %v2349
    %v2433 = vunpack.c.l.b16 %v2350
    %v2434 = vunpack.c.h.b16 %v2350
    %v2435 = vunpack.c.l.b16 %v2351
    %v2436 = vunpack.c.h.b16 %v2351
    %v2437 = vunpack.c.l.b16 %v2352
    %v2438 = vunpack.c.h.b16 %v2352
    %v2439 = vunpack.c.l.b16 %v2353
    %v2440 = vunpack.c.h.b16 %v2353
    %v2441 = vunpack.c.l.b16 %v2354
    %v2442 = vunpack.c.h.b16 %v2354
    %v2443 = vunpack.c.l.b16 %v2355
    %v2444 = vunpack.c.h.b16 %v2355
    %v2445 = vunpack.c.l.b16 %v2356
    %v2446 = vunpack.c.h.b16 %v2356
    %v2447 = vpack.c.b16 %v2417, %v2415
    %v2448 = vpack.c.b16 %v2418, %v2416
    %v2449 = vpack.c.b16 %v2421, %v2419
    %v2450 = vpack.c.b16 %v2422, %v2420
    %v2451 = vpack.c.b16 %v2425, %v2423
    %v2452 = vpack.c.b16 %v2426, %v2424
    %v2453 = vpack.c.b16 %v2429, %v2427
    %v2454 = vpack.c.b16 %v2430, %v2428
    %v2455 = vpack.c.b16 %v2433, %v2431
    %v2456 = vpack.c.b16 %v2434, %v2432
    %v2457 = vpack.c.b16 %v2437, %v2435
    %v2458 = vpack.c.b16 %v2438, %v2436
    %v2459 = vpack.c.b16 %v2441, %v2439
    %v2460 = vpack.c.b16 %v2442, %v2440
    %v2461 = vpack.c.b16 %v2445, %v2443
    %v2462 = vpack.c.b16 %v2446, %v2444
    %2479 = vmatprep.subr.bf16.mxu0 %v2448
    %2480 = vmatpush1.bf16.msra.mxu0 %v2447
    %2481 = vmatprep.subr.bf16.mxu0 %v2450
    %2482 = vmatpush1.bf16.msra.mxu0 %v2449
    %2483 = vmatprep.subr.bf16.mxu0 %v2452
    %2484 = vmatpush1.bf16.msra.mxu0 %v2451
    %2485 = vmatprep.subr.bf16.mxu0 %v2454
    %2486 = vmatpush1.bf16.msra.mxu0 %v2453
    %2487 = vmatprep.subr.bf16.mxu0 %v2456
    %2488 = vmatpush1.bf16.msra.mxu0 %v2455
    %2489 = vmatprep.subr.bf16.mxu0 %v2458
    %2490 = vmatpush1.bf16.msra.mxu0 %v2457
    %2491 = vmatprep.subr.bf16.mxu0 %v2460
    %2492 = vmatpush1.bf16.msra.mxu0 %v2459
    %2493 = vmatprep.subr.bf16.mxu0 %v2462
    %2494 = vmatpush1.bf16.msra.mxu0 %v2461
    %2495 = vmatprep.subr.bf16.mxu0 0
    %2496 = vmatpush1.bf16.msra.mxu0 0
    %2497 = vmatprep.subr.bf16.mxu0 0
    %2498 = vmatpush1.bf16.msra.mxu0 0
    %2499 = vmatprep.subr.bf16.mxu0 0
    %2500 = vmatpush1.bf16.msra.mxu0 0
    %2501 = vmatprep.subr.bf16.mxu0 0
    %2502 = vmatpush1.bf16.msra.mxu0 0
    %2503 = vmatprep.subr.bf16.mxu0 0
    %2504 = vmatpush1.bf16.msra.mxu0 0
    %2505 = vmatprep.subr.bf16.mxu0 0
    %2506 = vmatpush1.bf16.msra.mxu0 0
    %2507 = vmatprep.subr.bf16.mxu0 0
    %2508 = vmatpush1.bf16.msra.mxu0 0
    %2509 = vmatprep.subr.bf16.mxu0 0
    %2510 = vmatpush1.bf16.msra.mxu0 0
    %2511 = vmatprep.mubr.bf16.mxu0 0
    %2512 = vmatmul.mubr.bf16.gmra.mrb[0].mxu0 %v2395
    %v2513 = vpop.f32.mrb[0].mxu0
    %v2514 = vadd.f32 0.0, %v2513
    %v2515 = vpop.f32.mrb[0].mxu0
    %v2516 = vadd.f32 0.0, %v2515
    %v2517 = vpop.f32.mrb[0].mxu0
    %v2518 = vadd.f32 0.0, %v2517
    %v2519 = vpop.f32.mrb[0].mxu0
    %v2520 = vadd.f32 0.0, %v2519
    %2521 = vmatprep.mubr.bf16.mxu0 0
    %2522 = vmatmul.mubr.bf16.gmra.mrb[0].mxu0 %v2396
    %v2523 = vpop.f32.mrb[0].mxu0
    %v2524 = vadd.f32 0.0, %v2523
    %v2525 = vpop.f32.mrb[0].mxu0
    %v2526 = vadd.f32 0.0, %v2525
    %v2527 = vpop.f32.mrb[0].mxu0
    %v2528 = vpop.f32.mrb[0].mxu0
    %2529 = vdwg.mxu0
    %v2530 = vadd.f32 %v2324, %v2514
    %v2531 = vadd.f32 %v2326, %v2516
    %v2532 = vadd.f32 %v2328, %v2518
    %v2533 = vadd.f32 %v2330, %v2520
    %v2534 = vadd.f32 %v2334, %v2524
    %v2535 = vadd.f32 %v2336, %v2526
    %s2536 = scalar_lea.vmem %s3, 384
    %v2537 = vld [vmem:[%s2536] sm:$0xff]
    %v2538 = vld [vmem:[%s2536 + $0x8] sm:$0xff]
    %v2539 = vld [vmem:[%s2536 + $0x10] sm:$0xff]
    %v2540 = vld [vmem:[%s2536 + $0x18] sm:$0xff]
    %v2541 = vld [vmem:[%s2536 + $0x20] sm:$0xff]
    %v2542 = vld [vmem:[%s2536 + $0x28] sm:$0xff]
    %v2543 = vld [vmem:[%s2536 + $0x30] sm:$0xff]
    %v2544 = vld [vmem:[%s2536 + $0x38] sm:$0xff]
    %v2545 = vld [vmem:[%s2536 + $0x40] sm:$0xff]
    %v2546 = vld [vmem:[%s2536 + $0x48] sm:$0xff]
    %v2547 = vld [vmem:[%s2536 + $0x50] sm:$0xff]
    %v2548 = vld [vmem:[%s2536 + $0x58] sm:$0xff]
    %v2549 = vld [vmem:[%s2536 + $0x60] sm:$0xff]
    %v2550 = vld [vmem:[%s2536 + $0x68] sm:$0xff]
    %v2551 = vld [vmem:[%s2536 + $0x70] sm:$0xff]
    %v2552 = vld [vmem:[%s2536 + $0x78] sm:$0xff]
    %v2555 = vunpack.c.l.b16 %v1902
    %v2556 = vunpack.c.l.b16 %v1916
    %v2557 = vrot.slane %v1974, 7
    %v2558 = vsel %vm1992, %v2557, %v1973
    %v2559 = vrot.slane %v1975, 6
    %v2560 = vsel %vm1995, %v2559, %v2558
    %v2561 = vrot.slane %v1976, 5
    %v2562 = vsel %vm1998, %v2561, %v2560
    %v2563 = vrot.slane %v1977, 4
    %v2564 = vsel %vm2001, %v2563, %v2562
    %v2565 = vrot.slane %v1978, 3
    %v2566 = vsel %vm2004, %v2565, %v2564
    %v2567 = vrot.slane %v1979, 2
    %v2568 = vsel %vm2007, %v2567, %v2566
    %v2569 = vrot.slane %v1980, 1
    %v2570 = vsel %vm2010, %v2569, %v2568
    %v2571 = vrot.slane %v2555, 7
    %v2572 = vsel %vm1992, %v2571, %v2359
    %v2573 = vrot.slane %v1983, 6
    %v2574 = vsel %vm1995, %v2573, %v2572
    %v2575 = vrot.slane %v1984, 5
    %v2576 = vsel %vm1998, %v2575, %v2574
    %v2577 = vrot.slane %v1985, 4
    %v2578 = vsel %vm2001, %v2577, %v2576
    %v2579 = vrot.slane %v1986, 3
    %v2580 = vsel %vm2004, %v2579, %v2578
    %v2581 = vrot.slane %v1987, 2
    %v2582 = vsel %vm2007, %v2581, %v2580
    %v2583 = vrot.slane %v1988, 1
    %v2584 = vsel %vm2010, %v2583, %v2582
    %v2585 = vrot.slane %v1990, 7
    %v2586 = vsel %vm1992, %v2585, %v1989
    %v2587 = vrot.slane %v2360, 6
    %v2588 = vsel %vm1995, %v2587, %v2586
    %v2589 = vrot.slane %v2556, 5
    %v2590 = vsel %vm1998, %v2589, %v2588
    %v2591 = vpack.c.b16 %v2584, %v2570
    %v2592 = vpack.c.b16 %v2590, %v2590
    %v2611 = vunpack.c.l.b16 %v2537
    %v2612 = vunpack.c.h.b16 %v2537
    %v2613 = vunpack.c.l.b16 %v2538
    %v2614 = vunpack.c.h.b16 %v2538
    %v2615 = vunpack.c.l.b16 %v2539
    %v2616 = vunpack.c.h.b16 %v2539
    %v2617 = vunpack.c.l.b16 %v2540
    %v2618 = vunpack.c.h.b16 %v2540
    %v2619 = vunpack.c.l.b16 %v2541
    %v2620 = vunpack.c.h.b16 %v2541
    %v2621 = vunpack.c.l.b16 %v2542
    %v2622 = vunpack.c.h.b16 %v2542
    %v2623 = vunpack.c.l.b16 %v2543
    %v2624 = vunpack.c.h.b16 %v2543
    %v2625 = vunpack.c.l.b16 %v2544
    %v2626 = vunpack.c.h.b16 %v2544
    %v2627 = vunpack.c.l.b16 %v2545
    %v2628 = vunpack.c.h.b16 %v2545
    %v2629 = vunpack.c.l.b16 %v2546
    %v2630 = vunpack.c.h.b16 %v2546
    %v2631 = vunpack.c.l.b16 %v2547
    %v2632 = vunpack.c.h.b16 %v2547
    %v2633 = vunpack.c.l.b16 %v2548
    %v2634 = vunpack.c.h.b16 %v2548
    %v2635 = vunpack.c.l.b16 %v2549
    %v2636 = vunpack.c.h.b16 %v2549
    %v2637 = vunpack.c.l.b16 %v2550
    %v2638 = vunpack.c.h.b16 %v2550
    %v2639 = vunpack.c.l.b16 %v2551
    %v2640 = vunpack.c.h.b16 %v2551
    %v2641 = vunpack.c.l.b16 %v2552
    %v2642 = vunpack.c.h.b16 %v2552
    %v2643 = vpack.c.b16 %v2613, %v2611
    %v2644 = vpack.c.b16 %v2614, %v2612
    %v2645 = vpack.c.b16 %v2617, %v2615
    %v2646 = vpack.c.b16 %v2618, %v2616
    %v2647 = vpack.c.b16 %v2621, %v2619
    %v2648 = vpack.c.b16 %v2622, %v2620
    %v2649 = vpack.c.b16 %v2625, %v2623
    %v2650 = vpack.c.b16 %v2626, %v2624
    %v2651 = vpack.c.b16 %v2629, %v2627
    %v2652 = vpack.c.b16 %v2630, %v2628
    %v2653 = vpack.c.b16 %v2633, %v2631
    %v2654 = vpack.c.b16 %v2634, %v2632
    %v2655 = vpack.c.b16 %v2637, %v2635
    %v2656 = vpack.c.b16 %v2638, %v2636
    %v2657 = vpack.c.b16 %v2641, %v2639
    %v2658 = vpack.c.b16 %v2642, %v2640
    %2675 = vmatprep.subr.bf16.mxu0 %v2644
    %2676 = vmatpush1.bf16.msra.mxu0 %v2643
    %2677 = vmatprep.subr.bf16.mxu0 %v2646
    %2678 = vmatpush1.bf16.msra.mxu0 %v2645
    %2679 = vmatprep.subr.bf16.mxu0 %v2648
    %2680 = vmatpush1.bf16.msra.mxu0 %v2647
    %2681 = vmatprep.subr.bf16.mxu0 %v2650
    %2682 = vmatpush1.bf16.msra.mxu0 %v2649
    %2683 = vmatprep.subr.bf16.mxu0 %v2652
    %2684 = vmatpush1.bf16.msra.mxu0 %v2651
    %2685 = vmatprep.subr.bf16.mxu0 %v2654
    %2686 = vmatpush1.bf16.msra.mxu0 %v2653
    %2687 = vmatprep.subr.bf16.mxu0 %v2656
    %2688 = vmatpush1.bf16.msra.mxu0 %v2655
    %2689 = vmatprep.subr.bf16.mxu0 %v2658
    %2690 = vmatpush1.bf16.msra.mxu0 %v2657
    %2691 = vmatprep.subr.bf16.mxu0 0
    %2692 = vmatpush1.bf16.msra.mxu0 0
    %2693 = vmatprep.subr.bf16.mxu0 0
    %2694 = vmatpush1.bf16.msra.mxu0 0
    %2695 = vmatprep.subr.bf16.mxu0 0
    %2696 = vmatpush1.bf16.msra.mxu0 0
    %2697 = vmatprep.subr.bf16.mxu0 0
    %2698 = vmatpush1.bf16.msra.mxu0 0
    %2699 = vmatprep.subr.bf16.mxu0 0
    %2700 = vmatpush1.bf16.msra.mxu0 0
    %2701 = vmatprep.subr.bf16.mxu0 0
    %2702 = vmatpush1.bf16.msra.mxu0 0
    %2703 = vmatprep.subr.bf16.mxu0 0
    %2704 = vmatpush1.bf16.msra.mxu0 0
    %2705 = vmatprep.subr.bf16.mxu0 0
    %2706 = vmatpush1.bf16.msra.mxu0 0
    %2707 = vmatprep.mubr.bf16.mxu0 0
    %2708 = vmatmul.mubr.bf16.gmra.mrb[0].mxu0 %v2591
    %v2709 = vpop.f32.mrb[0].mxu0
    %v2710 = vadd.f32 0.0, %v2709
    %v2711 = vpop.f32.mrb[0].mxu0
    %v2712 = vadd.f32 0.0, %v2711
    %v2713 = vpop.f32.mrb[0].mxu0
    %v2714 = vadd.f32 0.0, %v2713
    %v2715 = vpop.f32.mrb[0].mxu0
    %v2716 = vadd.f32 0.0, %v2715
    %2717 = vmatprep.mubr.bf16.mxu0 0
    %2718 = vmatmul.mubr.bf16.gmra.mrb[0].mxu0 %v2592
    %v2719 = vpop.f32.mrb[0].mxu0
    %v2720 = vadd.f32 0.0, %v2719
    %v2721 = vpop.f32.mrb[0].mxu0
    %v2722 = vadd.f32 0.0, %v2721
    %v2723 = vpop.f32.mrb[0].mxu0
    %v2724 = vpop.f32.mrb[0].mxu0
    %2725 = vdwg.mxu0
    %v2726 = vadd.f32 %v2530, %v2710
    %v2727 = vadd.f32 %v2531, %v2712
    %v2728 = vadd.f32 %v2532, %v2714
    %v2729 = vadd.f32 %v2533, %v2716
    %v2730 = vadd.f32 %v2534, %v2720
    %v2731 = vadd.f32 %v2535, %v2722
    %s2732 = scalar_lea.vmem %s3, 512
    %v2733 = vld [vmem:[%s2732] sm:$0xff]
    %v2734 = vld [vmem:[%s2732 + $0x8] sm:$0xff]
    %v2735 = vld [vmem:[%s2732 + $0x10] sm:$0xff]
    %v2736 = vld [vmem:[%s2732 + $0x18] sm:$0xff]
    %v2737 = vld [vmem:[%s2732 + $0x20] sm:$0xff]
    %v2738 = vld [vmem:[%s2732 + $0x28] sm:$0xff]
    %v2739 = vld [vmem:[%s2732 + $0x30] sm:$0xff]
    %v2740 = vld [vmem:[%s2732 + $0x38] sm:$0xff]
    %v2741 = vld [vmem:[%s2732 + $0x40] sm:$0xff]
    %v2742 = vld [vmem:[%s2732 + $0x48] sm:$0xff]
    %v2743 = vld [vmem:[%s2732 + $0x50] sm:$0xff]
    %v2744 = vld [vmem:[%s2732 + $0x58] sm:$0xff]
    %v2745 = vld [vmem:[%s2732 + $0x60] sm:$0xff]
    %v2746 = vld [vmem:[%s2732 + $0x68] sm:$0xff]
    %v2747 = vld [vmem:[%s2732 + $0x70] sm:$0xff]
    %v2748 = vld [vmem:[%s2732 + $0x78] sm:$0xff]
    %v2751 = vunpack.c.l.b16 %v1903
    %v2752 = vunpack.c.l.b16 %v1917
    %v2753 = vrot.slane %v1975, 7
    %v2754 = vsel %vm1992, %v2753, %v1974
    %v2755 = vrot.slane %v1976, 6
    %v2756 = vsel %vm1995, %v2755, %v2754
    %v2757 = vrot.slane %v1977, 5
    %v2758 = vsel %vm1998, %v2757, %v2756
    %v2759 = vrot.slane %v1978, 4
    %v2760 = vsel %vm2001, %v2759, %v2758
    %v2761 = vrot.slane %v1979, 3
    %v2762 = vsel %vm2004, %v2761, %v2760
    %v2763 = vrot.slane %v1980, 2
    %v2764 = vsel %vm2007, %v2763, %v2762
    %v2765 = vrot.slane %v2359, 1
    %v2766 = vsel %vm2010, %v2765, %v2764
    %v2767 = vrot.slane %v2751, 7
    %v2768 = vsel %vm1992, %v2767, %v2555
    %v2769 = vrot.slane %v1984, 6
    %v2770 = vsel %vm1995, %v2769, %v2768
    %v2771 = vrot.slane %v1985, 5
    %v2772 = vsel %vm1998, %v2771, %v2770
    %v2773 = vrot.slane %v1986, 4
    %v2774 = vsel %vm2001, %v2773, %v2772
    %v2775 = vrot.slane %v1987, 3
    %v2776 = vsel %vm2004, %v2775, %v2774
    %v2777 = vrot.slane %v1988, 2
    %v2778 = vsel %vm2007, %v2777, %v2776
    %v2779 = vrot.slane %v1989, 1
    %v2780 = vsel %vm2010, %v2779, %v2778
    %v2781 = vrot.slane %v2360, 7
    %v2782 = vsel %vm1992, %v2781, %v1990
    %v2783 = vrot.slane %v2556, 6
    %v2784 = vsel %vm1995, %v2783, %v2782
    %v2785 = vrot.slane %v2752, 5
    %v2786 = vsel %vm1998, %v2785, %v2784
    %v2787 = vpack.c.b16 %v2780, %v2766
    %v2788 = vpack.c.b16 %v2786, %v2786
    %v2807 = vunpack.c.l.b16 %v2733
    %v2808 = vunpack.c.h.b16 %v2733
    %v2809 = vunpack.c.l.b16 %v2734
    %v2810 = vunpack.c.h.b16 %v2734
    %v2811 = vunpack.c.l.b16 %v2735
    %v2812 = vunpack.c.h.b16 %v2735
    %v2813 = vunpack.c.l.b16 %v2736
    %v2814 = vunpack.c.h.b16 %v2736
    %v2815 = vunpack.c.l.b16 %v2737
    %v2816 = vunpack.c.h.b16 %v2737
    %v2817 = vunpack.c.l.b16 %v2738
    %v2818 = vunpack.c.h.b16 %v2738
    %v2819 = vunpack.c.l.b16 %v2739
    %v2820 = vunpack.c.h.b16 %v2739
    %v2821 = vunpack.c.l.b16 %v2740
    %v2822 = vunpack.c.h.b16 %v2740
    %v2823 = vunpack.c.l.b16 %v2741
    %v2824 = vunpack.c.h.b16 %v2741
    %v2825 = vunpack.c.l.b16 %v2742
    %v2826 = vunpack.c.h.b16 %v2742
    %v2827 = vunpack.c.l.b16 %v2743
    %v2828 = vunpack.c.h.b16 %v2743
    %v2829 = vunpack.c.l.b16 %v2744
    %v2830 = vunpack.c.h.b16 %v2744
    %v2831 = vunpack.c.l.b16 %v2745
    %v2832 = vunpack.c.h.b16 %v2745
    %v2833 = vunpack.c.l.b16 %v2746
    %v2834 = vunpack.c.h.b16 %v2746
    %v2835 = vunpack.c.l.b16 %v2747
    %v2836 = vunpack.c.h.b16 %v2747
    %v2837 = vunpack.c.l.b16 %v2748
    %v2838 = vunpack.c.h.b16 %v2748
    %v2839 = vpack.c.b16 %v2809, %v2807
    %v2840 = vpack.c.b16 %v2810, %v2808
    %v2841 = vpack.c.b16 %v2813, %v2811
    %v2842 = vpack.c.b16 %v2814, %v2812
    %v2843 = vpack.c.b16 %v2817, %v2815
    %v2844 = vpack.c.b16 %v2818, %v2816
    %v2845 = vpack.c.b16 %v2821, %v2819
    %v2846 = vpack.c.b16 %v2822, %v2820
    %v2847 = vpack.c.b16 %v2825, %v2823
    %v2848 = vpack.c.b16 %v2826, %v2824
    %v2849 = vpack.c.b16 %v2829, %v2827
    %v2850 = vpack.c.b16 %v2830, %v2828
    %v2851 = vpack.c.b16 %v2833, %v2831
    %v2852 = vpack.c.b16 %v2834, %v2832
    %v2853 = vpack.c.b16 %v2837, %v2835
    %v2854 = vpack.c.b16 %v2838, %v2836
    %2871 = vmatprep.subr.bf16.mxu0 %v2840
    %2872 = vmatpush1.bf16.msra.mxu0 %v2839
    %2873 = vmatprep.subr.bf16.mxu0 %v2842
    %2874 = vmatpush1.bf16.msra.mxu0 %v2841
    %2875 = vmatprep.subr.bf16.mxu0 %v2844
    %2876 = vmatpush1.bf16.msra.mxu0 %v2843
    %2877 = vmatprep.subr.bf16.mxu0 %v2846
    %2878 = vmatpush1.bf16.msra.mxu0 %v2845
    %2879 = vmatprep.subr.bf16.mxu0 %v2848
    %2880 = vmatpush1.bf16.msra.mxu0 %v2847
    %2881 = vmatprep.subr.bf16.mxu0 %v2850
    %2882 = vmatpush1.bf16.msra.mxu0 %v2849
    %2883 = vmatprep.subr.bf16.mxu0 %v2852
    %2884 = vmatpush1.bf16.msra.mxu0 %v2851
    %2885 = vmatprep.subr.bf16.mxu0 %v2854
    %2886 = vmatpush1.bf16.msra.mxu0 %v2853
    %2887 = vmatprep.subr.bf16.mxu0 0
    %2888 = vmatpush1.bf16.msra.mxu0 0
    %2889 = vmatprep.subr.bf16.mxu0 0
    %2890 = vmatpush1.bf16.msra.mxu0 0
    %2891 = vmatprep.subr.bf16.mxu0 0
    %2892 = vmatpush1.bf16.msra.mxu0 0
    %2893 = vmatprep.subr.bf16.mxu0 0
    %2894 = vmatpush1.bf16.msra.mxu0 0
    %2895 = vmatprep.subr.bf16.mxu0 0
    %2896 = vmatpush1.bf16.msra.mxu0 0
    %2897 = vmatprep.subr.bf16.mxu0 0
    %2898 = vmatpush1.bf16.msra.mxu0 0
    %2899 = vmatprep.subr.bf16.mxu0 0
    %2900 = vmatpush1.bf16.msra.mxu0 0
    %2901 = vmatprep.subr.bf16.mxu0 0
    %2902 = vmatpush1.bf16.msra.mxu0 0
    %2903 = vmatprep.mubr.bf16.mxu0 0
    %2904 = vmatmul.mubr.bf16.gmra.mrb[0].mxu0 %v2787
    %v2905 = vpop.f32.mrb[0].mxu0
    %v2906 = vadd.f32 0.0, %v2905
    %v2907 = vpop.f32.mrb[0].mxu0
    %v2908 = vadd.f32 0.0, %v2907
    %v2909 = vpop.f32.mrb[0].mxu0
    %v2910 = vadd.f32 0.0, %v2909
    %v2911 = vpop.f32.mrb[0].mxu0
    %v2912 = vadd.f32 0.0, %v2911
    %2913 = vmatprep.mubr.bf16.mxu0 0
    %2914 = vmatmul.mubr.bf16.gmra.mrb[0].mxu0 %v2788
    %v2915 = vpop.f32.mrb[0].mxu0
    %v2916 = vadd.f32 0.0, %v2915
    %v2917 = vpop.f32.mrb[0].mxu0
    %v2918 = vadd.f32 0.0, %v2917
    %v2919 = vpop.f32.mrb[0].mxu0
    %v2920 = vpop.f32.mrb[0].mxu0
    %2921 = vdwg.mxu0
    %v2922 = vadd.f32 %v2726, %v2906
    %v2923 = vadd.f32 %v2727, %v2908
    %v2924 = vadd.f32 %v2728, %v2910
    %v2925 = vadd.f32 %v2729, %v2912
    %v2926 = vadd.f32 %v2730, %v2916
    %v2927 = vadd.f32 %v2731, %v2918
    %v2928 = vmax.f32 %v2922, %v2923
    %v2929 = vmax.f32 %v2924, %v2925
    %v2930 = vmax.f32 %v2926, %v2927
    %v2934 = vcombine.high %v2928, %v2928
    %v2936 = vunpack.c.l.s4 1983009808
    %v2937 = vunpack.c.0.s8 %v2936
    %v2938 = vlaneseq
    %v2939 = vshrl.u32 %v2938, 7
    %v2940 = vsub.s32 %v2937, %v2939
    %v2941 = vrot.slane %v2928, %v2940
    %v2943 = vunpack.c.l.s4 1983009808
    %v2944 = vunpack.c.0.s8 %v2943
    %v2945 = vlaneseq
    %v2946 = vshrl.u32 %v2945, 7
    %v2947 = vsub.s32 %v2944, %v2946
    %v2948 = vrot.slane %v2934, %v2947
    %v2949 = vcombine.high %v2941, %v2941
    %v2950 = vcombine.high %v2948, %v2948
    %v2951 = vcombine.high %v2929, %v2929
    %v2953 = vunpack.c.l.s4 1983009808
    %v2954 = vunpack.c.0.s8 %v2953
    %v2955 = vlaneseq
    %v2956 = vshrl.u32 %v2955, 7
    %v2957 = vsub.s32 %v2954, %v2956
    %v2958 = vrot.slane %v2929, %v2957
    %v2960 = vunpack.c.l.s4 1983009808
    %v2961 = vunpack.c.0.s8 %v2960
    %v2962 = vlaneseq
    %v2963 = vshrl.u32 %v2962, 7
    %v2964 = vsub.s32 %v2961, %v2963
    %v2965 = vrot.slane %v2951, %v2964
    %v2966 = vcombine.high %v2958, %v2958
    %v2967 = vcombine.high %v2965, %v2965
    %v2969 = vunpack.c.l.s4 1983009808
    %v2970 = vunpack.c.0.s8 %v2969
    %v2971 = vlaneseq
    %v2972 = vshrl.u32 %v2971, 7
    %v2973 = vsub.s32 %v2970, %v2972
    %v2974 = vrot.slane %v2930, %v2973
    %v2975 = vcombine.high %v2974, %v2974
    %v2986 = vrot.slane %v2941, 7
    %v2987 = vrot.slane %v2986, 2
    %v2988 = vrot.slane %v2949, 7
    %v2989 = vrot.slane %v2988, 2
    %v2990 = vrot.slane %v2948, 7
    %v2991 = vrot.slane %v2990, 2
    %v2992 = vrot.slane %v2950, 7
    %v2993 = vrot.slane %v2992, 2
    %v2994 = vrot.slane %v2958, 7
    %v2995 = vrot.slane %v2994, 2
    %v2996 = vrot.slane %v2966, 7
    %v2997 = vrot.slane %v2996, 2
    %v2998 = vrot.slane %v2965, 7
    %v2999 = vrot.slane %v2998, 2
    %v3000 = vrot.slane %v2967, 7
    %v3001 = vrot.slane %v3000, 2
    %v3002 = vrot.slane %v2974, 7
    %v3003 = vrot.slane %v3002, 2
    %v3004 = vrot.slane %v2975, 7
    %v3005 = vrot.slane %v3004, 2
    %v3016 = vmax.f32 %v2941, %v2987
    %v3017 = vmax.f32 %v2949, %v2989
    %v3018 = vmax.f32 %v2948, %v2991
    %v3019 = vmax.f32 %v2950, %v2993
    %v3020 = vmax.f32 %v2958, %v2995
    %v3021 = vmax.f32 %v2966, %v2997
    %v3022 = vmax.f32 %v2965, %v2999
    %v3023 = vmax.f32 %v2967, %v3001
    %v3024 = vmax.f32 %v2974, %v3003
    %v3025 = vmax.f32 %v2975, %v3005
    %v3026 = vld [vmem:[%s4] sm:$0x1]
    %v3028 = vlaneseq
    %v3029 = vshrl.u32 %v3028, 7
    %v3030 = vsub.s32 0, %v3029
    %v3031 = vrot.slane %v3026, %v3030
    %v3032 = vcombine.high %v3031, %v3031
    %v3034 = vunpack.c.l.s4 1983009808
    %v3035 = vunpack.c.0.s8 %v3034
    %v3036 = vlaneseq
    %v3037 = vshrl.u32 %v3036, 7
    %v3038 = vsub.s32 %v3035, %v3037
    %v3039 = vrot.slane %v3031, %v3038
    %v3041 = vunpack.c.l.s4 1983009808
    %v3042 = vunpack.c.0.s8 %v3041
    %v3043 = vlaneseq
    %v3044 = vshrl.u32 %v3043, 7
    %v3045 = vsub.s32 %v3042, %v3044
    %v3046 = vrot.slane %v3032, %v3045
    %v3047 = vcombine.high %v3039, %v3039
    %v3048 = vrot.slane %v3039, 1
    %v3049 = vrot.slane %v3047, 1
    %v3055 = vadd.f32 %v3016, %v3039
    %v3056 = vadd.f32 %v3017, %v3048
    %v3057 = vadd.f32 %v3018, %v3047
    %v3058 = vadd.f32 %v3019, %v3049
    %v3059 = vadd.f32 %v3020, %v3046
    %v3060 = vadd.f32 %v3021, %v3039
    %v3061 = vadd.f32 %v3022, %v3048
    %v3062 = vadd.f32 %v3023, %v3047
    %v3063 = vadd.f32 %v3024, %v3049
    %v3064 = vadd.f32 %v3025, %v3046
    %v3065 = vmax.f32 %v3055, 0.0
    %v3066 = vmax.f32 %v3056, 0.0
    %v3067 = vmax.f32 %v3057, 0.0
    %v3068 = vmax.f32 %v3058, 0.0
    %v3069 = vmax.f32 %v3059, 0.0
    %v3070 = vmax.f32 %v3060, 0.0
    %v3071 = vmax.f32 %v3061, 0.0
    %v3072 = vmax.f32 %v3062, 0.0
    %v3073 = vmax.f32 %v3063, 0.0
    %v3074 = vmax.f32 %v3064, 0.0
    %v3075 = vpack.c.bf16 %v3065, %v3065
    %v3076 = vpack.c.bf16 %v3066, %v3066
    %v3077 = vpack.c.bf16 %v3067, %v3067
    %v3078 = vpack.c.bf16 %v3068, %v3068
    %v3079 = vpack.c.bf16 %v3069, %v3069
    %v3080 = vpack.c.bf16 %v3070, %v3070
    %v3081 = vpack.c.bf16 %v3071, %v3071
    %v3082 = vpack.c.bf16 %v3072, %v3072
    %v3083 = vpack.c.bf16 %v3073, %v3073
    %v3084 = vpack.c.bf16 %v3074, %v3074
    %v3085 = vld [vmem:[%s5] sm:$0xf]
    %v3086 = vld [vmem:[%s5 + $0x4] sm:$0xf]
    %v3087 = vld [vmem:[%s5 + $0x8] sm:$0xf]
    %v3088 = vld [vmem:[%s5 + $0xc] sm:$0xf]
    %v3089 = vld [vmem:[%s5 + $0x10] sm:$0xf]
    %v3090 = vld [vmem:[%s5 + $0x14] sm:$0xf]
    %v3091 = vld [vmem:[%s5 + $0x18] sm:$0xf]
    %v3092 = vld [vmem:[%s5 + $0x1c] sm:$0xf]
    %v3093 = vld [vmem:[%s5 + $0x20] sm:$0xf]
    %v3094 = vld [vmem:[%s5 + $0x24] sm:$0xf]
    %v3095 = vld [vmem:[%s5 + $0x28] sm:$0xf]
    %v3096 = vld [vmem:[%s5 + $0x2c] sm:$0xf]
    %v3097 = vld [vmem:[%s5 + $0x30] sm:$0xf]
    %v3098 = vld [vmem:[%s5 + $0x34] sm:$0xf]
    %v3099 = vld [vmem:[%s5 + $0x38] sm:$0xf]
    %v3100 = vld [vmem:[%s5 + $0x3c] sm:$0xf]
    %s3101 = scalar_lea.vmem %s5, 64
    %v3102 = vld [vmem:[%s3101] sm:$0xf]
    %v3103 = vld [vmem:[%s3101 + $0x4] sm:$0xf]
    %v3104 = vld [vmem:[%s3101 + $0x8] sm:$0xf]
    %v3105 = vld [vmem:[%s3101 + $0xc] sm:$0xf]
    %v3106 = vld [vmem:[%s3101 + $0x10] sm:$0xf]
    %v3107 = vld [vmem:[%s3101 + $0x14] sm:$0xf]
    %v3108 = vld [vmem:[%s3101 + $0x18] sm:$0xf]
    %v3109 = vld [vmem:[%s3101 + $0x1c] sm:$0xf]
    %v3110 = vld [vmem:[%s3101 + $0x20] sm:$0xf]
    %v3111 = vld [vmem:[%s3101 + $0x24] sm:$0xf]
    %v3112 = vld [vmem:[%s3101 + $0x28] sm:$0xf]
    %v3113 = vld [vmem:[%s3101 + $0x2c] sm:$0xf]
    %v3114 = vld [vmem:[%s3101 + $0x30] sm:$0xf]
    %v3115 = vld [vmem:[%s3101 + $0x34] sm:$0xf]
    %v3116 = vld [vmem:[%s3101 + $0x38] sm:$0xf]
    %v3117 = vld [vmem:[%s3101 + $0x3c] sm:$0xf]
    %v3120 = vunpack.c.l.b16 %v3076
    %v3121 = vunpack.c.l.b16 %v3081
    %v3122 = vrot.slane %v3121, 7
    %v3123 = vsel %vm1992, %v3122, %v3120
    %v3124 = vpack.c.b16 %v3123, %v3123
    %v3142 = vunpack.c.l.b16 %v3102
    %v3143 = vunpack.c.l.b16 %v3103
    %v3144 = vunpack.c.l.b16 %v3104
    %v3145 = vunpack.c.l.b16 %v3105
    %v3146 = vunpack.c.l.b16 %v3106
    %v3147 = vunpack.c.l.b16 %v3107
    %v3148 = vunpack.c.l.b16 %v3108
    %v3149 = vunpack.c.l.b16 %v3109
    %v3150 = vunpack.c.l.b16 %v3110
    %v3151 = vunpack.c.l.b16 %v3111
    %v3152 = vunpack.c.l.b16 %v3112
    %v3153 = vunpack.c.l.b16 %v3113
    %v3154 = vunpack.c.l.b16 %v3114
    %v3155 = vunpack.c.l.b16 %v3115
    %v3156 = vunpack.c.l.b16 %v3116
    %v3157 = vunpack.c.l.b16 %v3117
    %v3158 = vpack.c.b16 %v3143, %v3142
    %v3159 = vpack.c.b16 %v3145, %v3144
    %v3160 = vpack.c.b16 %v3147, %v3146
    %v3161 = vpack.c.b16 %v3149, %v3148
    %v3162 = vpack.c.b16 %v3151, %v3150
    %v3163 = vpack.c.b16 %v3153, %v3152
    %v3164 = vpack.c.b16 %v3155, %v3154
    %v3165 = vpack.c.b16 %v3157, %v3156
    %3174 = vmatprep.subr.bf16.mxu0 0
    %3175 = vmatpush1.bf16.msra.mxu0 %v3158
    %3176 = vmatprep.subr.bf16.mxu0 0
    %3177 = vmatpush1.bf16.msra.mxu0 %v3159
    %3178 = vmatprep.subr.bf16.mxu0 0
    %3179 = vmatpush1.bf16.msra.mxu0 %v3160
    %3180 = vmatprep.subr.bf16.mxu0 0
    %3181 = vmatpush1.bf16.msra.mxu0 %v3161
    %3182 = vmatprep.subr.bf16.mxu0 0
    %3183 = vmatpush1.bf16.msra.mxu0 %v3162
    %3184 = vmatprep.subr.bf16.mxu0 0
    %3185 = vmatpush1.bf16.msra.mxu0 %v3163
    %3186 = vmatprep.subr.bf16.mxu0 0
    %3187 = vmatpush1.bf16.msra.mxu0 %v3164
    %3188 = vmatprep.subr.bf16.mxu0 0
    %3189 = vmatpush1.bf16.msra.mxu0 %v3165
    %3190 = vmatprep.subr.bf16.mxu0 0
    %3191 = vmatpush1.bf16.msra.mxu0 0
    %3192 = vmatprep.subr.bf16.mxu0 0
    %3193 = vmatpush1.bf16.msra.mxu0 0
    %3194 = vmatprep.subr.bf16.mxu0 0
    %3195 = vmatpush1.bf16.msra.mxu0 0
    %3196 = vmatprep.subr.bf16.mxu0 0
    %3197 = vmatpush1.bf16.msra.mxu0 0
    %3198 = vmatprep.subr.bf16.mxu0 0
    %3199 = vmatpush1.bf16.msra.mxu0 0
    %3200 = vmatprep.subr.bf16.mxu0 0
    %3201 = vmatpush1.bf16.msra.mxu0 0
    %3202 = vmatprep.subr.bf16.mxu0 0
    %3203 = vmatpush1.bf16.msra.mxu0 0
    %3204 = vmatprep.subr.bf16.mxu0 0
    %3205 = vmatpush1.bf16.msra.mxu0 0
    %3206 = vmatprep.mubr.bf16.mxu0 0
    %3207 = vmatmul.mubr.bf16.gmra.mrb[0].mxu0 %v3124
    %v3208 = vpop.f32.mrb[0].mxu0
    %v3209 = vadd.f32 0.0, %v3208
    %v3210 = vpop.f32.mrb[0].mxu0
    %v3211 = vpop.f32.mrb[0].mxu0
    %v3212 = vpop.f32.mrb[0].mxu0
    %3213 = vdwg.mxu0
    %v3216 = vunpack.c.l.b16 %v3075
    %v3217 = vunpack.c.l.b16 %v3080
    %v3218 = vrot.slane %v3217, 7
    %v3219 = vsel %vm1992, %v3218, %v3216
    %v3220 = vpack.c.b16 %v3219, %v3219
    %v3238 = vunpack.c.l.b16 %v3085
    %v3239 = vunpack.c.l.b16 %v3086
    %v3240 = vunpack.c.l.b16 %v3087
    %v3241 = vunpack.c.l.b16 %v3088
    %v3242 = vunpack.c.l.b16 %v3089
    %v3243 = vunpack.c.l.b16 %v3090
    %v3244 = vunpack.c.l.b16 %v3091
    %v3245 = vunpack.c.l.b16 %v3092
    %v3246 = vunpack.c.l.b16 %v3093
    %v3247 = vunpack.c.l.b16 %v3094
    %v3248 = vunpack.c.l.b16 %v3095
    %v3249 = vunpack.c.l.b16 %v3096
    %v3250 = vunpack.c.l.b16 %v3097
    %v3251 = vunpack.c.l.b16 %v3098
    %v3252 = vunpack.c.l.b16 %v3099
    %v3253 = vunpack.c.l.b16 %v3100
    %v3254 = vpack.c.b16 %v3239, %v3238
    %v3255 = vpack.c.b16 %v3241, %v3240
    %v3256 = vpack.c.b16 %v3243, %v3242
    %v3257 = vpack.c.b16 %v3245, %v3244
    %v3258 = vpack.c.b16 %v3247, %v3246
    %v3259 = vpack.c.b16 %v3249, %v3248
    %v3260 = vpack.c.b16 %v3251, %v3250
    %v3261 = vpack.c.b16 %v3253, %v3252
    %3270 = vmatprep.subr.bf16.mxu0 0
    %3271 = vmatpush1.bf16.msra.mxu0 %v3254
    %3272 = vmatprep.subr.bf16.mxu0 0
    %3273 = vmatpush1.bf16.msra.mxu0 %v3255
    %3274 = vmatprep.subr.bf16.mxu0 0
    %3275 = vmatpush1.bf16.msra.mxu0 %v3256
    %3276 = vmatprep.subr.bf16.mxu0 0
    %3277 = vmatpush1.bf16.msra.mxu0 %v3257
    %3278 = vmatprep.subr.bf16.mxu0 0
    %3279 = vmatpush1.bf16.msra.mxu0 %v3258
    %3280 = vmatprep.subr.bf16.mxu0 0
    %3281 = vmatpush1.bf16.msra.mxu0 %v3259
    %3282 = vmatprep.subr.bf16.mxu0 0
    %3283 = vmatpush1.bf16.msra.mxu0 %v3260
    %3284 = vmatprep.subr.bf16.mxu0 0
    %3285 = vmatpush1.bf16.msra.mxu0 %v3261
    %3286 = vmatprep.subr.bf16.mxu0 0
    %3287 = vmatpush1.bf16.msra.mxu0 0
    %3288 = vmatprep.subr.bf16.mxu0 0
    %3289 = vmatpush1.bf16.msra.mxu0 0
    %3290 = vmatprep.subr.bf16.mxu0 0
    %3291 = vmatpush1.bf16.msra.mxu0 0
    %3292 = vmatprep.subr.bf16.mxu0 0
    %3293 = vmatpush1.bf16.msra.mxu0 0
    %3294 = vmatprep.subr.bf16.mxu0 0
    %3295 = vmatpush1.bf16.msra.mxu0 0
    %3296 = vmatprep.subr.bf16.mxu0 0
    %3297 = vmatpush1.bf16.msra.mxu0 0
    %3298 = vmatprep.subr.bf16.mxu0 0
    %3299 = vmatpush1.bf16.msra.mxu0 0
    %3300 = vmatprep.subr.bf16.mxu0 0
    %3301 = vmatpush1.bf16.msra.mxu0 0
    %3302 = vmatprep.mubr.bf16.mxu0 0
    %3303 = vmatmul.mubr.bf16.gmra.mrb[0].mxu0 %v3220
    %v3304 = vpop.f32.mrb[0].mxu0
    %v3305 = vadd.f32 %v3209, %v3304
    %v3306 = vpop.f32.mrb[0].mxu0
    %v3307 = vpop.f32.mrb[0].mxu0
    %v3308 = vpop.f32.mrb[0].mxu0
    %3309 = vdwg.mxu0
    %s3310 = scalar_lea.vmem %s5, 128
    %v3311 = vld [vmem:[%s3310] sm:$0xf]
    %v3312 = vld [vmem:[%s3310 + $0x4] sm:$0xf]
    %v3313 = vld [vmem:[%s3310 + $0x8] sm:$0xf]
    %v3314 = vld [vmem:[%s3310 + $0xc] sm:$0xf]
    %v3315 = vld [vmem:[%s3310 + $0x10] sm:$0xf]
    %v3316 = vld [vmem:[%s3310 + $0x14] sm:$0xf]
    %v3317 = vld [vmem:[%s3310 + $0x18] sm:$0xf]
    %v3318 = vld [vmem:[%s3310 + $0x1c] sm:$0xf]
    %v3319 = vld [vmem:[%s3310 + $0x20] sm:$0xf]
    %v3320 = vld [vmem:[%s3310 + $0x24] sm:$0xf]
    %v3321 = vld [vmem:[%s3310 + $0x28] sm:$0xf]
    %v3322 = vld [vmem:[%s3310 + $0x2c] sm:$0xf]
    %v3323 = vld [vmem:[%s3310 + $0x30] sm:$0xf]
    %v3324 = vld [vmem:[%s3310 + $0x34] sm:$0xf]
    %v3325 = vld [vmem:[%s3310 + $0x38] sm:$0xf]
    %v3326 = vld [vmem:[%s3310 + $0x3c] sm:$0xf]
    %v3329 = vunpack.c.l.b16 %v3077
    %v3330 = vunpack.c.l.b16 %v3082
    %v3331 = vrot.slane %v3330, 7
    %v3332 = vsel %vm1992, %v3331, %v3329
    %v3333 = vpack.c.b16 %v3332, %v3332
    %v3351 = vunpack.c.l.b16 %v3311
    %v3352 = vunpack.c.l.b16 %v3312
    %v3353 = vunpack.c.l.b16 %v3313
    %v3354 = vunpack.c.l.b16 %v3314
    %v3355 = vunpack.c.l.b16 %v3315
    %v3356 = vunpack.c.l.b16 %v3316
    %v3357 = vunpack.c.l.b16 %v3317
    %v3358 = vunpack.c.l.b16 %v3318
    %v3359 = vunpack.c.l.b16 %v3319
    %v3360 = vunpack.c.l.b16 %v3320
    %v3361 = vunpack.c.l.b16 %v3321
    %v3362 = vunpack.c.l.b16 %v3322
    %v3363 = vunpack.c.l.b16 %v3323
    %v3364 = vunpack.c.l.b16 %v3324
    %v3365 = vunpack.c.l.b16 %v3325
    %v3366 = vunpack.c.l.b16 %v3326
    %v3367 = vpack.c.b16 %v3352, %v3351
    %v3368 = vpack.c.b16 %v3354, %v3353
    %v3369 = vpack.c.b16 %v3356, %v3355
    %v3370 = vpack.c.b16 %v3358, %v3357
    %v3371 = vpack.c.b16 %v3360, %v3359
    %v3372 = vpack.c.b16 %v3362, %v3361
    %v3373 = vpack.c.b16 %v3364, %v3363
    %v3374 = vpack.c.b16 %v3366, %v3365
    %3383 = vmatprep.subr.bf16.mxu0 0
    %3384 = vmatpush1.bf16.msra.mxu0 %v3367
    %3385 = vmatprep.subr.bf16.mxu0 0
    %3386 = vmatpush1.bf16.msra.mxu0 %v3368
    %3387 = vmatprep.subr.bf16.mxu0 0
    %3388 = vmatpush1.bf16.msra.mxu0 %v3369
    %3389 = vmatprep.subr.bf16.mxu0 0
    %3390 = vmatpush1.bf16.msra.mxu0 %v3370
    %3391 = vmatprep.subr.bf16.mxu0 0
    %3392 = vmatpush1.bf16.msra.mxu0 %v3371
    %3393 = vmatprep.subr.bf16.mxu0 0
    %3394 = vmatpush1.bf16.msra.mxu0 %v3372
    %3395 = vmatprep.subr.bf16.mxu0 0
    %3396 = vmatpush1.bf16.msra.mxu0 %v3373
    %3397 = vmatprep.subr.bf16.mxu0 0
    %3398 = vmatpush1.bf16.msra.mxu0 %v3374
    %3399 = vmatprep.subr.bf16.mxu0 0
    %3400 = vmatpush1.bf16.msra.mxu0 0
    %3401 = vmatprep.subr.bf16.mxu0 0
    %3402 = vmatpush1.bf16.msra.mxu0 0
    %3403 = vmatprep.subr.bf16.mxu0 0
    %3404 = vmatpush1.bf16.msra.mxu0 0
    %3405 = vmatprep.subr.bf16.mxu0 0
    %3406 = vmatpush1.bf16.msra.mxu0 0
    %3407 = vmatprep.subr.bf16.mxu0 0
    %3408 = vmatpush1.bf16.msra.mxu0 0
    %3409 = vmatprep.subr.bf16.mxu0 0
    %3410 = vmatpush1.bf16.msra.mxu0 0
    %3411 = vmatprep.subr.bf16.mxu0 0
    %3412 = vmatpush1.bf16.msra.mxu0 0
    %3413 = vmatprep.subr.bf16.mxu0 0
    %3414 = vmatpush1.bf16.msra.mxu0 0
    %3415 = vmatprep.mubr.bf16.mxu0 0
    %3416 = vmatmul.mubr.bf16.gmra.mrb[0].mxu0 %v3333
    %v3417 = vpop.f32.mrb[0].mxu0
    %v3418 = vadd.f32 0.0, %v3417
    %v3419 = vpop.f32.mrb[0].mxu0
    %v3420 = vpop.f32.mrb[0].mxu0
    %v3421 = vpop.f32.mrb[0].mxu0
    %3422 = vdwg.mxu0
    %v3423 = vadd.f32 %v3305, %v3418
    %s3424 = scalar_lea.vmem %s5, 192
    %v3425 = vld [vmem:[%s3424] sm:$0xf]
    %v3426 = vld [vmem:[%s3424 + $0x4] sm:$0xf]
    %v3427 = vld [vmem:[%s3424 + $0x8] sm:$0xf]
    %v3428 = vld [vmem:[%s3424 + $0xc] sm:$0xf]
    %v3429 = vld [vmem:[%s3424 + $0x10] sm:$0xf]
    %v3430 = vld [vmem:[%s3424 + $0x14] sm:$0xf]
    %v3431 = vld [vmem:[%s3424 + $0x18] sm:$0xf]
    %v3432 = vld [vmem:[%s3424 + $0x1c] sm:$0xf]
    %v3433 = vld [vmem:[%s3424 + $0x20] sm:$0xf]
    %v3434 = vld [vmem:[%s3424 + $0x24] sm:$0xf]
    %v3435 = vld [vmem:[%s3424 + $0x28] sm:$0xf]
    %v3436 = vld [vmem:[%s3424 + $0x2c] sm:$0xf]
    %v3437 = vld [vmem:[%s3424 + $0x30] sm:$0xf]
    %v3438 = vld [vmem:[%s3424 + $0x34] sm:$0xf]
    %v3439 = vld [vmem:[%s3424 + $0x38] sm:$0xf]
    %v3440 = vld [vmem:[%s3424 + $0x3c] sm:$0xf]
    %v3443 = vunpack.c.l.b16 %v3078
    %v3444 = vunpack.c.l.b16 %v3083
    %v3445 = vrot.slane %v3444, 7
    %v3446 = vsel %vm1992, %v3445, %v3443
    %v3447 = vpack.c.b16 %v3446, %v3446
    %v3465 = vunpack.c.l.b16 %v3425
    %v3466 = vunpack.c.l.b16 %v3426
    %v3467 = vunpack.c.l.b16 %v3427
    %v3468 = vunpack.c.l.b16 %v3428
    %v3469 = vunpack.c.l.b16 %v3429
    %v3470 = vunpack.c.l.b16 %v3430
    %v3471 = vunpack.c.l.b16 %v3431
    %v3472 = vunpack.c.l.b16 %v3432
    %v3473 = vunpack.c.l.b16 %v3433
    %v3474 = vunpack.c.l.b16 %v3434
    %v3475 = vunpack.c.l.b16 %v3435
    %v3476 = vunpack.c.l.b16 %v3436
    %v3477 = vunpack.c.l.b16 %v3437
    %v3478 = vunpack.c.l.b16 %v3438
    %v3479 = vunpack.c.l.b16 %v3439
    %v3480 = vunpack.c.l.b16 %v3440
    %v3481 = vpack.c.b16 %v3466, %v3465
    %v3482 = vpack.c.b16 %v3468, %v3467
    %v3483 = vpack.c.b16 %v3470, %v3469
    %v3484 = vpack.c.b16 %v3472, %v3471
    %v3485 = vpack.c.b16 %v3474, %v3473
    %v3486 = vpack.c.b16 %v3476, %v3475
    %v3487 = vpack.c.b16 %v3478, %v3477
    %v3488 = vpack.c.b16 %v3480, %v3479
    %3497 = vmatprep.subr.bf16.mxu0 0
    %3498 = vmatpush1.bf16.msra.mxu0 %v3481
    %3499 = vmatprep.subr.bf16.mxu0 0
    %3500 = vmatpush1.bf16.msra.mxu0 %v3482
    %3501 = vmatprep.subr.bf16.mxu0 0
    %3502 = vmatpush1.bf16.msra.mxu0 %v3483
    %3503 = vmatprep.subr.bf16.mxu0 0
    %3504 = vmatpush1.bf16.msra.mxu0 %v3484
    %3505 = vmatprep.subr.bf16.mxu0 0
    %3506 = vmatpush1.bf16.msra.mxu0 %v3485
    %3507 = vmatprep.subr.bf16.mxu0 0
    %3508 = vmatpush1.bf16.msra.mxu0 %v3486
    %3509 = vmatprep.subr.bf16.mxu0 0
    %3510 = vmatpush1.bf16.msra.mxu0 %v3487
    %3511 = vmatprep.subr.bf16.mxu0 0
    %3512 = vmatpush1.bf16.msra.mxu0 %v3488
    %3513 = vmatprep.subr.bf16.mxu0 0
    %3514 = vmatpush1.bf16.msra.mxu0 0
    %3515 = vmatprep.subr.bf16.mxu0 0
    %3516 = vmatpush1.bf16.msra.mxu0 0
    %3517 = vmatprep.subr.bf16.mxu0 0
    %3518 = vmatpush1.bf16.msra.mxu0 0
    %3519 = vmatprep.subr.bf16.mxu0 0
    %3520 = vmatpush1.bf16.msra.mxu0 0
    %3521 = vmatprep.subr.bf16.mxu0 0
    %3522 = vmatpush1.bf16.msra.mxu0 0
    %3523 = vmatprep.subr.bf16.mxu0 0
    %3524 = vmatpush1.bf16.msra.mxu0 0
    %3525 = vmatprep.subr.bf16.mxu0 0
    %3526 = vmatpush1.bf16.msra.mxu0 0
    %3527 = vmatprep.subr.bf16.mxu0 0
    %3528 = vmatpush1.bf16.msra.mxu0 0
    %3529 = vmatprep.mubr.bf16.mxu0 0
    %3530 = vmatmul.mubr.bf16.gmra.mrb[0].mxu0 %v3447
    %v3531 = vpop.f32.mrb[0].mxu0
    %v3532 = vadd.f32 0.0, %v3531
    %v3533 = vpop.f32.mrb[0].mxu0
    %v3534 = vpop.f32.mrb[0].mxu0
    %v3535 = vpop.f32.mrb[0].mxu0
    %3536 = vdwg.mxu0
    %v3537 = vadd.f32 %v3423, %v3532
    %s3538 = scalar_lea.vmem %s5, 256
    %v3539 = vld [vmem:[%s3538] sm:$0xf]
    %v3540 = vld [vmem:[%s3538 + $0x4] sm:$0xf]
    %v3541 = vld [vmem:[%s3538 + $0x8] sm:$0xf]
    %v3542 = vld [vmem:[%s3538 + $0xc] sm:$0xf]
    %v3543 = vld [vmem:[%s3538 + $0x10] sm:$0xf]
    %v3544 = vld [vmem:[%s3538 + $0x14] sm:$0xf]
    %v3545 = vld [vmem:[%s3538 + $0x18] sm:$0xf]
    %v3546 = vld [vmem:[%s3538 + $0x1c] sm:$0xf]
    %v3547 = vld [vmem:[%s3538 + $0x20] sm:$0xf]
    %v3548 = vld [vmem:[%s3538 + $0x24] sm:$0xf]
    %v3549 = vld [vmem:[%s3538 + $0x28] sm:$0xf]
    %v3550 = vld [vmem:[%s3538 + $0x2c] sm:$0xf]
    %v3551 = vld [vmem:[%s3538 + $0x30] sm:$0xf]
    %v3552 = vld [vmem:[%s3538 + $0x34] sm:$0xf]
    %v3553 = vld [vmem:[%s3538 + $0x38] sm:$0xf]
    %v3554 = vld [vmem:[%s3538 + $0x3c] sm:$0xf]
    %v3557 = vunpack.c.l.b16 %v3079
    %v3558 = vunpack.c.l.b16 %v3084
    %v3559 = vrot.slane %v3558, 7
    %v3560 = vsel %vm1992, %v3559, %v3557
    %v3561 = vpack.c.b16 %v3560, %v3560
    %v3579 = vunpack.c.l.b16 %v3539
    %v3580 = vunpack.c.l.b16 %v3540
    %v3581 = vunpack.c.l.b16 %v3541
    %v3582 = vunpack.c.l.b16 %v3542
    %v3583 = vunpack.c.l.b16 %v3543
    %v3584 = vunpack.c.l.b16 %v3544
    %v3585 = vunpack.c.l.b16 %v3545
    %v3586 = vunpack.c.l.b16 %v3546
    %v3587 = vunpack.c.l.b16 %v3547
    %v3588 = vunpack.c.l.b16 %v3548
    %v3589 = vunpack.c.l.b16 %v3549
    %v3590 = vunpack.c.l.b16 %v3550
    %v3591 = vunpack.c.l.b16 %v3551
    %v3592 = vunpack.c.l.b16 %v3552
    %v3593 = vunpack.c.l.b16 %v3553
    %v3594 = vunpack.c.l.b16 %v3554
    %v3595 = vpack.c.b16 %v3580, %v3579
    %v3596 = vpack.c.b16 %v3582, %v3581
    %v3597 = vpack.c.b16 %v3584, %v3583
    %v3598 = vpack.c.b16 %v3586, %v3585
    %v3599 = vpack.c.b16 %v3588, %v3587
    %v3600 = vpack.c.b16 %v3590, %v3589
    %v3601 = vpack.c.b16 %v3592, %v3591
    %v3602 = vpack.c.b16 %v3594, %v3593
    %3611 = vmatprep.subr.bf16.mxu0 0
    %3612 = vmatpush1.bf16.msra.mxu0 %v3595
    %3613 = vmatprep.subr.bf16.mxu0 0
    %3614 = vmatpush1.bf16.msra.mxu0 %v3596
    %3615 = vmatprep.subr.bf16.mxu0 0
    %3616 = vmatpush1.bf16.msra.mxu0 %v3597
    %3617 = vmatprep.subr.bf16.mxu0 0
    %3618 = vmatpush1.bf16.msra.mxu0 %v3598
    %3619 = vmatprep.subr.bf16.mxu0 0
    %3620 = vmatpush1.bf16.msra.mxu0 %v3599
    %3621 = vmatprep.subr.bf16.mxu0 0
    %3622 = vmatpush1.bf16.msra.mxu0 %v3600
    %3623 = vmatprep.subr.bf16.mxu0 0
    %3624 = vmatpush1.bf16.msra.mxu0 %v3601
    %3625 = vmatprep.subr.bf16.mxu0 0
    %3626 = vmatpush1.bf16.msra.mxu0 %v3602
    %3627 = vmatprep.subr.bf16.mxu0 0
    %3628 = vmatpush1.bf16.msra.mxu0 0
    %3629 = vmatprep.subr.bf16.mxu0 0
    %3630 = vmatpush1.bf16.msra.mxu0 0
    %3631 = vmatprep.subr.bf16.mxu0 0
    %3632 = vmatpush1.bf16.msra.mxu0 0
    %3633 = vmatprep.subr.bf16.mxu0 0
    %3634 = vmatpush1.bf16.msra.mxu0 0
    %3635 = vmatprep.subr.bf16.mxu0 0
    %3636 = vmatpush1.bf16.msra.mxu0 0
    %3637 = vmatprep.subr.bf16.mxu0 0
    %3638 = vmatpush1.bf16.msra.mxu0 0
    %3639 = vmatprep.subr.bf16.mxu0 0
    %3640 = vmatpush1.bf16.msra.mxu0 0
    %3641 = vmatprep.subr.bf16.mxu0 0
    %3642 = vmatpush1.bf16.msra.mxu0 0
    %3643 = vmatprep.mubr.bf16.mxu0 0
    %3644 = vmatmul.mubr.bf16.gmra.mrb[0].mxu0 %v3561
    %v3645 = vpop.f32.mrb[0].mxu0
    %v3646 = vadd.f32 0.0, %v3645
    %v3647 = vpop.f32.mrb[0].mxu0
    %v3648 = vpop.f32.mrb[0].mxu0
    %v3649 = vpop.f32.mrb[0].mxu0
    %3650 = vdwg.mxu0
    %v3651 = vadd.f32 %v3537, %v3646
    %v3652 = vld [vmem:[%s6] sm:$0x1]
    %v3654 = vlaneseq
    %v3655 = vshrl.u32 %v3654, 7
    %v3656 = vsub.s32 0, %v3655
    %v3657 = vrot.slane %v3652, %v3656
    %v3659 = vadd.f32 %v3651, %v3657
    %v3660 = vmax.f32 %v3659, 0.0
    %v3661 = vpack.c.bf16 %v3660, %v3660
    %v3662 = vld [vmem:[%s7] sm:$0xf]
    %v3663 = vld [vmem:[%s7 + $0x4] sm:$0xf]
    %v3664 = vld [vmem:[%s7 + $0x8] sm:$0xf]
    %v3665 = vld [vmem:[%s7 + $0xc] sm:$0xf]
    %v3666 = vld [vmem:[%s7 + $0x10] sm:$0xf]
    %v3667 = vld [vmem:[%s7 + $0x14] sm:$0xf]
    %v3668 = vld [vmem:[%s7 + $0x18] sm:$0xf]
    %v3669 = vld [vmem:[%s7 + $0x1c] sm:$0xf]
    %v3670 = vld [vmem:[%s7 + $0x20] sm:$0xf]
    %v3671 = vld [vmem:[%s7 + $0x24] sm:$0xf]
    %v3672 = vld [vmem:[%s7 + $0x28] sm:$0xf]
    %v3673 = vld [vmem:[%s7 + $0x2c] sm:$0xf]
    %v3674 = vld [vmem:[%s7 + $0x30] sm:$0xf]
    %v3675 = vld [vmem:[%s7 + $0x34] sm:$0xf]
    %v3676 = vld [vmem:[%s7 + $0x38] sm:$0xf]
    %v3677 = vld [vmem:[%s8] sm:$0x1]
    %v3679 = vlaneseq
    %v3680 = vshrl.u32 %v3679, 7
    %v3681 = vsub.s32 0, %v3680
    %v3682 = vrot.slane %v3677, %v3681
    %v3699 = vunpack.c.l.b16 %v3662
    %v3700 = vunpack.c.l.b16 %v3663
    %v3701 = vunpack.c.l.b16 %v3664
    %v3702 = vunpack.c.l.b16 %v3665
    %v3703 = vunpack.c.l.b16 %v3666
    %v3704 = vunpack.c.l.b16 %v3667
    %v3705 = vunpack.c.l.b16 %v3668
    %v3706 = vunpack.c.l.b16 %v3669
    %v3707 = vunpack.c.l.b16 %v3670
    %v3708 = vunpack.c.l.b16 %v3671
    %v3709 = vunpack.c.l.b16 %v3672
    %v3710 = vunpack.c.l.b16 %v3673
    %v3711 = vunpack.c.l.b16 %v3674
    %v3712 = vunpack.c.l.b16 %v3675
    %v3713 = vunpack.c.l.b16 %v3676
    %v3714 = vpack.c.b16 %v3700, %v3699
    %v3715 = vpack.c.b16 %v3702, %v3701
    %v3716 = vpack.c.b16 %v3704, %v3703
    %v3717 = vpack.c.b16 %v3706, %v3705
    %v3718 = vpack.c.b16 %v3708, %v3707
    %v3719 = vpack.c.b16 %v3710, %v3709
    %v3720 = vpack.c.b16 %v3712, %v3711
    %v3721 = vpack.c.b16 %v3713, %v3713
    %vm3729 = vcmask 982016
    %v3731 = vsel %vm3729, %v3661, 0
    %vm3733 = vcmask 1043456
    %v3735 = vsel %vm3733, %v3721, 0
    %3737 = vmatprep.subr.bf16.mxu0 0
    %3738 = vmatpush1.bf16.msra.mxu0 %v3714
    %3739 = vmatprep.subr.bf16.mxu0 0
    %3740 = vmatpush1.bf16.msra.mxu0 %v3715
    %3741 = vmatprep.subr.bf16.mxu0 0
    %3742 = vmatpush1.bf16.msra.mxu0 %v3716
    %3743 = vmatprep.subr.bf16.mxu0 0
    %3744 = vmatpush1.bf16.msra.mxu0 %v3717
    %3745 = vmatprep.subr.bf16.mxu0 0
    %3746 = vmatpush1.bf16.msra.mxu0 %v3718
    %3747 = vmatprep.subr.bf16.mxu0 0
    %3748 = vmatpush1.bf16.msra.mxu0 %v3719
    %3749 = vmatprep.subr.bf16.mxu0 0
    %3750 = vmatpush1.bf16.msra.mxu0 %v3720
    %3751 = vmatprep.subr.bf16.mxu0 0
    %3752 = vmatpush1.bf16.msra.mxu0 %v3735
    %3753 = vmatprep.subr.bf16.mxu0 0
    %3754 = vmatpush1.bf16.msra.mxu0 0
    %3755 = vmatprep.subr.bf16.mxu0 0
    %3756 = vmatpush1.bf16.msra.mxu0 0
    %3757 = vmatprep.subr.bf16.mxu0 0
    %3758 = vmatpush1.bf16.msra.mxu0 0
    %3759 = vmatprep.subr.bf16.mxu0 0
    %3760 = vmatpush1.bf16.msra.mxu0 0
    %3761 = vmatprep.subr.bf16.mxu0 0
    %3762 = vmatpush1.bf16.msra.mxu0 0
    %3763 = vmatprep.subr.bf16.mxu0 0
    %3764 = vmatpush1.bf16.msra.mxu0 0
    %3765 = vmatprep.subr.bf16.mxu0 0
    %3766 = vmatpush1.bf16.msra.mxu0 0
    %3767 = vmatprep.subr.bf16.mxu0 0
    %3768 = vmatpush1.bf16.msra.mxu0 0
    %3769 = vmatprep.mubr.bf16.mxu0 0
    %3770 = vmatmul.mubr.bf16.gmra.mrb[0].mxu0 %v3731
    %v3771 = vpop.f32.mrb[0].mxu0
    %v3772 = vadd.f32 %v3682, %v3771
    %v3773 = vpop.f32.mrb[0].mxu0
    %v3774 = vpop.f32.mrb[0].mxu0
    %v3775 = vpop.f32.mrb[0].mxu0
    %3776 = vdwg.mxu0
    %v3777 = vmax.f32 %v3772, 0.0
    %v3778 = vpack.c.bf16 %v3777, %v3777
    %v3779 = vld [vmem:[%s9] sm:$0xf]
    %v3780 = vld [vmem:[%s9 + $0x4] sm:$0xf]
    %v3781 = vld [vmem:[%s9 + $0x8] sm:$0xf]
    %v3782 = vld [vmem:[%s9 + $0xc] sm:$0xf]
    %v3783 = vld [vmem:[%s9 + $0x10] sm:$0xf]
    %v3784 = vld [vmem:[%s9 + $0x14] sm:$0xf]
    %v3785 = vld [vmem:[%s9 + $0x18] sm:$0xf]
    %v3786 = vld [vmem:[%s9 + $0x1c] sm:$0xf]
    %v3787 = vld [vmem:[%s9 + $0x20] sm:$0xf]
    %v3788 = vld [vmem:[%s9 + $0x24] sm:$0xf]
    %v3789 = vld [vmem:[%s9 + $0x28] sm:$0x3]
    %v3790 = vld [vmem:[%s10] sm:$0x1]
    %v3792 = vlaneseq
    %v3793 = vshrl.u32 %v3792, 7
    %v3794 = vsub.s32 0, %v3793
    %v3795 = vrot.slane %v3790, %v3794
    %v3808 = vunpack.c.l.b16 %v3779
    %v3809 = vunpack.c.l.b16 %v3780
    %v3810 = vunpack.c.l.b16 %v3781
    %v3811 = vunpack.c.l.b16 %v3782
    %v3812 = vunpack.c.l.b16 %v3783
    %v3813 = vunpack.c.l.b16 %v3784
    %v3814 = vunpack.c.l.b16 %v3785
    %v3815 = vunpack.c.l.b16 %v3786
    %v3816 = vunpack.c.l.b16 %v3787
    %v3817 = vunpack.c.l.b16 %v3788
    %v3818 = vunpack.c.l.b16 %v3789
    %v3819 = vpack.c.b16 %v3809, %v3808
    %v3820 = vpack.c.b16 %v3811, %v3810
    %v3821 = vpack.c.b16 %v3813, %v3812
    %v3822 = vpack.c.b16 %v3815, %v3814
    %v3823 = vpack.c.b16 %v3817, %v3816
    %v3824 = vpack.c.b16 %v3818, %v3818
    %vm3830 = vcmask 687104
    %v3832 = vsel %vm3830, %v3778, 0
    %vm3834 = vcmask 1041408
    %v3836 = vsel %vm3834, %v3824, 0
    %3838 = vmatprep.subr.bf16.mxu0 0
    %3839 = vmatpush1.bf16.msra.mxu0 %v3819
    %3840 = vmatprep.subr.bf16.mxu0 0
    %3841 = vmatpush1.bf16.msra.mxu0 %v3820
    %3842 = vmatprep.subr.bf16.mxu0 0
    %3843 = vmatpush1.bf16.msra.mxu0 %v3821
    %3844 = vmatprep.subr.bf16.mxu0 0
    %3845 = vmatpush1.bf16.msra.mxu0 %v3822
    %3846 = vmatprep.subr.bf16.mxu0 0
    %3847 = vmatpush1.bf16.msra.mxu0 %v3823
    %3848 = vmatprep.subr.bf16.mxu0 0
    %3849 = vmatpush1.bf16.msra.mxu0 %v3836
    %3850 = vmatprep.subr.bf16.mxu0 0
    %3851 = vmatpush1.bf16.msra.mxu0 0
    %3852 = vmatprep.subr.bf16.mxu0 0
    %3853 = vmatpush1.bf16.msra.mxu0 0
    %3854 = vmatprep.subr.bf16.mxu0 0
    %3855 = vmatpush1.bf16.msra.mxu0 0
    %3856 = vmatprep.subr.bf16.mxu0 0
    %3857 = vmatpush1.bf16.msra.mxu0 0
    %3858 = vmatprep.subr.bf16.mxu0 0
    %3859 = vmatpush1.bf16.msra.mxu0 0
    %3860 = vmatprep.subr.bf16.mxu0 0
    %3861 = vmatpush1.bf16.msra.mxu0 0
    %3862 = vmatprep.subr.bf16.mxu0 0
    %3863 = vmatpush1.bf16.msra.mxu0 0
    %3864 = vmatprep.subr.bf16.mxu0 0
    %3865 = vmatpush1.bf16.msra.mxu0 0
    %3866 = vmatprep.subr.bf16.mxu0 0
    %3867 = vmatpush1.bf16.msra.mxu0 0
    %3868 = vmatprep.subr.bf16.mxu0 0
    %3869 = vmatpush1.bf16.msra.mxu0 0
    %3870 = vmatprep.mubr.bf16.mxu0 0
    %3871 = vmatmul.mubr.bf16.gmra.mrb[0].mxu0 %v3832
    %v3872 = vpop.f32.mrb[0].mxu0
    %v3873 = vadd.f32 %v3795, %v3872
    %v3874 = vpop.f32.mrb[0].mxu0
    %v3875 = vpop.f32.mrb[0].mxu0
    %v3876 = vpop.f32.mrb[0].mxu0
    %3877 = vdwg.mxu0
    %3878 = vst [vmem:[#allocation5] sm:$0x3] %v3873
    // Predicated region
    $region50: #{net_forward.1} parent=1 // pred_check
      _
    $region51: #{net_forward.1} parent=1 // pred_check_branch
      %3880 = sbr.rel (0) target = $region53
    $region52: #{net_forward.1} parent=1 // pred_region
      %s3882 = ssub.s32 32, 32
      %3883 = vsyncadd [#allocation4], %s3882
      %s3885 = sshll.u32 [#allocation5], 4
      %s3886 = int_to_ptr.vmem [resolvable:$true] %s3885
      %3888 = dma.vmem_to_hbm [thread:$0]  %s3886, 32, %s11, [#allocation4]
    $region53: #{net_forward.1} parent=1 // pred_fallthru
      _
    // Predicated region
    $region54: #{net_forward.1} parent=1 // pred_check
      _
    $region55: #{net_forward.1} parent=1 // pred_check_branch
      %3890 = sbr.rel (0) target = $region57
    $region56: #{net_forward.1} parent=1 // pred_region
      %3891 = dma.done [#allocation4], 32
    $region57: #{net_forward.1} parent=1 // pred_fallthru
      _
    %3892 = vsyncpa [#allocation3], 1
    %3893 = vsyncpa [#allocation4], 1

</llo_original>
